<compile_context>
chip_gen: v7x
topology: tpu7x:2x2x1
jax: 0.10.0
libtpu: 0.0.40
codegen_flags: <defaults>
</compile_context>

<pallas_src>
import functools

import jax
import jax.numpy as jnp
from jax.experimental import pallas as pl
from jax.experimental.pallas import tpu as pltpu


# ----------------------------------------------------------------------------
# helpers
# ----------------------------------------------------------------------------
def _full_spec(shape):
    """Whole-array block (used for small, resident operands)."""
    zeros = (0,) * len(shape)
    return pl.BlockSpec(shape, lambda *args, _z=zeros: _z)


def _pick_tile(n, pref, quantum):
    """Largest tile <= pref that divides n and is a multiple of `quantum`.
    Falls back to the full dimension (always a legal block shape)."""
    if n <= pref:
        return n
    t = (pref // quantum) * quantum
    while t >= quantum:
        if n % t == 0:
            return t
        t -= quantum
    return n


# ----------------------------------------------------------------------------
# GNN hop kernels (tiled, bf16 MXU operands, f32 accumulation)
# ----------------------------------------------------------------------------
def _spmm_square_kernel(l_ref, f_ref, o_ref, acc_ref):
    """acc += L_tile @ (f_tile * f_tile); write out at last k step."""
    @pl.when(pl.program_id(1) == 0)
    def _():
        acc_ref[...] = jnp.zeros_like(acc_ref)

    f = f_ref[...]                       # f32 (tk, E)
    f2 = (f * f).astype(jnp.bfloat16)    # square in f32, cast only the MXU operand
    acc_ref[...] += jnp.dot(l_ref[...], f2, preferred_element_type=jnp.float32)

    @pl.when(pl.program_id(1) == pl.num_programs(1) - 1)
    def _():
        o_ref[...] = acc_ref[...]


def _spmm_linear_relu_kernel(l_ref, x_ref, wt_ref, b_ref, o_ref, acc_ref):
    """acc += L_tile @ x_tile; at last k: out = ReLU(acc @ W^T + b)."""
    @pl.when(pl.program_id(1) == 0)
    def _():
        acc_ref[...] = jnp.zeros_like(acc_ref)

    acc_ref[...] += jnp.dot(
        l_ref[...], x_ref[...].astype(jnp.bfloat16),
        preferred_element_type=jnp.float32)

    @pl.when(pl.program_id(1) == pl.num_programs(1) - 1)
    def _():
        y = jnp.dot(acc_ref[...], wt_ref[...],
                    preferred_element_type=jnp.float32) + b_ref[...]
        o_ref[...] = jnp.maximum(y, 0.0)


def spmm_square(L_bf16, feats, *, tm_pref=512, tk_pref=1024):
    """inter = L @ (feats * feats)   (L already cast to bf16 once by the caller)."""
    n = L_bf16.shape[0]
    e = feats.shape[1]
    tm = _pick_tile(n, tm_pref, 8)
    tk = _pick_tile(n, tk_pref, 128)
    return pl.pallas_call(
        _spmm_square_kernel,
        grid=(n // tm, n // tk),
        in_specs=[
            pl.BlockSpec((tm, tk), lambda i, k: (i, k)),
            pl.BlockSpec((tk, e), lambda i, k: (k, 0)),
        ],
        out_specs=pl.BlockSpec((tm, e), lambda i, k: (i, 0)),
        out_shape=jax.ShapeDtypeStruct((n, e), jnp.float32),
        scratch_shapes=[pltpu.VMEM((tm, e), jnp.float32)],
        compiler_params=pltpu.CompilerParams(
            dimension_semantics=("parallel", "arbitrary")),
    )(L_bf16, feats)


def spmm_linear_relu(L_bf16, x, wt, b, *, tm_pref=512, tk_pref=1024):
    """out = ReLU((L @ x) @ W^T + b), with the linear/bias/ReLU fused as epilogue."""
    n = L_bf16.shape[0]
    e = x.shape[1]
    out_f = wt.shape[1]
    tm = _pick_tile(n, tm_pref, 8)
    tk = _pick_tile(n, tk_pref, 128)
    return pl.pallas_call(
        _spmm_linear_relu_kernel,
        grid=(n // tm, n // tk),
        in_specs=[
            pl.BlockSpec((tm, tk), lambda i, k: (i, k)),
            pl.BlockSpec((tk, e), lambda i, k: (k, 0)),
            pl.BlockSpec((e, out_f), lambda i, k: (0, 0)),   # resident weight
            pl.BlockSpec((1, out_f), lambda i, k: (0, 0)),   # resident bias
        ],
        out_specs=pl.BlockSpec((tm, out_f), lambda i, k: (i, 0)),
        out_shape=jax.ShapeDtypeStruct((n, out_f), jnp.float32),
        scratch_shapes=[pltpu.VMEM((tm, e), jnp.float32)],
        compiler_params=pltpu.CompilerParams(
            dimension_semantics=("parallel", "arbitrary")),
    )(L_bf16, x, wt, b)


# ----------------------------------------------------------------------------
# Fused tail kernel: MLP branch + NGCF-MF product + concat + output head
# ----------------------------------------------------------------------------
def _tail_kernel(u_mlp_ref, i_mlp_ref, u_ng_ref, i_ng_ref,
                 w1u_ref, w1i_ref, b1_ref,
                 w2_ref, b2_ref, w3_ref, b3_ref, w4_ref, b4_ref,
                 wo_mlp_ref, wo_ng_ref, bo_ref, o_ref):
    # MLP branch: concat([u, i]) @ W1^T  ==  u @ W1u^T + i @ W1i^T  (no lane concat)
    h = (jnp.dot(u_mlp_ref[...], w1u_ref[...], preferred_element_type=jnp.float32)
         + jnp.dot(i_mlp_ref[...], w1i_ref[...], preferred_element_type=jnp.float32)
         + b1_ref[...])
    h = jnp.maximum(h, 0.0)
    h = jnp.maximum(jnp.dot(h, w2_ref[...], preferred_element_type=jnp.float32)
                    + b2_ref[...], 0.0)
    h = jnp.maximum(jnp.dot(h, w3_ref[...], preferred_element_type=jnp.float32)
                    + b3_ref[...], 0.0)
    mlp = jnp.maximum(jnp.dot(h, w4_ref[...], preferred_element_type=jnp.float32)
                      + b4_ref[...], 0.0)                      # (B, E)

    # NGCF-MF branch: elementwise product of the gathered finalEmbd rows.
    ngcfmf = u_ng_ref[...] * i_ng_ref[...]                      # (B, sumL)

    # Output head (width-1 linear) as VPU multiply + row reduction.
    out = (jnp.sum(mlp * wo_mlp_ref[...], axis=1, keepdims=True)
           + jnp.sum(ngcfmf * wo_ng_ref[...], axis=1, keepdims=True)
           + bo_ref[...])
    o_ref[...] = out


def fused_tail(u_mlp, i_mlp, u_ng, i_ng, p):
    B = u_mlp.shape[0]
    args = (u_mlp, i_mlp, u_ng, i_ng,
            p["w1u_t"], p["w1i_t"], p["b1"],
            p["w2_t"], p["b2"], p["w3_t"], p["b3"], p["w4_t"], p["b4"],
            p["wo_mlp"], p["wo_ng"], p["bo"])
    return pl.pallas_call(
        _tail_kernel,
        grid=(1,),
        in_specs=[_full_spec(a.shape) for a in args],
        out_specs=_full_spec((B, 1)),
        out_shape=jax.ShapeDtypeStruct((B, 1), jnp.float32),
        compiler_params=pltpu.CompilerParams(dimension_semantics=("arbitrary",)),
    )(*args)


# ----------------------------------------------------------------------------
# Deterministic parameter init (mirrors the torch inits; weights pre-transposed)
# ----------------------------------------------------------------------------
def _xavier_uniform(key, shape):
    fan_out, fan_in = shape
    bound = (6.0 / (fan_in + fan_out)) ** 0.5
    return jax.random.uniform(key, shape, jnp.float32, minval=-bound, maxval=bound)


def init_params(key, userNum, itemNum, embedSize, layers):
    assert layers[0] == embedSize, "layers[0] must equal embedSize"
    E = embedSize
    sumL = sum(layers)
    n_gnn = len(layers) - 1
    keys = jax.random.split(key, 4 + n_gnn + 5)

    params = {}
    # embeddings (normal, std=0.01)
    params["mlp_u"] = 0.01 * jax.random.normal(keys[0], (userNum, E), jnp.float32)
    params["mlp_i"] = 0.01 * jax.random.normal(keys[1], (itemNum, E), jnp.float32)
    params["ngcf_u"] = 0.01 * jax.random.normal(keys[2], (userNum, E), jnp.float32)
    params["ngcf_i"] = 0.01 * jax.random.normal(keys[3], (itemNum, E), jnp.float32)

    # GNN linears: xavier (To, From), zero bias; stored transposed as (From, To).
    gnn = []
    for idx, (From, To) in enumerate(zip(layers[:-1], layers[1:])):
        w = _xavier_uniform(keys[4 + idx], (To, From))
        gnn.append((w.T, jnp.zeros((1, To), jnp.float32)))
    params["gnn"] = gnn

    # MLP tower: Linear(2E,8E) -> (8E,4E) -> (4E,2E) -> (2E,E), ReLU after each.
    k = 4 + n_gnn
    w1t = _xavier_uniform(keys[k + 0], (8 * E, 2 * E)).T        # (2E, 8E)
    params["w1u_t"], params["w1i_t"] = w1t[:E], w1t[E:]          # split -> no lane concat
    params["b1"] = jnp.zeros((1, 8 * E), jnp.float32)
    params["w2_t"] = _xavier_uniform(keys[k + 1], (4 * E, 8 * E)).T
    params["b2"] = jnp.zeros((1, 4 * E), jnp.float32)
    params["w3_t"] = _xavier_uniform(keys[k + 2], (2 * E, 4 * E)).T
    params["b3"] = jnp.zeros((1, 2 * E), jnp.float32)
    params["w4_t"] = _xavier_uniform(keys[k + 3], (E, 2 * E)).T
    params["b4"] = jnp.zeros((1, E), jnp.float32)

    # Output head Linear(sumL + E, 1); concat order is (mlp, ngcfmf).
    wo = _xavier_uniform(keys[k + 4], (1, sumL + E))
    params["wo_mlp"] = wo[:, :E]
    params["wo_ng"] = wo[:, E:]
    params["bo"] = jnp.zeros((1, 1), jnp.float32)
    return params


# ----------------------------------------------------------------------------
# Full forward pass
# ----------------------------------------------------------------------------
def ngcfmf_concat_mlp_forward(params, L, userIdx, itemIdx, userNum,
                              *, tm_pref=512, tk_pref=1024):
    # Single hoisted cast of L to bf16 (halves HBM traffic for every hop / layer).
    L_bf16 = L.astype(jnp.bfloat16)

    # NGCF propagation over the bipartite graph.
    feats = jnp.concatenate([params["ngcf_u"], params["ngcf_i"]], axis=0)   # (N, E)
    layer_outputs = [feats]
    for (wt, b) in params["gnn"]:
        inter = spmm_square(L_bf16, feats, tm_pref=tm_pref, tk_pref=tk_pref)
        feats = spmm_linear_relu(L_bf16, inter, wt, b,
                                 tm_pref=tm_pref, tk_pref=tk_pref)
        layer_outputs.append(feats)

    # finalEmbd is never materialized at (N, sum(layers)); gather only the B rows.
    u_ng = jnp.concatenate([lo[userIdx] for lo in layer_outputs], axis=1)
    i_ng = jnp.concatenate([lo[itemIdx + userNum] for lo in layer_outputs], axis=1)
    u_mlp = params["mlp_u"][userIdx]
    i_mlp = params["mlp_i"][itemIdx]

    # One fused kernel for MLP branch + NGCF-MF product + concat + output head.
    out = fused_tail(u_mlp, i_mlp, u_ng, i_ng, params)
    return out.reshape(-1)   # .flatten()


# ----------------------------------------------------------------------------
if __name__ == "__main__":
    userNum, itemNum = 256, 256           # N = 512 -> exercises a real (2, 2) GNN grid
    embedSize = 16
    layers = [16, 16, 16]                 # layers[0] == embedSize (module requirement)
    batch = 8

    key = jax.random.PRNGKey(0)
    k_param, k_adj, k_u, k_i = jax.random.split(key, 4)

    params = init_params(k_param, userNum, itemNum, embedSize, layers)

    # Dense stand-in for the sparse normalized Laplacian adjacency (N, N).
    N = userNum + itemNum
    adj = jax.random.uniform(k_adj, (N, N), jnp.float32)
    L = adj / jnp.sum(adj, axis=1, keepdims=True)   # row-normalized

    userIdx = jax.random.randint(k_u, (batch,), 0, userNum)
    itemIdx = jax.random.randint(k_i, (batch,), 0, itemNum)

    fwd = jax.jit(functools.partial(
        ngcfmf_concat_mlp_forward, userNum=userNum,
        tm_pref=256, tk_pref=256))        # small tiles so the demo exercises the k-loop

    out = fwd(params, L, userIdx, itemIdx)
    jax.block_until_ready(out)
    assert out.shape == (batch,)
    print("KERNEL_OK")
</pallas_src>

<mosaic_0001>
module attributes {stable_mosaic.version = 11 : i64} {
  func.func @_spmm_linear_relu_kernel(%arg0: i32, %arg1: i32, %arg2: memref<256x256xbf16, #tpu.memory_space<vmem>>, %arg3: memref<256x16xf32, #tpu.memory_space<vmem>>, %arg4: memref<16x16xf32, #tpu.memory_space<vmem>>, %arg5: memref<1x16xf32, #tpu.memory_space<vmem>>, %arg6: memref<256x16xf32, #tpu.memory_space<vmem>>, %arg7: memref<256x16xf32, #tpu.memory_space<vmem>>) attributes {dimension_semantics = [#tpu.dimension_semantics<parallel>, #tpu.dimension_semantics<arbitrary>], iteration_bounds = array<i64: 2, 2>, scalar_prefetch = 0 : i64, scratch_operands = 1 : i64, tpu.core_type = #tpu.core_type<tc>, window_params = [{transform_indices = @transform_0, window_bounds = array<i64: 256, 256>}, {transform_indices = @transform_1, window_bounds = array<i64: 256, 16>}, {pipeline_mode = #tpu.pipeline_mode<synchronous>, transform_indices = @transform_2, window_bounds = array<i64: 16, 16>}, {pipeline_mode = #tpu.pipeline_mode<synchronous>, transform_indices = @transform_3, window_bounds = array<i64: 1, 16>}, {transform_indices = @transform_4, window_bounds = array<i64: 256, 16>}]} {
    %c0_i32 = arith.constant 0 : i32
    %0 = arith.cmpi eq, %arg1, %c0_i32 : i32
    %1 = arith.extui %0 : i1 to i32
    %c0_i32_0 = arith.constant 0 : i32
    %2 = arith.cmpi ne, %1, %c0_i32_0 : i32
    scf.if %2 {
      %cst_9 = arith.constant 0.000000e+00 : f32
      %13 = vector.broadcast %cst_9 : f32 to vector<256x16xf32>
      %c0_10 = arith.constant 0 : index
      %c0_11 = arith.constant 0 : index
      %14 = vector.load %arg7[%c0_10, %c0_11] : memref<256x16xf32, #tpu.memory_space<vmem>>, vector<256x16xf32>
      tpu.vector_store %arg7[%c0_10, %c0_11], %13 {strides = array<i32>} : memref<256x16xf32, #tpu.memory_space<vmem>>, vector<256x16xf32>,
    } else {
    }
    %c0 = arith.constant 0 : index
    %c0_1 = arith.constant 0 : index
    %3 = vector.load %arg7[%c0, %c0_1] : memref<256x16xf32, #tpu.memory_space<vmem>>, vector<256x16xf32>
    %c0_2 = arith.constant 0 : index
    %c0_3 = arith.constant 0 : index
    %4 = vector.load %arg2[%c0_2, %c0_3] : memref<256x256xbf16, #tpu.memory_space<vmem>>, vector<256x256xbf16>
    %c0_4 = arith.constant 0 : index
    %c0_5 = arith.constant 0 : index
    %5 = vector.load %arg3[%c0_4, %c0_5] : memref<256x16xf32, #tpu.memory_space<vmem>>, vector<256x16xf32>
    %6 = arith.truncf %5 : vector<256x16xf32> to vector<256x16xbf16>
    %cst = arith.constant dense<0.000000e+00> : vector<256x16xf32>
    %7 = tpu.matmul %4, %6, %cst {dimension_numbers = #tpu.dot_dimension_numbers<[1], [0], [0], [1], [0, 0, 1, 1], [], []>} : vector<256x256xbf16>, vector<256x16xbf16>, vector<256x16xf32> -> vector<256x16xf32>
    %8 = arith.addf %3, %7 : vector<256x16xf32>
    %c0_6 = arith.constant 0 : index
    %c0_7 = arith.constant 0 : index
    %9 = vector.load %arg7[%c0_6, %c0_7] : memref<256x16xf32, #tpu.memory_space<vmem>>, vector<256x16xf32>
    tpu.vector_store %arg7[%c0_6, %c0_7], %8 {strides = array<i32>} : memref<256x16xf32, #tpu.memory_space<vmem>>, vector<256x16xf32>,
    %c1_i32 = arith.constant 1 : i32
    %10 = arith.cmpi eq, %arg1, %c1_i32 : i32
    %11 = arith.extui %10 : i1 to i32
    %c0_i32_8 = arith.constant 0 : i32
    %12 = arith.cmpi ne, %11, %c0_i32_8 : i32
    scf.if %12 {
      %c0_9 = arith.constant 0 : index
      %c0_10 = arith.constant 0 : index
      %13 = vector.load %arg7[%c0_9, %c0_10] : memref<256x16xf32, #tpu.memory_space<vmem>>, vector<256x16xf32>
      %c0_11 = arith.constant 0 : index
      %c0_12 = arith.constant 0 : index
      %14 = vector.load %arg4[%c0_11, %c0_12] : memref<16x16xf32, #tpu.memory_space<vmem>>, vector<16x16xf32>
      %cst_13 = arith.constant dense<0.000000e+00> : vector<256x16xf32>
      %15 = tpu.matmul %13, %14, %cst_13 {dimension_numbers = #tpu.dot_dimension_numbers<[1], [0], [0], [1], [0, 0, 1, 1], [], []>} : vector<256x16xf32>, vector<16x16xf32>, vector<256x16xf32> -> vector<256x16xf32>
      %c0_14 = arith.constant 0 : index
      %c0_15 = arith.constant 0 : index
      %16 = vector.load %arg5[%c0_14, %c0_15] : memref<1x16xf32, #tpu.memory_space<vmem>>, vector<1x16xf32>
      %17 = vector.broadcast %16 : vector<1x16xf32> to vector<256x16xf32>
      %18 = arith.addf %15, %17 : vector<256x16xf32>
      %cst_16 = arith.constant 0.000000e+00 : f32
      %19 = vector.broadcast %cst_16 : f32 to vector<256x16xf32>
      %20 = arith.maximumf %18, %19 : vector<256x16xf32>
      %c0_17 = arith.constant 0 : index
      %c0_18 = arith.constant 0 : index
      %21 = vector.load %arg6[%c0_17, %c0_18] : memref<256x16xf32, #tpu.memory_space<vmem>>, vector<256x16xf32>
      tpu.vector_store %arg6[%c0_17, %c0_18], %20 {strides = array<i32>} : memref<256x16xf32, #tpu.memory_space<vmem>>, vector<256x16xf32>,
    } else {
    }
    return
  }
  func.func @transform_0(%arg0: i32, %arg1: i32) -> (i32, i32) {
    %c0_i32 = arith.constant 0 : i32
    return %arg0, %arg1 : i32, i32
  }
  func.func @transform_1(%arg0: i32, %arg1: i32) -> (i32, i32) {
    %c0_i32 = arith.constant 0 : i32
    %c0_i32_0 = arith.constant 0 : i32
    return %arg1, %c0_i32 : i32, i32
  }
  func.func @transform_2(%arg0: i32, %arg1: i32) -> (i32, i32) {
    %c0_i32 = arith.constant 0 : i32
    %c0_i32_0 = arith.constant 0 : i32
    %c0_i32_1 = arith.constant 0 : i32
    return %c0_i32, %c0_i32_0 : i32, i32
  }
  func.func @transform_3(%arg0: i32, %arg1: i32) -> (i32, i32) {
    %c0_i32 = arith.constant 0 : i32
    %c0_i32_0 = arith.constant 0 : i32
    %c0_i32_1 = arith.constant 0 : i32
    return %c0_i32, %c0_i32_0 : i32, i32
  }
  func.func @transform_4(%arg0: i32, %arg1: i32) -> (i32, i32) {
    %c0_i32 = arith.constant 0 : i32
    %c0_i32_0 = arith.constant 0 : i32
    return %arg0, %c0_i32 : i32, i32
  }
}

module attributes {stable_mosaic.version = 11 : i64} {
  func.func @_spmm_square_kernel(%arg0: i32, %arg1: i32, %arg2: memref<256x256xbf16, #tpu.memory_space<vmem>>, %arg3: memref<256x16xf32, #tpu.memory_space<vmem>>, %arg4: memref<256x16xf32, #tpu.memory_space<vmem>>, %arg5: memref<256x16xf32, #tpu.memory_space<vmem>>) attributes {dimension_semantics = [#tpu.dimension_semantics<parallel>, #tpu.dimension_semantics<arbitrary>], iteration_bounds = array<i64: 2, 2>, scalar_prefetch = 0 : i64, scratch_operands = 1 : i64, tpu.core_type = #tpu.core_type<tc>, window_params = [{transform_indices = @transform_0, window_bounds = array<i64: 256, 256>}, {transform_indices = @transform_1, window_bounds = array<i64: 256, 16>}, {transform_indices = @transform_2, window_bounds = array<i64: 256, 16>}]} {
    %c0_i32 = arith.constant 0 : i32
    %0 = arith.cmpi eq, %arg1, %c0_i32 : i32
    %1 = arith.extui %0 : i1 to i32
    %c0_i32_0 = arith.constant 0 : i32
    %2 = arith.cmpi ne, %1, %c0_i32_0 : i32
    scf.if %2 {
      %cst_9 = arith.constant 0.000000e+00 : f32
      %14 = vector.broadcast %cst_9 : f32 to vector<256x16xf32>
      %c0_10 = arith.constant 0 : index
      %c0_11 = arith.constant 0 : index
      %15 = vector.load %arg5[%c0_10, %c0_11] : memref<256x16xf32, #tpu.memory_space<vmem>>, vector<256x16xf32>
      tpu.vector_store %arg5[%c0_10, %c0_11], %14 {strides = array<i32>} : memref<256x16xf32, #tpu.memory_space<vmem>>, vector<256x16xf32>,
    } else {
    }
    %c0 = arith.constant 0 : index
    %c0_1 = arith.constant 0 : index
    %3 = vector.load %arg3[%c0, %c0_1] : memref<256x16xf32, #tpu.memory_space<vmem>>, vector<256x16xf32>
    %4 = arith.mulf %3, %3 : vector<256x16xf32>
    %5 = arith.truncf %4 : vector<256x16xf32> to vector<256x16xbf16>
    %c0_2 = arith.constant 0 : index
    %c0_3 = arith.constant 0 : index
    %6 = vector.load %arg5[%c0_2, %c0_3] : memref<256x16xf32, #tpu.memory_space<vmem>>, vector<256x16xf32>
    %c0_4 = arith.constant 0 : index
    %c0_5 = arith.constant 0 : index
    %7 = vector.load %arg2[%c0_4, %c0_5] : memref<256x256xbf16, #tpu.memory_space<vmem>>, vector<256x256xbf16>
    %cst = arith.constant dense<0.000000e+00> : vector<256x16xf32>
    %8 = tpu.matmul %7, %5, %cst {dimension_numbers = #tpu.dot_dimension_numbers<[1], [0], [0], [1], [0, 0, 1, 1], [], []>} : vector<256x256xbf16>, vector<256x16xbf16>, vector<256x16xf32> -> vector<256x16xf32>
    %9 = arith.addf %6, %8 : vector<256x16xf32>
    %c0_6 = arith.constant 0 : index
    %c0_7 = arith.constant 0 : index
    %10 = vector.load %arg5[%c0_6, %c0_7] : memref<256x16xf32, #tpu.memory_space<vmem>>, vector<256x16xf32>
    tpu.vector_store %arg5[%c0_6, %c0_7], %9 {strides = array<i32>} : memref<256x16xf32, #tpu.memory_space<vmem>>, vector<256x16xf32>,
    %c1_i32 = arith.constant 1 : i32
    %11 = arith.cmpi eq, %arg1, %c1_i32 : i32
    %12 = arith.extui %11 : i1 to i32
    %c0_i32_8 = arith.constant 0 : i32
    %13 = arith.cmpi ne, %12, %c0_i32_8 : i32
    scf.if %13 {
      %c0_9 = arith.constant 0 : index
      %c0_10 = arith.constant 0 : index
      %14 = vector.load %arg5[%c0_9, %c0_10] : memref<256x16xf32, #tpu.memory_space<vmem>>, vector<256x16xf32>
      %c0_11 = arith.constant 0 : index
      %c0_12 = arith.constant 0 : index
      %15 = vector.load %arg4[%c0_11, %c0_12] : memref<256x16xf32, #tpu.memory_space<vmem>>, vector<256x16xf32>
      tpu.vector_store %arg4[%c0_11, %c0_12], %14 {strides = array<i32>} : memref<256x16xf32, #tpu.memory_space<vmem>>, vector<256x16xf32>,
    } else {
    }
    return
  }
  func.func @transform_0(%arg0: i32, %arg1: i32) -> (i32, i32) {
    %c0_i32 = arith.constant 0 : i32
    return %arg0, %arg1 : i32, i32
  }
  func.func @transform_1(%arg0: i32, %arg1: i32) -> (i32, i32) {
    %c0_i32 = arith.constant 0 : i32
    %c0_i32_0 = arith.constant 0 : i32
    return %arg1, %c0_i32 : i32, i32
  }
  func.func @transform_2(%arg0: i32, %arg1: i32) -> (i32, i32) {
    %c0_i32 = arith.constant 0 : i32
    %c0_i32_0 = arith.constant 0 : i32
    return %arg0, %c0_i32 : i32, i32
  }
}

module attributes {stable_mosaic.version = 11 : i64} {
  func.func @_tail_kernel(%arg0: i32, %arg1: memref<8x16xf32, #tpu.memory_space<vmem>>, %arg2: memref<8x16xf32, #tpu.memory_space<vmem>>, %arg3: memref<8x48xf32, #tpu.memory_space<vmem>>, %arg4: memref<8x48xf32, #tpu.memory_space<vmem>>, %arg5: memref<16x128xf32, #tpu.memory_space<vmem>>, %arg6: memref<16x128xf32, #tpu.memory_space<vmem>>, %arg7: memref<1x128xf32, #tpu.memory_space<vmem>>, %arg8: memref<128x64xf32, #tpu.memory_space<vmem>>, %arg9: memref<1x64xf32, #tpu.memory_space<vmem>>, %arg10: memref<64x32xf32, #tpu.memory_space<vmem>>, %arg11: memref<1x32xf32, #tpu.memory_space<vmem>>, %arg12: memref<32x16xf32, #tpu.memory_space<vmem>>, %arg13: memref<1x16xf32, #tpu.memory_space<vmem>>, %arg14: memref<1x16xf32, #tpu.memory_space<vmem>>, %arg15: memref<1x48xf32, #tpu.memory_space<vmem>>, %arg16: memref<1x1xf32, #tpu.memory_space<vmem>>, %arg17: memref<8x1xf32, #tpu.memory_space<vmem>>) attributes {dimension_semantics = [#tpu.dimension_semantics<arbitrary>], iteration_bounds = array<i64: 1>, scalar_prefetch = 0 : i64, scratch_operands = 0 : i64, tpu.core_type = #tpu.core_type<tc>, window_params = [{pipeline_mode = #tpu.pipeline_mode<synchronous>, transform_indices = @transform_0, window_bounds = array<i64: 8, 16>}, {pipeline_mode = #tpu.pipeline_mode<synchronous>, transform_indices = @transform_1, window_bounds = array<i64: 8, 16>}, {pipeline_mode = #tpu.pipeline_mode<synchronous>, transform_indices = @transform_2, window_bounds = array<i64: 8, 48>}, {pipeline_mode = #tpu.pipeline_mode<synchronous>, transform_indices = @transform_3, window_bounds = array<i64: 8, 48>}, {pipeline_mode = #tpu.pipeline_mode<synchronous>, transform_indices = @transform_4, window_bounds = array<i64: 16, 128>}, {pipeline_mode = #tpu.pipeline_mode<synchronous>, transform_indices = @transform_5, window_bounds = array<i64: 16, 128>}, {pipeline_mode = #tpu.pipeline_mode<synchronous>, transform_indices = @transform_6, window_bounds = array<i64: 1, 128>}, {pipeline_mode = #tpu.pipeline_mode<synchronous>, transform_indices = @transform_7, window_bounds = array<i64: 128, 64>}, {pipeline_mode = #tpu.pipeline_mode<synchronous>, transform_indices = @transform_8, window_bounds = array<i64: 1, 64>}, {pipeline_mode = #tpu.pipeline_mode<synchronous>, transform_indices = @transform_9, window_bounds = array<i64: 64, 32>}, {pipeline_mode = #tpu.pipeline_mode<synchronous>, transform_indices = @transform_10, window_bounds = array<i64: 1, 32>}, {pipeline_mode = #tpu.pipeline_mode<synchronous>, transform_indices = @transform_11, window_bounds = array<i64: 32, 16>}, {pipeline_mode = #tpu.pipeline_mode<synchronous>, transform_indices = @transform_12, window_bounds = array<i64: 1, 16>}, {pipeline_mode = #tpu.pipeline_mode<synchronous>, transform_indices = @transform_13, window_bounds = array<i64: 1, 16>}, {pipeline_mode = #tpu.pipeline_mode<synchronous>, transform_indices = @transform_14, window_bounds = array<i64: 1, 48>}, {pipeline_mode = #tpu.pipeline_mode<synchronous>, transform_indices = @transform_15, window_bounds = array<i64: 1, 1>}, {pipeline_mode = #tpu.pipeline_mode<synchronous>, transform_indices = @transform_16, window_bounds = array<i64: 8, 1>}]} {
    %c0 = arith.constant 0 : index
    %c0_0 = arith.constant 0 : index
    %0 = vector.load %arg1[%c0, %c0_0] : memref<8x16xf32, #tpu.memory_space<vmem>>, vector<8x16xf32>
    %c0_1 = arith.constant 0 : index
    %c0_2 = arith.constant 0 : index
    %1 = vector.load %arg5[%c0_1, %c0_2] : memref<16x128xf32, #tpu.memory_space<vmem>>, vector<16x128xf32>
    %cst = arith.constant dense<0.000000e+00> : vector<8x128xf32>
    %2 = tpu.matmul %0, %1, %cst {dimension_numbers = #tpu.dot_dimension_numbers<[1], [0], [0], [1], [0, 0, 1, 1], [], []>} : vector<8x16xf32>, vector<16x128xf32>, vector<8x128xf32> -> vector<8x128xf32>
    %c0_3 = arith.constant 0 : index
    %c0_4 = arith.constant 0 : index
    %3 = vector.load %arg2[%c0_3, %c0_4] : memref<8x16xf32, #tpu.memory_space<vmem>>, vector<8x16xf32>
    %c0_5 = arith.constant 0 : index
    %c0_6 = arith.constant 0 : index
    %4 = vector.load %arg6[%c0_5, %c0_6] : memref<16x128xf32, #tpu.memory_space<vmem>>, vector<16x128xf32>
    %cst_7 = arith.constant dense<0.000000e+00> : vector<8x128xf32>
    %5 = tpu.matmul %3, %4, %cst_7 {dimension_numbers = #tpu.dot_dimension_numbers<[1], [0], [0], [1], [0, 0, 1, 1], [], []>} : vector<8x16xf32>, vector<16x128xf32>, vector<8x128xf32> -> vector<8x128xf32>
    %6 = arith.addf %2, %5 : vector<8x128xf32>
    %c0_8 = arith.constant 0 : index
    %c0_9 = arith.constant 0 : index
    %7 = vector.load %arg7[%c0_8, %c0_9] : memref<1x128xf32, #tpu.memory_space<vmem>>, vector<1x128xf32>
    %8 = vector.broadcast %7 : vector<1x128xf32> to vector<8x128xf32>
    %9 = arith.addf %6, %8 : vector<8x128xf32>
    %cst_10 = arith.constant 0.000000e+00 : f32
    %10 = vector.broadcast %cst_10 : f32 to vector<8x128xf32>
    %11 = arith.maximumf %9, %10 : vector<8x128xf32>
    %c0_11 = arith.constant 0 : index
    %c0_12 = arith.constant 0 : index
    %12 = vector.load %arg8[%c0_11, %c0_12] : memref<128x64xf32, #tpu.memory_space<vmem>>, vector<128x64xf32>
    %cst_13 = arith.constant dense<0.000000e+00> : vector<8x64xf32>
    %13 = tpu.matmul %11, %12, %cst_13 {dimension_numbers = #tpu.dot_dimension_numbers<[1], [0], [0], [1], [0, 0, 1, 1], [], []>} : vector<8x128xf32>, vector<128x64xf32>, vector<8x64xf32> -> vector<8x64xf32>
    %c0_14 = arith.constant 0 : index
    %c0_15 = arith.constant 0 : index
    %14 = vector.load %arg9[%c0_14, %c0_15] : memref<1x64xf32, #tpu.memory_space<vmem>>, vector<1x64xf32>
    %15 = vector.broadcast %14 : vector<1x64xf32> to vector<8x64xf32>
    %16 = arith.addf %13, %15 : vector<8x64xf32>
    %cst_16 = arith.constant 0.000000e+00 : f32
    %17 = vector.broadcast %cst_16 : f32 to vector<8x64xf32>
    %18 = arith.maximumf %16, %17 : vector<8x64xf32>
    %c0_17 = arith.constant 0 : index
    %c0_18 = arith.constant 0 : index
    %19 = vector.load %arg10[%c0_17, %c0_18] : memref<64x32xf32, #tpu.memory_space<vmem>>, vector<64x32xf32>
    %cst_19 = arith.constant dense<0.000000e+00> : vector<8x32xf32>
    %20 = tpu.matmul %18, %19, %cst_19 {dimension_numbers = #tpu.dot_dimension_numbers<[1], [0], [0], [1], [0, 0, 1, 1], [], []>} : vector<8x64xf32>, vector<64x32xf32>, vector<8x32xf32> -> vector<8x32xf32>
    %c0_20 = arith.constant 0 : index
    %c0_21 = arith.constant 0 : index
    %21 = vector.load %arg11[%c0_20, %c0_21] : memref<1x32xf32, #tpu.memory_space<vmem>>, vector<1x32xf32>
    %22 = vector.broadcast %21 : vector<1x32xf32> to vector<8x32xf32>
    %23 = arith.addf %20, %22 : vector<8x32xf32>
    %cst_22 = arith.constant 0.000000e+00 : f32
    %24 = vector.broadcast %cst_22 : f32 to vector<8x32xf32>
    %25 = arith.maximumf %23, %24 : vector<8x32xf32>
    %c0_23 = arith.constant 0 : index
    %c0_24 = arith.constant 0 : index
    %26 = vector.load %arg12[%c0_23, %c0_24] : memref<32x16xf32, #tpu.memory_space<vmem>>, vector<32x16xf32>
    %cst_25 = arith.constant dense<0.000000e+00> : vector<8x16xf32>
    %27 = tpu.matmul %25, %26, %cst_25 {dimension_numbers = #tpu.dot_dimension_numbers<[1], [0], [0], [1], [0, 0, 1, 1], [], []>} : vector<8x32xf32>, vector<32x16xf32>, vector<8x16xf32> -> vector<8x16xf32>
    %c0_26 = arith.constant 0 : index
    %c0_27 = arith.constant 0 : index
    %28 = vector.load %arg13[%c0_26, %c0_27] : memref<1x16xf32, #tpu.memory_space<vmem>>, vector<1x16xf32>
    %29 = vector.broadcast %28 : vector<1x16xf32> to vector<8x16xf32>
    %30 = arith.addf %27, %29 : vector<8x16xf32>
    %cst_28 = arith.constant 0.000000e+00 : f32
    %31 = vector.broadcast %cst_28 : f32 to vector<8x16xf32>
    %32 = arith.maximumf %30, %31 : vector<8x16xf32>
    %c0_29 = arith.constant 0 : index
    %c0_30 = arith.constant 0 : index
    %33 = vector.load %arg3[%c0_29, %c0_30] : memref<8x48xf32, #tpu.memory_space<vmem>>, vector<8x48xf32>
    %c0_31 = arith.constant 0 : index
    %c0_32 = arith.constant 0 : index
    %34 = vector.load %arg4[%c0_31, %c0_32] : memref<8x48xf32, #tpu.memory_space<vmem>>, vector<8x48xf32>
    %35 = arith.mulf %33, %34 : vector<8x48xf32>
    %c0_33 = arith.constant 0 : index
    %c0_34 = arith.constant 0 : index
    %36 = vector.load %arg14[%c0_33, %c0_34] : memref<1x16xf32, #tpu.memory_space<vmem>>, vector<1x16xf32>
    %37 = vector.broadcast %36 : vector<1x16xf32> to vector<8x16xf32>
    %38 = arith.mulf %32, %37 : vector<8x16xf32>
    %cst_35 = arith.constant dense<0.000000e+00> : vector<8xf32>
    %39 = vector.multi_reduction <add>, %38, %cst_35 [1] : vector<8x16xf32> to vector<8xf32>
    %40 = vector.shape_cast %39 : vector<8xf32> to vector<8x1xf32>
    %c0_36 = arith.constant 0 : index
    %c0_37 = arith.constant 0 : index
    %41 = vector.load %arg15[%c0_36, %c0_37] : memref<1x48xf32, #tpu.memory_space<vmem>>, vector<1x48xf32>
    %42 = vector.broadcast %41 : vector<1x48xf32> to vector<8x48xf32>
    %43 = arith.mulf %35, %42 : vector<8x48xf32>
    %cst_38 = arith.constant dense<0.000000e+00> : vector<8xf32>
    %44 = vector.multi_reduction <add>, %43, %cst_38 [1] : vector<8x48xf32> to vector<8xf32>
    %45 = vector.shape_cast %44 : vector<8xf32> to vector<8x1xf32>
    %46 = arith.addf %40, %45 : vector<8x1xf32>
    %c0_39 = arith.constant 0 : index
    %c0_40 = arith.constant 0 : index
    %47 = vector.load %arg16[%c0_39, %c0_40] : memref<1x1xf32, #tpu.memory_space<vmem>>, vector<1x1xf32>
    %48 = vector.broadcast %47 : vector<1x1xf32> to vector<8x1xf32>
    %49 = arith.addf %46, %48 : vector<8x1xf32>
    %c0_41 = arith.constant 0 : index
    %c0_42 = arith.constant 0 : index
    %50 = vector.load %arg17[%c0_41, %c0_42] : memref<8x1xf32, #tpu.memory_space<vmem>>, vector<8x1xf32>
    tpu.vector_store %arg17[%c0_41, %c0_42], %49 {strides = array<i32>} : memref<8x1xf32, #tpu.memory_space<vmem>>, vector<8x1xf32>,
    return
  }
  func.func @transform_0(%arg0: i32) -> (i32, i32) {
    %c0_i32 = arith.constant 0 : i32
    %c0_i32_0 = arith.constant 0 : i32
    %c0_i32_1 = arith.constant 0 : i32
    return %c0_i32, %c0_i32_0 : i32, i32
  }
  func.func @transform_1(%arg0: i32) -> (i32, i32) {
    %c0_i32 = arith.constant 0 : i32
    %c0_i32_0 = arith.constant 0 : i32
    %c0_i32_1 = arith.constant 0 : i32
    return %c0_i32, %c0_i32_0 : i32, i32
  }
  func.func @transform_2(%arg0: i32) -> (i32, i32) {
    %c0_i32 = arith.constant 0 : i32
    %c0_i32_0 = arith.constant 0 : i32
    %c0_i32_1 = arith.constant 0 : i32
    return %c0_i32, %c0_i32_0 : i32, i32
  }
  func.func @transform_3(%arg0: i32) -> (i32, i32) {
    %c0_i32 = arith.constant 0 : i32
    %c0_i32_0 = arith.constant 0 : i32
    %c0_i32_1 = arith.constant 0 : i32
    return %c0_i32, %c0_i32_0 : i32, i32
  }
  func.func @transform_4(%arg0: i32) -> (i32, i32) {
    %c0_i32 = arith.constant 0 : i32
    %c0_i32_0 = arith.constant 0 : i32
    %c0_i32_1 = arith.constant 0 : i32
    return %c0_i32, %c0_i32_0 : i32, i32
  }
  func.func @transform_5(%arg0: i32) -> (i32, i32) {
    %c0_i32 = arith.constant 0 : i32
    %c0_i32_0 = arith.constant 0 : i32
    %c0_i32_1 = arith.constant 0 : i32
    return %c0_i32, %c0_i32_0 : i32, i32
  }
  func.func @transform_6(%arg0: i32) -> (i32, i32) {
    %c0_i32 = arith.constant 0 : i32
    %c0_i32_0 = arith.constant 0 : i32
    %c0_i32_1 = arith.constant 0 : i32
    return %c0_i32, %c0_i32_0 : i32, i32
  }
  func.func @transform_7(%arg0: i32) -> (i32, i32) {
    %c0_i32 = arith.constant 0 : i32
    %c0_i32_0 = arith.constant 0 : i32
    %c0_i32_1 = arith.constant 0 : i32
    return %c0_i32, %c0_i32_0 : i32, i32
  }
  func.func @transform_8(%arg0: i32) -> (i32, i32) {
    %c0_i32 = arith.constant 0 : i32
    %c0_i32_0 = arith.constant 0 : i32
    %c0_i32_1 = arith.constant 0 : i32
    return %c0_i32, %c0_i32_0 : i32, i32
  }
  func.func @transform_9(%arg0: i32) -> (i32, i32) {
    %c0_i32 = arith.constant 0 : i32
    %c0_i32_0 = arith.constant 0 : i32
    %c0_i32_1 = arith.constant 0 : i32
    return %c0_i32, %c0_i32_0 : i32, i32
  }
  func.func @transform_10(%arg0: i32) -> (i32, i32) {
    %c0_i32 = arith.constant 0 : i32
    %c0_i32_0 = arith.constant 0 : i32
    %c0_i32_1 = arith.constant 0 : i32
    return %c0_i32, %c0_i32_0 : i32, i32
  }
  func.func @transform_11(%arg0: i32) -> (i32, i32) {
    %c0_i32 = arith.constant 0 : i32
    %c0_i32_0 = arith.constant 0 : i32
    %c0_i32_1 = arith.constant 0 : i32
    return %c0_i32, %c0_i32_0 : i32, i32
  }
  func.func @transform_12(%arg0: i32) -> (i32, i32) {
    %c0_i32 = arith.constant 0 : i32
    %c0_i32_0 = arith.constant 0 : i32
    %c0_i32_1 = arith.constant 0 : i32
    return %c0_i32, %c0_i32_0 : i32, i32
  }
  func.func @transform_13(%arg0: i32) -> (i32, i32) {
    %c0_i32 = arith.constant 0 : i32
    %c0_i32_0 = arith.constant 0 : i32
    %c0_i32_1 = arith.constant 0 : i32
    return %c0_i32, %c0_i32_0 : i32, i32
  }
  func.func @transform_14(%arg0: i32) -> (i32, i32) {
    %c0_i32 = arith.constant 0 : i32
    %c0_i32_0 = arith.constant 0 : i32
    %c0_i32_1 = arith.constant 0 : i32
    return %c0_i32, %c0_i32_0 : i32, i32
  }
  func.func @transform_15(%arg0: i32) -> (i32, i32) {
    %c0_i32 = arith.constant 0 : i32
    %c0_i32_0 = arith.constant 0 : i32
    %c0_i32_1 = arith.constant 0 : i32
    return %c0_i32, %c0_i32_0 : i32, i32
  }
  func.func @transform_16(%arg0: i32) -> (i32, i32) {
    %c0_i32 = arith.constant 0 : i32
    %c0_i32_0 = arith.constant 0 : i32
    %c0_i32_1 = arith.constant 0 : i32
    return %c0_i32, %c0_i32_0 : i32, i32
  }
}

</mosaic_0001>

<llo_original>
// kernel: ngcfmf_concat_mlp_forward.9
$region0: #{ngcfmf_concat_mlp_forward.9}
  #allocation0 [shape = 'u32[]', space=smem, size = 0x4, offset = 0x4, fixed_abs, tag = 'smem constant byte address 0x4 - core index']
  #allocation1 [shape = 'u32[144,128]{1,0:T(1,128)}', space=vmem, size = 0x12000, scoped, tag = 'internal scratch']
  #allocation2 [shape = 'f32[1,1]{1,0:T(1,128)S(1)}', space=vmem, size = 0x200, scoped, tag = 'scoped memory for ngcfmf_concat_mlp_forward.9']
  %s0 = inlined_call_operand.vmem [shape: f32[8,16], index: 0, kind: input, shape index: {}]
  %s1 = inlined_call_operand.vmem [shape: f32[8,16], index: 1, kind: input, shape index: {}]
  %s2 = inlined_call_operand.vmem [shape: f32[8,48], index: 2, kind: input, shape index: {}]
  %s3 = inlined_call_operand.vmem [shape: f32[8,48], index: 3, kind: input, shape index: {}]
  %s4 = inlined_call_operand.vmem [shape: f32[16,128], index: 4, kind: input, shape index: {}]
  %s5 = inlined_call_operand.vmem [shape: f32[16,128], index: 5, kind: input, shape index: {}]
  %s6 = inlined_call_operand.vmem [shape: f32[1,128], index: 6, kind: input, shape index: {}]
  %s7 = inlined_call_operand.vmem [shape: f32[128,64], index: 7, kind: input, shape index: {}]
  %s8 = inlined_call_operand.vmem [shape: f32[1,64], index: 8, kind: input, shape index: {}]
  %s9 = inlined_call_operand.vmem [shape: f32[64,32], index: 9, kind: input, shape index: {}]
  %s10 = inlined_call_operand.vmem [shape: f32[1,32], index: 10, kind: input, shape index: {}]
  %s11 = inlined_call_operand.vmem [shape: f32[32,16], index: 11, kind: input, shape index: {}]
  %s12 = inlined_call_operand.vmem [shape: f32[1,16], index: 12, kind: input, shape index: {}]
  %s13 = inlined_call_operand.vmem [shape: f32[1,16], index: 13, kind: input, shape index: {}]
  %s14 = inlined_call_operand.vmem [shape: f32[1,48], index: 14, kind: input, shape index: {}]
  %s15 = inlined_call_operand.<no memory space> [shape: f32[1,1], index: 15, kind: input, shape index: {}]
  %s16 = inlined_call_operand.vmem [shape: f32[8,1], index: 16, kind: output, shape index: {}]
  %s17 = sld [smem:[#allocation0]]
  $region74: #{ngcfmf_concat_mlp_forward.9} parent=0
    _
  %s19 = ssub.s32 1, %s17
  %s20 = scalar_select 0, %s19, %s17
  %v21 = vstv %s15
  %22 = vst [vmem:[#allocation2] sm:$0x1] %v21
  // Predicated region
  $region2: #{ngcfmf_concat_mlp_forward.9} parent=0 // pred_check
    _
  $region3: #{ngcfmf_concat_mlp_forward.9} parent=0 // pred_check_branch
    %24 = sbr.rel (0) target = $region5
  $region4: #{ngcfmf_concat_mlp_forward.9} parent=0 // pred_region
    _
  $region5: #{ngcfmf_concat_mlp_forward.9} parent=0 // pred_fallthru
    _
  // Predicated region
  $region6: #{ngcfmf_concat_mlp_forward.9} parent=0 // pred_check
    _
  $region7: #{ngcfmf_concat_mlp_forward.9} parent=0 // pred_check_branch
    %26 = sbr.rel (0) target = $region9
  $region8: #{ngcfmf_concat_mlp_forward.9} parent=0 // pred_region
    _
  $region9: #{ngcfmf_concat_mlp_forward.9} parent=0 // pred_fallthru
    _
  // Predicated region
  $region10: #{ngcfmf_concat_mlp_forward.9} parent=0 // pred_check
    _
  $region11: #{ngcfmf_concat_mlp_forward.9} parent=0 // pred_check_branch
    %28 = sbr.rel (0) target = $region13
  $region12: #{ngcfmf_concat_mlp_forward.9} parent=0 // pred_region
    _
  $region13: #{ngcfmf_concat_mlp_forward.9} parent=0 // pred_fallthru
    _
  // Predicated region
  $region14: #{ngcfmf_concat_mlp_forward.9} parent=0 // pred_check
    _
  $region15: #{ngcfmf_concat_mlp_forward.9} parent=0 // pred_check_branch
    %30 = sbr.rel (0) target = $region17
  $region16: #{ngcfmf_concat_mlp_forward.9} parent=0 // pred_region
    _
  $region17: #{ngcfmf_concat_mlp_forward.9} parent=0 // pred_fallthru
    _
  // Predicated region
  $region18: #{ngcfmf_concat_mlp_forward.9} parent=0 // pred_check
    _
  $region19: #{ngcfmf_concat_mlp_forward.9} parent=0 // pred_check_branch
    %32 = sbr.rel (0) target = $region21
  $region20: #{ngcfmf_concat_mlp_forward.9} parent=0 // pred_region
    _
  $region21: #{ngcfmf_concat_mlp_forward.9} parent=0 // pred_fallthru
    _
  // Predicated region
  $region22: #{ngcfmf_concat_mlp_forward.9} parent=0 // pred_check
    _
  $region23: #{ngcfmf_concat_mlp_forward.9} parent=0 // pred_check_branch
    %34 = sbr.rel (0) target = $region25
  $region24: #{ngcfmf_concat_mlp_forward.9} parent=0 // pred_region
    _
  $region25: #{ngcfmf_concat_mlp_forward.9} parent=0 // pred_fallthru
    _
  // Predicated region
  $region26: #{ngcfmf_concat_mlp_forward.9} parent=0 // pred_check
    _
  $region27: #{ngcfmf_concat_mlp_forward.9} parent=0 // pred_check_branch
    %36 = sbr.rel (0) target = $region29
  $region28: #{ngcfmf_concat_mlp_forward.9} parent=0 // pred_region
    _
  $region29: #{ngcfmf_concat_mlp_forward.9} parent=0 // pred_fallthru
    _
  // Predicated region
  $region30: #{ngcfmf_concat_mlp_forward.9} parent=0 // pred_check
    _
  $region31: #{ngcfmf_concat_mlp_forward.9} parent=0 // pred_check_branch
    %38 = sbr.rel (0) target = $region33
  $region32: #{ngcfmf_concat_mlp_forward.9} parent=0 // pred_region
    _
  $region33: #{ngcfmf_concat_mlp_forward.9} parent=0 // pred_fallthru
    _
  // Predicated region
  $region34: #{ngcfmf_concat_mlp_forward.9} parent=0 // pred_check
    _
  $region35: #{ngcfmf_concat_mlp_forward.9} parent=0 // pred_check_branch
    %40 = sbr.rel (0) target = $region37
  $region36: #{ngcfmf_concat_mlp_forward.9} parent=0 // pred_region
    _
  $region37: #{ngcfmf_concat_mlp_forward.9} parent=0 // pred_fallthru
    _
  // Predicated region
  $region38: #{ngcfmf_concat_mlp_forward.9} parent=0 // pred_check
    _
  $region39: #{ngcfmf_concat_mlp_forward.9} parent=0 // pred_check_branch
    %42 = sbr.rel (0) target = $region41
  $region40: #{ngcfmf_concat_mlp_forward.9} parent=0 // pred_region
    _
  $region41: #{ngcfmf_concat_mlp_forward.9} parent=0 // pred_fallthru
    _
  // Predicated region
  $region42: #{ngcfmf_concat_mlp_forward.9} parent=0 // pred_check
    _
  $region43: #{ngcfmf_concat_mlp_forward.9} parent=0 // pred_check_branch
    %44 = sbr.rel (0) target = $region45
  $region44: #{ngcfmf_concat_mlp_forward.9} parent=0 // pred_region
    _
  $region45: #{ngcfmf_concat_mlp_forward.9} parent=0 // pred_fallthru
    _
  // Predicated region
  $region46: #{ngcfmf_concat_mlp_forward.9} parent=0 // pred_check
    _
  $region47: #{ngcfmf_concat_mlp_forward.9} parent=0 // pred_check_branch
    %46 = sbr.rel (0) target = $region49
  $region48: #{ngcfmf_concat_mlp_forward.9} parent=0 // pred_region
    _
  $region49: #{ngcfmf_concat_mlp_forward.9} parent=0 // pred_fallthru
    _
  // Predicated region
  $region50: #{ngcfmf_concat_mlp_forward.9} parent=0 // pred_check
    _
  $region51: #{ngcfmf_concat_mlp_forward.9} parent=0 // pred_check_branch
    %48 = sbr.rel (0) target = $region53
  $region52: #{ngcfmf_concat_mlp_forward.9} parent=0 // pred_region
    _
  $region53: #{ngcfmf_concat_mlp_forward.9} parent=0 // pred_fallthru
    _
  // Predicated region
  $region54: #{ngcfmf_concat_mlp_forward.9} parent=0 // pred_check
    _
  $region55: #{ngcfmf_concat_mlp_forward.9} parent=0 // pred_check_branch
    %50 = sbr.rel (0) target = $region57
  $region56: #{ngcfmf_concat_mlp_forward.9} parent=0 // pred_region
    _
  $region57: #{ngcfmf_concat_mlp_forward.9} parent=0 // pred_fallthru
    _
  // Predicated region
  $region58: #{ngcfmf_concat_mlp_forward.9} parent=0 // pred_check
    _
  $region59: #{ngcfmf_concat_mlp_forward.9} parent=0 // pred_check_branch
    %52 = sbr.rel (0) target = $region61
  $region60: #{ngcfmf_concat_mlp_forward.9} parent=0 // pred_region
    _
  $region61: #{ngcfmf_concat_mlp_forward.9} parent=0 // pred_fallthru
    _
  // Predicated region
  $region62: #{ngcfmf_concat_mlp_forward.9} parent=0 // pred_check
    _
  $region63: #{ngcfmf_concat_mlp_forward.9} parent=0 // pred_check_branch
    %54 = sbr.rel (0) target = $region65
  $region64: #{ngcfmf_concat_mlp_forward.9} parent=0 // pred_region
    _
  $region65: #{ngcfmf_concat_mlp_forward.9} parent=0 // pred_fallthru
    _
  %v55 = vld [vmem:[%s0] sm:$0xff]
  %v56 = vld [vmem:[%s4] sm:$0xff]
  %v57 = vld [vmem:[%s4 + $0x8] sm:$0xff]
  %v58 = vld [vmem:[%s1] sm:$0xff]
  %v59 = vld [vmem:[%s5] sm:$0xff]
  %v60 = vld [vmem:[%s5 + $0x8] sm:$0xff]
  %vm61 = vcmask 130048
  %v63 = vsel %vm61, %v58, 0
  %65 = vmatprep.subr.mxu0 0.0
  %66 = vmatpush1.msra.mxu0 %v59
  %67 = vmatprep.subr.mxu0 0.0
  %68 = vmatpush1.msra.mxu0 %v60
  %69 = vmatprep.subr.mxu0 0.0
  %70 = vmatpush1.msra.mxu0 0.0
  %71 = vmatprep.subr.mxu0 0.0
  %72 = vmatpush1.msra.mxu0 0.0
  %73 = vmatprep.subr.mxu0 0.0
  %74 = vmatpush1.msra.mxu0 0.0
  %75 = vmatprep.subr.mxu0 0.0
  %76 = vmatpush1.msra.mxu0 0.0
  %77 = vmatprep.subr.mxu0 0.0
  %78 = vmatpush1.msra.mxu0 0.0
  %79 = vmatprep.subr.mxu0 0.0
  %80 = vmatpush1.msra.mxu0 0.0
  %81 = vmatprep.subr.mxu0 0.0
  %82 = vmatpush1.msra.mxu0 0.0
  %83 = vmatprep.subr.mxu0 0.0
  %84 = vmatpush1.msra.mxu0 0.0
  %85 = vmatprep.subr.mxu0 0.0
  %86 = vmatpush1.msra.mxu0 0.0
  %87 = vmatprep.subr.mxu0 0.0
  %88 = vmatpush1.msra.mxu0 0.0
  %89 = vmatprep.subr.mxu0 0.0
  %90 = vmatpush1.msra.mxu0 0.0
  %91 = vmatprep.subr.mxu0 0.0
  %92 = vmatpush1.msra.mxu0 0.0
  %93 = vmatprep.subr.mxu0 0.0
  %94 = vmatpush1.msra.mxu0 0.0
  %95 = vmatprep.subr.mxu0 0.0
  %96 = vmatpush1.msra.mxu0 0.0
  %97 = vmatprep.subr.mxu0 0.0
  %98 = vmatpush1.msra.mxu0 0.0
  %99 = vmatprep.subr.mxu0 0.0
  %100 = vmatpush1.msra.mxu0 0.0
  %101 = vmatprep.subr.mxu0 0.0
  %102 = vmatpush1.msra.mxu0 0.0
  %103 = vmatprep.subr.mxu0 0.0
  %104 = vmatpush1.msra.mxu0 0.0
  %105 = vmatprep.subr.mxu0 0.0
  %106 = vmatpush1.msra.mxu0 0.0
  %107 = vmatprep.subr.mxu0 0.0
  %108 = vmatpush1.msra.mxu0 0.0
  %109 = vmatprep.subr.mxu0 0.0
  %110 = vmatpush1.msra.mxu0 0.0
  %111 = vmatprep.subr.mxu0 0.0
  %112 = vmatpush1.msra.mxu0 0.0
  %113 = vmatprep.subr.mxu0 0.0
  %114 = vmatpush1.msra.mxu0 0.0
  %115 = vmatprep.subr.mxu0 0.0
  %116 = vmatpush1.msra.mxu0 0.0
  %117 = vmatprep.subr.mxu0 0.0
  %118 = vmatpush1.msra.mxu0 0.0
  %119 = vmatprep.subr.mxu0 0.0
  %120 = vmatpush1.msra.mxu0 0.0
  %121 = vmatprep.subr.mxu0 0.0
  %122 = vmatpush1.msra.mxu0 0.0
  %123 = vmatprep.subr.mxu0 0.0
  %124 = vmatpush1.msra.mxu0 0.0
  %125 = vmatprep.subr.mxu0 0.0
  %126 = vmatpush1.msra.mxu0 0.0
  %127 = vmatprep.subr.mxu0 0.0
  %128 = vmatpush1.msra.mxu0 0.0
  %129 = vmatprep.mubr.f32.mxu0 0.0
  %130 = vmatmul.mubr.f32.gmra.mrb[0].mxu0 %v63
  %v131 = vpop.f32.mrb[0].mxu0
  %v132 = vadd.f32 0.0, %v131
  %v133 = vpop.f32.mrb[0].mxu0
  %134 = vdwg.mxu0
  %v136 = vsel %vm61, %v55, 0
  %138 = vmatprep.subr.mxu0 0.0
  %139 = vmatpush1.msra.mxu0 %v56
  %140 = vmatprep.subr.mxu0 0.0
  %141 = vmatpush1.msra.mxu0 %v57
  %142 = vmatprep.subr.mxu0 0.0
  %143 = vmatpush1.msra.mxu0 0.0
  %144 = vmatprep.subr.mxu0 0.0
  %145 = vmatpush1.msra.mxu0 0.0
  %146 = vmatprep.subr.mxu0 0.0
  %147 = vmatpush1.msra.mxu0 0.0
  %148 = vmatprep.subr.mxu0 0.0
  %149 = vmatpush1.msra.mxu0 0.0
  %150 = vmatprep.subr.mxu0 0.0
  %151 = vmatpush1.msra.mxu0 0.0
  %152 = vmatprep.subr.mxu0 0.0
  %153 = vmatpush1.msra.mxu0 0.0
  %154 = vmatprep.subr.mxu0 0.0
  %155 = vmatpush1.msra.mxu0 0.0
  %156 = vmatprep.subr.mxu0 0.0
  %157 = vmatpush1.msra.mxu0 0.0
  %158 = vmatprep.subr.mxu0 0.0
  %159 = vmatpush1.msra.mxu0 0.0
  %160 = vmatprep.subr.mxu0 0.0
  %161 = vmatpush1.msra.mxu0 0.0
  %162 = vmatprep.subr.mxu0 0.0
  %163 = vmatpush1.msra.mxu0 0.0
  %164 = vmatprep.subr.mxu0 0.0
  %165 = vmatpush1.msra.mxu0 0.0
  %166 = vmatprep.subr.mxu0 0.0
  %167 = vmatpush1.msra.mxu0 0.0
  %168 = vmatprep.subr.mxu0 0.0
  %169 = vmatpush1.msra.mxu0 0.0
  %170 = vmatprep.subr.mxu0 0.0
  %171 = vmatpush1.msra.mxu0 0.0
  %172 = vmatprep.subr.mxu0 0.0
  %173 = vmatpush1.msra.mxu0 0.0
  %174 = vmatprep.subr.mxu0 0.0
  %175 = vmatpush1.msra.mxu0 0.0
  %176 = vmatprep.subr.mxu0 0.0
  %177 = vmatpush1.msra.mxu0 0.0
  %178 = vmatprep.subr.mxu0 0.0
  %179 = vmatpush1.msra.mxu0 0.0
  %180 = vmatprep.subr.mxu0 0.0
  %181 = vmatpush1.msra.mxu0 0.0
  %182 = vmatprep.subr.mxu0 0.0
  %183 = vmatpush1.msra.mxu0 0.0
  %184 = vmatprep.subr.mxu0 0.0
  %185 = vmatpush1.msra.mxu0 0.0
  %186 = vmatprep.subr.mxu0 0.0
  %187 = vmatpush1.msra.mxu0 0.0
  %188 = vmatprep.subr.mxu0 0.0
  %189 = vmatpush1.msra.mxu0 0.0
  %190 = vmatprep.subr.mxu0 0.0
  %191 = vmatpush1.msra.mxu0 0.0
  %192 = vmatprep.subr.mxu0 0.0
  %193 = vmatpush1.msra.mxu0 0.0
  %194 = vmatprep.subr.mxu0 0.0
  %195 = vmatpush1.msra.mxu0 0.0
  %196 = vmatprep.subr.mxu0 0.0
  %197 = vmatpush1.msra.mxu0 0.0
  %198 = vmatprep.subr.mxu0 0.0
  %199 = vmatpush1.msra.mxu0 0.0
  %200 = vmatprep.subr.mxu0 0.0
  %201 = vmatpush1.msra.mxu0 0.0
  %202 = vmatprep.mubr.f32.mxu0 0.0
  %203 = vmatmul.mubr.f32.gmra.mrb[0].mxu0 %v136
  %v204 = vpop.f32.mrb[0].mxu0
  %v205 = vadd.f32 %v132, %v204
  %v206 = vpop.f32.mrb[0].mxu0
  %207 = vdwg.mxu0
  %v208 = vld [vmem:[%s6] sm:$0x1]
  %v210 = vlaneseq
  %v211 = vshrl.u32 %v210, 7
  %v212 = vsub.s32 0, %v211
  %v213 = vrot.slane %v208, %v212
  %v215 = vadd.f32 %v205, %v213
  %v216 = vmax.f32 %v215, 0.0
  %v217 = vld [vmem:[%s7] sm:$0xff]
  %v218 = vld [vmem:[%s7 + $0x8] sm:$0xff]
  %v219 = vld [vmem:[%s7 + $0x10] sm:$0xff]
  %v220 = vld [vmem:[%s7 + $0x18] sm:$0xff]
  %v221 = vld [vmem:[%s7 + $0x20] sm:$0xff]
  %v222 = vld [vmem:[%s7 + $0x28] sm:$0xff]
  %v223 = vld [vmem:[%s7 + $0x30] sm:$0xff]
  %v224 = vld [vmem:[%s7 + $0x38] sm:$0xff]
  %v225 = vld [vmem:[%s7 + $0x40] sm:$0xff]
  %v226 = vld [vmem:[%s7 + $0x48] sm:$0xff]
  %v227 = vld [vmem:[%s7 + $0x50] sm:$0xff]
  %v228 = vld [vmem:[%s7 + $0x58] sm:$0xff]
  %v229 = vld [vmem:[%s7 + $0x60] sm:$0xff]
  %v230 = vld [vmem:[%s7 + $0x68] sm:$0xff]
  %v231 = vld [vmem:[%s7 + $0x70] sm:$0xff]
  %v232 = vld [vmem:[%s7 + $0x78] sm:$0xff]
  %v233 = vld [vmem:[%s8] sm:$0x1]
  %v235 = vlaneseq
  %v236 = vshrl.u32 %v235, 7
  %v237 = vsub.s32 0, %v236
  %v238 = vrot.slane %v233, %v237
  %240 = vmatprep.subr.mxu0 0.0
  %241 = vmatpush1.msra.mxu0 %v217
  %242 = vmatprep.subr.mxu0 0.0
  %243 = vmatpush1.msra.mxu0 %v218
  %244 = vmatprep.subr.mxu0 0.0
  %245 = vmatpush1.msra.mxu0 %v219
  %246 = vmatprep.subr.mxu0 0.0
  %247 = vmatpush1.msra.mxu0 %v220
  %248 = vmatprep.subr.mxu0 0.0
  %249 = vmatpush1.msra.mxu0 %v221
  %250 = vmatprep.subr.mxu0 0.0
  %251 = vmatpush1.msra.mxu0 %v222
  %252 = vmatprep.subr.mxu0 0.0
  %253 = vmatpush1.msra.mxu0 %v223
  %254 = vmatprep.subr.mxu0 0.0
  %255 = vmatpush1.msra.mxu0 %v224
  %256 = vmatprep.subr.mxu0 0.0
  %257 = vmatpush1.msra.mxu0 %v225
  %258 = vmatprep.subr.mxu0 0.0
  %259 = vmatpush1.msra.mxu0 %v226
  %260 = vmatprep.subr.mxu0 0.0
  %261 = vmatpush1.msra.mxu0 %v227
  %262 = vmatprep.subr.mxu0 0.0
  %263 = vmatpush1.msra.mxu0 %v228
  %264 = vmatprep.subr.mxu0 0.0
  %265 = vmatpush1.msra.mxu0 %v229
  %266 = vmatprep.subr.mxu0 0.0
  %267 = vmatpush1.msra.mxu0 %v230
  %268 = vmatprep.subr.mxu0 0.0
  %269 = vmatpush1.msra.mxu0 %v231
  %270 = vmatprep.subr.mxu0 0.0
  %271 = vmatpush1.msra.mxu0 %v232
  %272 = vmatprep.subr.mxu0 0.0
  %273 = vmatpush1.msra.mxu0 0.0
  %274 = vmatprep.subr.mxu0 0.0
  %275 = vmatpush1.msra.mxu0 0.0
  %276 = vmatprep.subr.mxu0 0.0
  %277 = vmatpush1.msra.mxu0 0.0
  %278 = vmatprep.subr.mxu0 0.0
  %279 = vmatpush1.msra.mxu0 0.0
  %280 = vmatprep.subr.mxu0 0.0
  %281 = vmatpush1.msra.mxu0 0.0
  %282 = vmatprep.subr.mxu0 0.0
  %283 = vmatpush1.msra.mxu0 0.0
  %284 = vmatprep.subr.mxu0 0.0
  %285 = vmatpush1.msra.mxu0 0.0
  %286 = vmatprep.subr.mxu0 0.0
  %287 = vmatpush1.msra.mxu0 0.0
  %288 = vmatprep.subr.mxu0 0.0
  %289 = vmatpush1.msra.mxu0 0.0
  %290 = vmatprep.subr.mxu0 0.0
  %291 = vmatpush1.msra.mxu0 0.0
  %292 = vmatprep.subr.mxu0 0.0
  %293 = vmatpush1.msra.mxu0 0.0
  %294 = vmatprep.subr.mxu0 0.0
  %295 = vmatpush1.msra.mxu0 0.0
  %296 = vmatprep.subr.mxu0 0.0
  %297 = vmatpush1.msra.mxu0 0.0
  %298 = vmatprep.subr.mxu0 0.0
  %299 = vmatpush1.msra.mxu0 0.0
  %300 = vmatprep.subr.mxu0 0.0
  %301 = vmatpush1.msra.mxu0 0.0
  %302 = vmatprep.subr.mxu0 0.0
  %303 = vmatpush1.msra.mxu0 0.0
  %304 = vmatprep.mubr.f32.mxu0 0.0
  %305 = vmatmul.mubr.f32.gmra.mrb[0].mxu0 %v216
  %v306 = vpop.f32.mrb[0].mxu0
  %v307 = vadd.f32 %v238, %v306
  %v308 = vpop.f32.mrb[0].mxu0
  %309 = vdwg.mxu0
  %v310 = vmax.f32 %v307, 0.0
  %v311 = vld [vmem:[%s9] sm:$0xff]
  %v312 = vld [vmem:[%s9 + $0x8] sm:$0xff]
  %v313 = vld [vmem:[%s9 + $0x10] sm:$0xff]
  %v314 = vld [vmem:[%s9 + $0x18] sm:$0xff]
  %v315 = vld [vmem:[%s9 + $0x20] sm:$0xff]
  %v316 = vld [vmem:[%s9 + $0x28] sm:$0xff]
  %v317 = vld [vmem:[%s9 + $0x30] sm:$0xff]
  %v318 = vld [vmem:[%s9 + $0x38] sm:$0xff]
  %v319 = vld [vmem:[%s10] sm:$0x1]
  %v321 = vlaneseq
  %v322 = vshrl.u32 %v321, 7
  %v323 = vsub.s32 0, %v322
  %v324 = vrot.slane %v319, %v323
  %vm326 = vcmask 523264
  %v328 = vsel %vm326, %v310, 0
  %330 = vmatprep.subr.mxu0 0.0
  %331 = vmatpush1.msra.mxu0 %v311
  %332 = vmatprep.subr.mxu0 0.0
  %333 = vmatpush1.msra.mxu0 %v312
  %334 = vmatprep.subr.mxu0 0.0
  %335 = vmatpush1.msra.mxu0 %v313
  %336 = vmatprep.subr.mxu0 0.0
  %337 = vmatpush1.msra.mxu0 %v314
  %338 = vmatprep.subr.mxu0 0.0
  %339 = vmatpush1.msra.mxu0 %v315
  %340 = vmatprep.subr.mxu0 0.0
  %341 = vmatpush1.msra.mxu0 %v316
  %342 = vmatprep.subr.mxu0 0.0
  %343 = vmatpush1.msra.mxu0 %v317
  %344 = vmatprep.subr.mxu0 0.0
  %345 = vmatpush1.msra.mxu0 %v318
  %346 = vmatprep.subr.mxu0 0.0
  %347 = vmatpush1.msra.mxu0 0.0
  %348 = vmatprep.subr.mxu0 0.0
  %349 = vmatpush1.msra.mxu0 0.0
  %350 = vmatprep.subr.mxu0 0.0
  %351 = vmatpush1.msra.mxu0 0.0
  %352 = vmatprep.subr.mxu0 0.0
  %353 = vmatpush1.msra.mxu0 0.0
  %354 = vmatprep.subr.mxu0 0.0
  %355 = vmatpush1.msra.mxu0 0.0
  %356 = vmatprep.subr.mxu0 0.0
  %357 = vmatpush1.msra.mxu0 0.0
  %358 = vmatprep.subr.mxu0 0.0
  %359 = vmatpush1.msra.mxu0 0.0
  %360 = vmatprep.subr.mxu0 0.0
  %361 = vmatpush1.msra.mxu0 0.0
  %362 = vmatprep.subr.mxu0 0.0
  %363 = vmatpush1.msra.mxu0 0.0
  %364 = vmatprep.subr.mxu0 0.0
  %365 = vmatpush1.msra.mxu0 0.0
  %366 = vmatprep.subr.mxu0 0.0
  %367 = vmatpush1.msra.mxu0 0.0
  %368 = vmatprep.subr.mxu0 0.0
  %369 = vmatpush1.msra.mxu0 0.0
  %370 = vmatprep.subr.mxu0 0.0
  %371 = vmatpush1.msra.mxu0 0.0
  %372 = vmatprep.subr.mxu0 0.0
  %373 = vmatpush1.msra.mxu0 0.0
  %374 = vmatprep.subr.mxu0 0.0
  %375 = vmatpush1.msra.mxu0 0.0
  %376 = vmatprep.subr.mxu0 0.0
  %377 = vmatpush1.msra.mxu0 0.0
  %378 = vmatprep.subr.mxu0 0.0
  %379 = vmatpush1.msra.mxu0 0.0
  %380 = vmatprep.subr.mxu0 0.0
  %381 = vmatpush1.msra.mxu0 0.0
  %382 = vmatprep.subr.mxu0 0.0
  %383 = vmatpush1.msra.mxu0 0.0
  %384 = vmatprep.subr.mxu0 0.0
  %385 = vmatpush1.msra.mxu0 0.0
  %386 = vmatprep.subr.mxu0 0.0
  %387 = vmatpush1.msra.mxu0 0.0
  %388 = vmatprep.subr.mxu0 0.0
  %389 = vmatpush1.msra.mxu0 0.0
  %390 = vmatprep.subr.mxu0 0.0
  %391 = vmatpush1.msra.mxu0 0.0
  %392 = vmatprep.subr.mxu0 0.0
  %393 = vmatpush1.msra.mxu0 0.0
  %394 = vmatprep.mubr.f32.mxu0 0.0
  %395 = vmatmul.mubr.f32.gmra.mrb[0].mxu0 %v328
  %v396 = vpop.f32.mrb[0].mxu0
  %v397 = vadd.f32 %v324, %v396
  %v398 = vpop.f32.mrb[0].mxu0
  %399 = vdwg.mxu0
  %v400 = vmax.f32 %v397, 0.0
  %v401 = vld [vmem:[%s11] sm:$0xff]
  %v402 = vld [vmem:[%s11 + $0x8] sm:$0xff]
  %v403 = vld [vmem:[%s11 + $0x10] sm:$0xff]
  %v404 = vld [vmem:[%s11 + $0x18] sm:$0xff]
  %v405 = vld [vmem:[%s12] sm:$0x1]
  %v407 = vlaneseq
  %v408 = vshrl.u32 %v407, 7
  %v409 = vsub.s32 0, %v408
  %v410 = vrot.slane %v405, %v409
  %vm412 = vcmask 261120
  %v414 = vsel %vm412, %v400, 0
  %416 = vmatprep.subr.mxu0 0.0
  %417 = vmatpush1.msra.mxu0 %v401
  %418 = vmatprep.subr.mxu0 0.0
  %419 = vmatpush1.msra.mxu0 %v402
  %420 = vmatprep.subr.mxu0 0.0
  %421 = vmatpush1.msra.mxu0 %v403
  %422 = vmatprep.subr.mxu0 0.0
  %423 = vmatpush1.msra.mxu0 %v404
  %424 = vmatprep.subr.mxu0 0.0
  %425 = vmatpush1.msra.mxu0 0.0
  %426 = vmatprep.subr.mxu0 0.0
  %427 = vmatpush1.msra.mxu0 0.0
  %428 = vmatprep.subr.mxu0 0.0
  %429 = vmatpush1.msra.mxu0 0.0
  %430 = vmatprep.subr.mxu0 0.0
  %431 = vmatpush1.msra.mxu0 0.0
  %432 = vmatprep.subr.mxu0 0.0
  %433 = vmatpush1.msra.mxu0 0.0
  %434 = vmatprep.subr.mxu0 0.0
  %435 = vmatpush1.msra.mxu0 0.0
  %436 = vmatprep.subr.mxu0 0.0
  %437 = vmatpush1.msra.mxu0 0.0
  %438 = vmatprep.subr.mxu0 0.0
  %439 = vmatpush1.msra.mxu0 0.0
  %440 = vmatprep.subr.mxu0 0.0
  %441 = vmatpush1.msra.mxu0 0.0
  %442 = vmatprep.subr.mxu0 0.0
  %443 = vmatpush1.msra.mxu0 0.0
  %444 = vmatprep.subr.mxu0 0.0
  %445 = vmatpush1.msra.mxu0 0.0
  %446 = vmatprep.subr.mxu0 0.0
  %447 = vmatpush1.msra.mxu0 0.0
  %448 = vmatprep.subr.mxu0 0.0
  %449 = vmatpush1.msra.mxu0 0.0
  %450 = vmatprep.subr.mxu0 0.0
  %451 = vmatpush1.msra.mxu0 0.0
  %452 = vmatprep.subr.mxu0 0.0
  %453 = vmatpush1.msra.mxu0 0.0
  %454 = vmatprep.subr.mxu0 0.0
  %455 = vmatpush1.msra.mxu0 0.0
  %456 = vmatprep.subr.mxu0 0.0
  %457 = vmatpush1.msra.mxu0 0.0
  %458 = vmatprep.subr.mxu0 0.0
  %459 = vmatpush1.msra.mxu0 0.0
  %460 = vmatprep.subr.mxu0 0.0
  %461 = vmatpush1.msra.mxu0 0.0
  %462 = vmatprep.subr.mxu0 0.0
  %463 = vmatpush1.msra.mxu0 0.0
  %464 = vmatprep.subr.mxu0 0.0
  %465 = vmatpush1.msra.mxu0 0.0
  %466 = vmatprep.subr.mxu0 0.0
  %467 = vmatpush1.msra.mxu0 0.0
  %468 = vmatprep.subr.mxu0 0.0
  %469 = vmatpush1.msra.mxu0 0.0
  %470 = vmatprep.subr.mxu0 0.0
  %471 = vmatpush1.msra.mxu0 0.0
  %472 = vmatprep.subr.mxu0 0.0
  %473 = vmatpush1.msra.mxu0 0.0
  %474 = vmatprep.subr.mxu0 0.0
  %475 = vmatpush1.msra.mxu0 0.0
  %476 = vmatprep.subr.mxu0 0.0
  %477 = vmatpush1.msra.mxu0 0.0
  %478 = vmatprep.subr.mxu0 0.0
  %479 = vmatpush1.msra.mxu0 0.0
  %480 = vmatprep.mubr.f32.mxu0 0.0
  %481 = vmatmul.mubr.f32.gmra.mrb[0].mxu0 %v414
  %v482 = vpop.f32.mrb[0].mxu0
  %v483 = vadd.f32 %v410, %v482
  %v484 = vpop.f32.mrb[0].mxu0
  %485 = vdwg.mxu0
  %v486 = vmax.f32 %v483, 0.0
  %v487 = vld [vmem:[%s2] sm:$0xff]
  %v488 = vld [vmem:[%s3] sm:$0xff]
  %v489 = vmul.f32 %v487, %v488
  %v490 = vld [vmem:[%s13] sm:$0x1]
  %v492 = vlaneseq
  %v493 = vshrl.u32 %v492, 7
  %v494 = vsub.s32 0, %v493
  %v495 = vrot.slane %v490, %v494
  %v497 = vmul.f32 %v486, %v495
  %v498 = vsel %vm61, %v497, 0.0
  %499 = vadd.xlane.f32.xlu0 %v498
  %v500 = vpop.xlane.xlu0 %499
  %v501 = vld [vmem:[%s14] sm:$0x1]
  %v503 = vlaneseq
  %v504 = vshrl.u32 %v503, 7
  %v505 = vsub.s32 0, %v504
  %v506 = vrot.slane %v501, %v505
  %v508 = vmul.f32 %v489, %v506
  %vm509 = vcmask 392192
  %v510 = vsel %vm509, %v508, 0.0
  %511 = vadd.xlane.f32.xlu0 %v510
  %v512 = vpop.xlane.xlu0 %511
  %v513 = vadd.f32 %v500, %v512
  %v514 = vld [vmem:[#allocation2] sm:$0x1]
  %v516 = vlaneseq
  %v517 = vshrl.u32 %v516, 7
  %v518 = vsub.s32 0, %v517
  %v519 = vrot.slane %v514, %v518
  %v521 = vadd.f32 %v513, %v519
  %vm522 = vcmask 7168
  %523 = vst.msk [vmem:[%s16] sm:$0xff] %vm522, %v521
  // Predicated region
  $region66: #{ngcfmf_concat_mlp_forward.9} parent=0 // pred_check
    _
  $region67: #{ngcfmf_concat_mlp_forward.9} parent=0 // pred_check_branch
    %525 = sbr.rel (0) target = $region69
  $region68: #{ngcfmf_concat_mlp_forward.9} parent=0 // pred_region
    _
  $region69: #{ngcfmf_concat_mlp_forward.9} parent=0 // pred_fallthru
    _
  // Predicated region
  $region70: #{ngcfmf_concat_mlp_forward.9} parent=0 // pred_check
    _
  $region71: #{ngcfmf_concat_mlp_forward.9} parent=0 // pred_check_branch
    %527 = sbr.rel (0) target = $region73
  $region72: #{ngcfmf_concat_mlp_forward.9} parent=0 // pred_region
    _
  $region73: #{ngcfmf_concat_mlp_forward.9} parent=0 // pred_fallthru
    _

// kernel: ngcfmf_concat_mlp_forward.5
$region0: #{ngcfmf_concat_mlp_forward.5}
  #allocation0 [shape = 'u32[]', space=smem, size = 0x4, offset = 0x4, fixed_abs, tag = 'smem constant byte address 0x4 - core index']
  #allocation1 [shape = 'u32[144,128]{1,0:T(1,128)}', space=vmem, size = 0x12000, scoped, tag = 'internal scratch']
  #allocation2 [shape = 'f32[256,16]{1,0:T(8,128)}', space=vmem, size = 0x20000, scoped, tag = 'scratch operand']
  %s0 = inlined_call_operand.vmem [shape: bf16[512,512], index: 0, kind: input, shape index: {}]
  %s1 = inlined_call_operand.vmem [shape: f32[512,16], index: 1, kind: input, shape index: {}]
  %s2 = inlined_call_operand.vmem [shape: f32[512,16], index: 2, kind: output, shape index: {}]
  %s3 = sld [smem:[#allocation0]]
  $region87: #{ngcfmf_concat_mlp_forward.5} parent=0
    _
  %s5 = ssub.s32 1, %s3
  %s6 = scalar_select 0, %s5, %s3
  $region1: #{ngcfmf_concat_mlp_forward.5} parent=0
    #allocation3 [shape = 'u8[262144]{0}', space=vmem, size = 0x40000, scoped, tag = 'input window, operand 0']
    loop: start=0, step=1, limit=6
    $region2: #{ngcfmf_concat_mlp_forward.5} parent=1 // loop_pre_header
      _
    $region3: #{ngcfmf_concat_mlp_forward.5} parent=1 // loop_header
      %s8 = sphi 0, %s12
      %p9 = scmp.ge.s32.totalorder %s8, 6
      %s15 = sphi 0, %s27
      %s16 = sphi 0, %s23
      %s17 = sphi 0, %s15
      %s18 = sphi 0, %s16
      %s19 = sphi 0, %s17
      %s20 = sphi 0, %s18
      %s32 = sphi 0, %s34
      %s35 = sphi 0, %s32
      %s36 = sphi 0, %s35
      %s52 = sphi 0, %s36
      %s58 = sphi 0, %s60
      %s61 = sphi 0, %s58
      %s62 = sphi 0, %s61
      %s78 = sphi 0, %s62
      %s84 = sphi 0, %s86
      %s87 = sphi 0, %s84
      %s88 = sphi 0, %s87
      %s104 = sphi 0, %s88
    $region4: #{ngcfmf_concat_mlp_forward.5} parent=1 // loop_header_branch
      %11 = sbr.rel (%p9) target = $region8
    $region5: #{ngcfmf_concat_mlp_forward.5} parent=1 // loop_body
      %s13 = ssub.s32 %s8, 1
      %s14 = ssub.s32 %s8, 2
      %s21 = sadd.s32 1, %s16
      %p22 = scmp.ge.s32.totalorder %s21, 2
      %s23 = scalar_select %p22, 0, %s21
      %s24 = sadd.s32 1, %s15
      %s25 = scalar_select %p22, %s24, %s15
      %p26 = scmp.ge.s32.totalorder %s25, 2
      %s27 = scalar_select %p26, 0, %s25
      %s28 = ssub.s32 %s15, %s27
      %s29 = ssub.s32 %s16, %s23
      %s30 = sor.u32 %s28, %s29
      %p31 = scmp.eq.s32.totalorder %s30, 0
      %s33 = sadd.s32 %s32, 1
      %s34 = scalar_select %p31, %s32, %s33
      %p37 = pneg %p31
      %p38 = scmp.eq.s32.totalorder %s8, 3
      %p39 = por %p37, %p38
      %p40 = scmp.ne.s32.totalorder %s32, %s35
      %p41 = scmp.eq.s32.totalorder %s8, 0
      %p42 = por %p40, %p41
      %p43 = scmp.ne.s32.totalorder %s32, %s35
      %p44 = scmp.eq.s32.totalorder %s13, 3
      %p45 = por %p43, %p44
      %p46 = scmp.ne.s32.totalorder %s35, %s36
      %p47 = scmp.eq.s32.totalorder %s13, 0
      %p48 = por %p46, %p47
      %p49 = scmp.ne.s32.totalorder %s35, %s36
      %p50 = scmp.eq.s32.totalorder %s14, 3
      %p51 = por %p49, %p50
      %p53 = scmp.ne.s32.totalorder %s36, %s52
      %p54 = scmp.eq.s32.totalorder %s14, 0
      %p55 = por %p53, %p54
      %s56 = ssub.s32 %s16, %s23
      %p57 = scmp.eq.s32.totalorder %s56, 0
      %s59 = sadd.s32 %s58, 1
      %s60 = scalar_select %p57, %s58, %s59
      %p63 = pneg %p57
      %p64 = scmp.eq.s32.totalorder %s8, 3
      %p65 = por %p63, %p64
      %p66 = scmp.ne.s32.totalorder %s58, %s61
      %p67 = scmp.eq.s32.totalorder %s8, 0
      %p68 = por %p66, %p67
      %p69 = scmp.ne.s32.totalorder %s58, %s61
      %p70 = scmp.eq.s32.totalorder %s13, 3
      %p71 = por %p69, %p70
      %p72 = scmp.ne.s32.totalorder %s61, %s62
      %p73 = scmp.eq.s32.totalorder %s13, 0
      %p74 = por %p72, %p73
      %p75 = scmp.ne.s32.totalorder %s61, %s62
      %p76 = scmp.eq.s32.totalorder %s14, 3
      %p77 = por %p75, %p76
      %p79 = scmp.ne.s32.totalorder %s62, %s78
      %p80 = scmp.eq.s32.totalorder %s14, 0
      %p81 = por %p79, %p80
      %s82 = ssub.s32 %s15, %s27
      %p83 = scmp.eq.s32.totalorder %s82, 0
      %s85 = sadd.s32 %s84, 1
      %s86 = scalar_select %p83, %s84, %s85
      %p89 = pneg %p83
      %p90 = scmp.eq.s32.totalorder %s8, 3
      %p91 = por %p89, %p90
      %p92 = scmp.ne.s32.totalorder %s84, %s87
      %p93 = scmp.eq.s32.totalorder %s8, 0
      %p94 = por %p92, %p93
      %p95 = scmp.ne.s32.totalorder %s84, %s87
      %p96 = scmp.eq.s32.totalorder %s13, 3
      %p97 = por %p95, %p96
      %p98 = scmp.ne.s32.totalorder %s87, %s88
      %p99 = scmp.eq.s32.totalorder %s13, 0
      %p100 = por %p98, %p99
      %p101 = scmp.ne.s32.totalorder %s87, %s88
      %p102 = scmp.eq.s32.totalorder %s14, 3
      %p103 = por %p101, %p102
      %p105 = scmp.ne.s32.totalorder %s88, %s104
      %p106 = scmp.eq.s32.totalorder %s14, 0
      %p107 = por %p105, %p106
      %p108 = scmp.le.s32.totalorder 1, %s8
      %p109 = scmp.lt.s32.totalorder %s8, 5
      %p110 = pnand %p108, %p109
      %p111 = pneg %p110
      // Predicated region
      $region9: #{ngcfmf_concat_mlp_forward.5} parent=5 // pred_check
        _
      $region10: #{ngcfmf_concat_mlp_forward.5} parent=5 // pred_check_branch
        %113 = sbr.rel (%p110) target = $region12
      $region11: #{ngcfmf_concat_mlp_forward.5} parent=5 // pred_region
        %s114 = ssub.s32 %s8, 1
      $region12: #{ngcfmf_concat_mlp_forward.5} parent=5 // pred_fallthru
        _
      %p115 = scmp.lt.s32.totalorder %s8, 4
      // Predicated region
      $region13: #{ngcfmf_concat_mlp_forward.5} parent=5 // pred_check
        %p116 = pneg %p115
      $region14: #{ngcfmf_concat_mlp_forward.5} parent=5 // pred_check_branch
        %118 = sbr.rel (%p116) target = $region16
      $region15: #{ngcfmf_concat_mlp_forward.5} parent=5 // pred_region
        // Predicated region
        $region17: #{ngcfmf_concat_mlp_forward.5} parent=15 // pred_check
          %p119 = pneg %p42
        $region18: #{ngcfmf_concat_mlp_forward.5} parent=15 // pred_check_branch
          %121 = sbr.rel (%p119) target = $region20
        $region19: #{ngcfmf_concat_mlp_forward.5} parent=15 // pred_region
          %s122 = sand.u32 %s32, 1
          %s123 = sand.u32 %s32, 1
          %s124 = smul.addr %s123, 256
          %s125 = scalar_lea.vmem [#allocation3], %s124
          %s126 = smul.u32 32, %s15
          %s127 = smul.u32 2, %s16
          %s128 = smul.addr %s126, 4
          %s129 = sadd.s32 %s127, %s128
          %s130 = smul.addr %s129, 4
          %s131 = scalar_lea.vmem %s0, %s130
          // Predicated region
          $region21: #{ngcfmf_concat_mlp_forward.5} parent=19 // pred_check
            _
          $region22: #{ngcfmf_concat_mlp_forward.5} parent=19 // pred_check_branch
            %133 = sbr.rel (0) target = $region24
          $region23: #{ngcfmf_concat_mlp_forward.5} parent=19 // pred_region
            // Predicated region
            $region25: #{ngcfmf_concat_mlp_forward.5} parent=23 // pred_check
              _
            $region26: #{ngcfmf_concat_mlp_forward.5} parent=23 // pred_check_branch
              %135 = sbr.rel (0) target = $region28
            $region27: #{ngcfmf_concat_mlp_forward.5} parent=23 // pred_region
              // Predicated region
              $region40: #{ngcfmf_concat_mlp_forward.5} parent=27 // pred_check
                _
              $region41: #{ngcfmf_concat_mlp_forward.5} parent=27 // pred_check_branch
                %212 = sbr.rel (0) target = $region43
              $region42: #{ngcfmf_concat_mlp_forward.5} parent=27 // pred_region
                loop: start=0, step=1, limit=1
                $region44: #{ngcfmf_concat_mlp_forward.5} parent=42 // loop_pre_header
                  _
                $region45: #{ngcfmf_concat_mlp_forward.5} parent=42 // loop_header
                  %s214 = sphi 0, %s218
                  %p215 = scmp.ge.s32.totalorder %s214, 1
                  %s219 = sphi %s131, %s131
                  %s220 = sphi %s125, %s125
                $region46: #{ngcfmf_concat_mlp_forward.5} parent=42 // loop_header_branch
                  %217 = sbr.rel (%p215) target = $region50
                $region47: #{ngcfmf_concat_mlp_forward.5} parent=42 // loop_body
                  %v221 = vld [vmem:[%s219] sm:$0xff]
                  %222 = vst [vmem:[%s220] sm:$0xff] %v221
                  %v223 = vld [vmem:[%s219 + $0x10] sm:$0xff]
                  %224 = vst [vmem:[%s220 + $0x8] sm:$0xff] %v223
                  %v225 = vld [vmem:[%s219 + $0x20] sm:$0xff]
                  %226 = vst [vmem:[%s220 + $0x10] sm:$0xff] %v225
                  %v227 = vld [vmem:[%s219 + $0x30] sm:$0xff]
                  %228 = vst [vmem:[%s220 + $0x18] sm:$0xff] %v227
                  %v229 = vld [vmem:[%s219 + $0x40] sm:$0xff]
                  %230 = vst [vmem:[%s220 + $0x20] sm:$0xff] %v229
                  %v231 = vld [vmem:[%s219 + $0x50] sm:$0xff]
                  %232 = vst [vmem:[%s220 + $0x28] sm:$0xff] %v231
                  %v233 = vld [vmem:[%s219 + $0x60] sm:$0xff]
                  %234 = vst [vmem:[%s220 + $0x30] sm:$0xff] %v233
                  %v235 = vld [vmem:[%s219 + $0x70] sm:$0xff]
                  %236 = vst [vmem:[%s220 + $0x38] sm:$0xff] %v235
                  %v237 = vld [vmem:[%s219 + $0x80] sm:$0xff]
                  %238 = vst [vmem:[%s220 + $0x40] sm:$0xff] %v237
                  %v239 = vld [vmem:[%s219 + $0x90] sm:$0xff]
                  %240 = vst [vmem:[%s220 + $0x48] sm:$0xff] %v239
                  %v241 = vld [vmem:[%s219 + $0xa0] sm:$0xff]
                  %242 = vst [vmem:[%s220 + $0x50] sm:$0xff] %v241
                  %v243 = vld [vmem:[%s219 + $0xb0] sm:$0xff]
                  %244 = vst [vmem:[%s220 + $0x58] sm:$0xff] %v243
                  %v245 = vld [vmem:[%s219 + $0xc0] sm:$0xff]
                  %246 = vst [vmem:[%s220 + $0x60] sm:$0xff] %v245
                  %v247 = vld [vmem:[%s219 + $0xd0] sm:$0xff]
                  %248 = vst [vmem:[%s220 + $0x68] sm:$0xff] %v247
                  %v249 = vld [vmem:[%s219 + $0xe0] sm:$0xff]
                  %250 = vst [vmem:[%s220 + $0x70] sm:$0xff] %v249
                  %v251 = vld [vmem:[%s219 + $0xf0] sm:$0xff]
                  %252 = vst [vmem:[%s220 + $0x78] sm:$0xff] %v251
                  %v253 = vld [vmem:[%s219 + $0x100] sm:$0xff]
                  %254 = vst [vmem:[%s220 + $0x80] sm:$0xff] %v253
                  %v255 = vld [vmem:[%s219 + $0x110] sm:$0xff]
                  %256 = vst [vmem:[%s220 + $0x88] sm:$0xff] %v255
                  %v257 = vld [vmem:[%s219 + $0x120] sm:$0xff]
                  %258 = vst [vmem:[%s220 + $0x90] sm:$0xff] %v257
                  %v259 = vld [vmem:[%s219 + $0x130] sm:$0xff]
                  %260 = vst [vmem:[%s220 + $0x98] sm:$0xff] %v259
                  %v261 = vld [vmem:[%s219 + $0x140] sm:$0xff]
                  %262 = vst [vmem:[%s220 + $0xa0] sm:$0xff] %v261
                  %v263 = vld [vmem:[%s219 + $0x150] sm:$0xff]
                  %264 = vst [vmem:[%s220 + $0xa8] sm:$0xff] %v263
                  %v265 = vld [vmem:[%s219 + $0x160] sm:$0xff]
                  %266 = vst [vmem:[%s220 + $0xb0] sm:$0xff] %v265
                  %v267 = vld [vmem:[%s219 + $0x170] sm:$0xff]
                  %268 = vst [vmem:[%s220 + $0xb8] sm:$0xff] %v267
                  %v269 = vld [vmem:[%s219 + $0x180] sm:$0xff]
                  %270 = vst [vmem:[%s220 + $0xc0] sm:$0xff] %v269
                  %v271 = vld [vmem:[%s219 + $0x190] sm:$0xff]
                  %272 = vst [vmem:[%s220 + $0xc8] sm:$0xff] %v271
                  %v273 = vld [vmem:[%s219 + $0x1a0] sm:$0xff]
                  %274 = vst [vmem:[%s220 + $0xd0] sm:$0xff] %v273
                  %v275 = vld [vmem:[%s219 + $0x1b0] sm:$0xff]
                  %276 = vst [vmem:[%s220 + $0xd8] sm:$0xff] %v275
                  %v277 = vld [vmem:[%s219 + $0x1c0] sm:$0xff]
                  %278 = vst [vmem:[%s220 + $0xe0] sm:$0xff] %v277
                  %v279 = vld [vmem:[%s219 + $0x1d0] sm:$0xff]
                  %280 = vst [vmem:[%s220 + $0xe8] sm:$0xff] %v279
                  %v281 = vld [vmem:[%s219 + $0x1e0] sm:$0xff]
                  %282 = vst [vmem:[%s220 + $0xf0] sm:$0xff] %v281
                  %v283 = vld [vmem:[%s219 + $0x1f0] sm:$0xff]
                  %284 = vst [vmem:[%s220 + $0xf8] sm:$0xff] %v283
                $region48: #{ngcfmf_concat_mlp_forward.5} parent=42 // loop_footer
                  %s218 = sadd.s32 1, %s214
                $region49: #{ngcfmf_concat_mlp_forward.5} parent=42 // loop_footer_branch
                  %213 = sbr.rel target = $region45
                $region50: #{ngcfmf_concat_mlp_forward.5} parent=42 // loop_exit
                  _
              $region43: #{ngcfmf_concat_mlp_forward.5} parent=27 // pred_fallthru
                _
              // Predicated region
              $region51: #{ngcfmf_concat_mlp_forward.5} parent=27 // pred_check
                _
              $region52: #{ngcfmf_concat_mlp_forward.5} parent=27 // pred_check_branch
                %286 = sbr.rel target = $region54
              $region53: #{ngcfmf_concat_mlp_forward.5} parent=27 // pred_region
                _
              $region54: #{ngcfmf_concat_mlp_forward.5} parent=27 // pred_fallthru
                _
            $region28: #{ngcfmf_concat_mlp_forward.5} parent=23 // pred_fallthru
              _
            // Predicated region
            $region29: #{ngcfmf_concat_mlp_forward.5} parent=23 // pred_check
              _
            $region30: #{ngcfmf_concat_mlp_forward.5} parent=23 // pred_check_branch
              %137 = sbr.rel target = $region32
            $region31: #{ngcfmf_concat_mlp_forward.5} parent=23 // pred_region
              loop: start=0, step=1, limit=1
              $region33: #{ngcfmf_concat_mlp_forward.5} parent=31 // loop_pre_header
                _
              $region34: #{ngcfmf_concat_mlp_forward.5} parent=31 // loop_header
                %s140 = sphi 0, %s144
                %p141 = scmp.ge.s32.totalorder %s140, 1
                %s145 = sphi %s131, %s131
                %s146 = sphi %s125, %s125
              $region35: #{ngcfmf_concat_mlp_forward.5} parent=31 // loop_header_branch
                %143 = sbr.rel (%p141) target = $region39
              $region36: #{ngcfmf_concat_mlp_forward.5} parent=31 // loop_body
                %v147 = vld [vmem:[%s145] sm:$0xff]
                %148 = vst [vmem:[%s146] sm:$0xff] %v147
                %v149 = vld [vmem:[%s145 + $0x10] sm:$0xff]
                %150 = vst [vmem:[%s146 + $0x8] sm:$0xff] %v149
                %v151 = vld [vmem:[%s145 + $0x20] sm:$0xff]
                %152 = vst [vmem:[%s146 + $0x10] sm:$0xff] %v151
                %v153 = vld [vmem:[%s145 + $0x30] sm:$0xff]
                %154 = vst [vmem:[%s146 + $0x18] sm:$0xff] %v153
                %v155 = vld [vmem:[%s145 + $0x40] sm:$0xff]
                %156 = vst [vmem:[%s146 + $0x20] sm:$0xff] %v155
                %v157 = vld [vmem:[%s145 + $0x50] sm:$0xff]
                %158 = vst [vmem:[%s146 + $0x28] sm:$0xff] %v157
                %v159 = vld [vmem:[%s145 + $0x60] sm:$0xff]
                %160 = vst [vmem:[%s146 + $0x30] sm:$0xff] %v159
                %v161 = vld [vmem:[%s145 + $0x70] sm:$0xff]
                %162 = vst [vmem:[%s146 + $0x38] sm:$0xff] %v161
                %v163 = vld [vmem:[%s145 + $0x80] sm:$0xff]
                %164 = vst [vmem:[%s146 + $0x40] sm:$0xff] %v163
                %v165 = vld [vmem:[%s145 + $0x90] sm:$0xff]
                %166 = vst [vmem:[%s146 + $0x48] sm:$0xff] %v165
                %v167 = vld [vmem:[%s145 + $0xa0] sm:$0xff]
                %168 = vst [vmem:[%s146 + $0x50] sm:$0xff] %v167
                %v169 = vld [vmem:[%s145 + $0xb0] sm:$0xff]
                %170 = vst [vmem:[%s146 + $0x58] sm:$0xff] %v169
                %v171 = vld [vmem:[%s145 + $0xc0] sm:$0xff]
                %172 = vst [vmem:[%s146 + $0x60] sm:$0xff] %v171
                %v173 = vld [vmem:[%s145 + $0xd0] sm:$0xff]
                %174 = vst [vmem:[%s146 + $0x68] sm:$0xff] %v173
                %v175 = vld [vmem:[%s145 + $0xe0] sm:$0xff]
                %176 = vst [vmem:[%s146 + $0x70] sm:$0xff] %v175
                %v177 = vld [vmem:[%s145 + $0xf0] sm:$0xff]
                %178 = vst [vmem:[%s146 + $0x78] sm:$0xff] %v177
                %v179 = vld [vmem:[%s145 + $0x100] sm:$0xff]
                %180 = vst [vmem:[%s146 + $0x80] sm:$0xff] %v179
                %v181 = vld [vmem:[%s145 + $0x110] sm:$0xff]
                %182 = vst [vmem:[%s146 + $0x88] sm:$0xff] %v181
                %v183 = vld [vmem:[%s145 + $0x120] sm:$0xff]
                %184 = vst [vmem:[%s146 + $0x90] sm:$0xff] %v183
                %v185 = vld [vmem:[%s145 + $0x130] sm:$0xff]
                %186 = vst [vmem:[%s146 + $0x98] sm:$0xff] %v185
                %v187 = vld [vmem:[%s145 + $0x140] sm:$0xff]
                %188 = vst [vmem:[%s146 + $0xa0] sm:$0xff] %v187
                %v189 = vld [vmem:[%s145 + $0x150] sm:$0xff]
                %190 = vst [vmem:[%s146 + $0xa8] sm:$0xff] %v189
                %v191 = vld [vmem:[%s145 + $0x160] sm:$0xff]
                %192 = vst [vmem:[%s146 + $0xb0] sm:$0xff] %v191
                %v193 = vld [vmem:[%s145 + $0x170] sm:$0xff]
                %194 = vst [vmem:[%s146 + $0xb8] sm:$0xff] %v193
                %v195 = vld [vmem:[%s145 + $0x180] sm:$0xff]
                %196 = vst [vmem:[%s146 + $0xc0] sm:$0xff] %v195
                %v197 = vld [vmem:[%s145 + $0x190] sm:$0xff]
                %198 = vst [vmem:[%s146 + $0xc8] sm:$0xff] %v197
                %v199 = vld [vmem:[%s145 + $0x1a0] sm:$0xff]
                %200 = vst [vmem:[%s146 + $0xd0] sm:$0xff] %v199
                %v201 = vld [vmem:[%s145 + $0x1b0] sm:$0xff]
                %202 = vst [vmem:[%s146 + $0xd8] sm:$0xff] %v201
                %v203 = vld [vmem:[%s145 + $0x1c0] sm:$0xff]
                %204 = vst [vmem:[%s146 + $0xe0] sm:$0xff] %v203
                %v205 = vld [vmem:[%s145 + $0x1d0] sm:$0xff]
                %206 = vst [vmem:[%s146 + $0xe8] sm:$0xff] %v205
                %v207 = vld [vmem:[%s145 + $0x1e0] sm:$0xff]
                %208 = vst [vmem:[%s146 + $0xf0] sm:$0xff] %v207
                %v209 = vld [vmem:[%s145 + $0x1f0] sm:$0xff]
                %210 = vst [vmem:[%s146 + $0xf8] sm:$0xff] %v209
              $region37: #{ngcfmf_concat_mlp_forward.5} parent=31 // loop_footer
                %s144 = sadd.s32 1, %s140
              $region38: #{ngcfmf_concat_mlp_forward.5} parent=31 // loop_footer_branch
                %139 = sbr.rel target = $region34
              $region39: #{ngcfmf_concat_mlp_forward.5} parent=31 // loop_exit
                _
            $region32: #{ngcfmf_concat_mlp_forward.5} parent=23 // pred_fallthru
              _
          $region24: #{ngcfmf_concat_mlp_forward.5} parent=19 // pred_fallthru
            _
          %287 = vnop
        $region20: #{ngcfmf_concat_mlp_forward.5} parent=15 // pred_fallthru
          _
        // Predicated region
        $region55: #{ngcfmf_concat_mlp_forward.5} parent=15 // pred_check
          %p288 = pneg %p68
        $region56: #{ngcfmf_concat_mlp_forward.5} parent=15 // pred_check_branch
          %290 = sbr.rel (%p288) target = $region58
        $region57: #{ngcfmf_concat_mlp_forward.5} parent=15 // pred_region
          %s291 = smul.u32 32, %s16
          %p292 = scmp.lt.s32.totalorder %s291, 63
          %s293 = scalar_select %p292, %s291, 63
          %s294 = smul.addr %s293, 8
          %s295 = scalar_lea.vmem %s1, %s294
          %s296 = smul.u32 32, %s16
        $region58: #{ngcfmf_concat_mlp_forward.5} parent=15 // pred_fallthru
          _
      $region16: #{ngcfmf_concat_mlp_forward.5} parent=5 // pred_fallthru
        _
      %p297 = scmp.le.s32.totalorder 1, %s8
      %p298 = scmp.lt.s32.totalorder %s8, 5
      %p299 = pnand %p297, %p298
      %p300 = pneg %p299
      // Predicated region
      $region59: #{ngcfmf_concat_mlp_forward.5} parent=5 // pred_check
        _
      $region60: #{ngcfmf_concat_mlp_forward.5} parent=5 // pred_check_branch
        %302 = sbr.rel (%p299) target = $region62
      $region61: #{ngcfmf_concat_mlp_forward.5} parent=5 // pred_region
        %s303 = ssub.s32 %s8, 1
        %s304 = sand.u32 %s35, 1
        %s305 = sand.u32 %s35, 1
        %s306 = smul.addr %s305, 256
        %s307 = scalar_lea.vmem [#allocation3], %s306
        // Predicated region
        $region63: #{ngcfmf_concat_mlp_forward.5} parent=61 // pred_check
          %p308 = pneg %p48
        $region64: #{ngcfmf_concat_mlp_forward.5} parent=61 // pred_check_branch
          %310 = sbr.rel (%p308) target = $region66
        $region65: #{ngcfmf_concat_mlp_forward.5} parent=61 // pred_region
          _
        $region66: #{ngcfmf_concat_mlp_forward.5} parent=61 // pred_fallthru
          _
        %s311 = sand.u32 %s35, 1
        %s312 = sand.u32 %s35, 1
        %s313 = smul.addr %s312, 256
        %s314 = scalar_lea.vmem [#allocation3], %s313
        %p315 = pneg %p48
        %p316 = pneg %p45
        %s317 = smul.u32 32, %s18
        %p318 = scmp.lt.s32.totalorder %s317, 63
        %s319 = scalar_select %p318, %s317, 63
        %s320 = smul.addr %s319, 8
        %s321 = scalar_lea.vmem %s1, %s320
        %p322 = pneg %p74
        %p323 = pneg %p71
        %p324 = pneg %p100
        %p325 = pneg %p97
        %s326 = smul.u32 32, %s17
        %p327 = scmp.lt.s32.totalorder %s326, 63
        %s328 = scalar_select %p327, %s326, 63
        %s329 = smul.addr %s328, 8
        %s330 = scalar_lea.vmem %s2, %s329
        %s331 = smul.u32 32, %s17
        %s332 = smul.u32 2, %s18
        %s333 = smul.u32 32, %s18
        %p334 = scmp.lt.s32.totalorder %s333, 63
        %s335 = scalar_select %p334, %s333, 63
        %s336 = smul.addr %s335, 8
        %s337 = scalar_lea.vmem %s1, %s336
        %s338 = smul.u32 32, %s18
        %s339 = smul.u32 32, %s17
        %p340 = scmp.lt.s32.totalorder %s339, 63
        %s341 = scalar_select %p340, %s339, 63
        %s342 = smul.addr %s341, 8
        %s343 = scalar_lea.vmem %s2, %s342
        %s344 = smul.u32 32, %s17
        %p346 = scmp.eq.s32.totalorder %s18, 0
        // Predicated region
        $region67: #{ngcfmf_concat_mlp_forward.5} parent=61 // pred_check
          %p347 = pneg %p346
        $region68: #{ngcfmf_concat_mlp_forward.5} parent=61 // pred_check_branch
          %349 = sbr.rel (%p347) target = $region70
        $region69: #{ngcfmf_concat_mlp_forward.5} parent=61 // pred_region
          %vm350 = vcmask 130048
          %351 = vst.msk [vmem:[#allocation2] sm:$0xff] %vm350, 0.0
          %352 = vst.msk [vmem:[#allocation2 + $0x8] sm:$0xff] %vm350, 0.0
          %353 = vst.msk [vmem:[#allocation2 + $0x10] sm:$0xff] %vm350, 0.0
          %354 = vst.msk [vmem:[#allocation2 + $0x18] sm:$0xff] %vm350, 0.0
          %355 = vst.msk [vmem:[#allocation2 + $0x20] sm:$0xff] %vm350, 0.0
          %356 = vst.msk [vmem:[#allocation2 + $0x28] sm:$0xff] %vm350, 0.0
          %357 = vst.msk [vmem:[#allocation2 + $0x30] sm:$0xff] %vm350, 0.0
          %358 = vst.msk [vmem:[#allocation2 + $0x38] sm:$0xff] %vm350, 0.0
          %359 = vst.msk [vmem:[#allocation2 + $0x40] sm:$0xff] %vm350, 0.0
          %360 = vst.msk [vmem:[#allocation2 + $0x48] sm:$0xff] %vm350, 0.0
          %361 = vst.msk [vmem:[#allocation2 + $0x50] sm:$0xff] %vm350, 0.0
          %362 = vst.msk [vmem:[#allocation2 + $0x58] sm:$0xff] %vm350, 0.0
          %363 = vst.msk [vmem:[#allocation2 + $0x60] sm:$0xff] %vm350, 0.0
          %364 = vst.msk [vmem:[#allocation2 + $0x68] sm:$0xff] %vm350, 0.0
          %365 = vst.msk [vmem:[#allocation2 + $0x70] sm:$0xff] %vm350, 0.0
          %366 = vst.msk [vmem:[#allocation2 + $0x78] sm:$0xff] %vm350, 0.0
          %367 = vst.msk [vmem:[#allocation2 + $0x80] sm:$0xff] %vm350, 0.0
          %368 = vst.msk [vmem:[#allocation2 + $0x88] sm:$0xff] %vm350, 0.0
          %369 = vst.msk [vmem:[#allocation2 + $0x90] sm:$0xff] %vm350, 0.0
          %370 = vst.msk [vmem:[#allocation2 + $0x98] sm:$0xff] %vm350, 0.0
          %371 = vst.msk [vmem:[#allocation2 + $0xa0] sm:$0xff] %vm350, 0.0
          %372 = vst.msk [vmem:[#allocation2 + $0xa8] sm:$0xff] %vm350, 0.0
          %373 = vst.msk [vmem:[#allocation2 + $0xb0] sm:$0xff] %vm350, 0.0
          %374 = vst.msk [vmem:[#allocation2 + $0xb8] sm:$0xff] %vm350, 0.0
          %375 = vst.msk [vmem:[#allocation2 + $0xc0] sm:$0xff] %vm350, 0.0
          %376 = vst.msk [vmem:[#allocation2 + $0xc8] sm:$0xff] %vm350, 0.0
          %377 = vst.msk [vmem:[#allocation2 + $0xd0] sm:$0xff] %vm350, 0.0
          %378 = vst.msk [vmem:[#allocation2 + $0xd8] sm:$0xff] %vm350, 0.0
          %379 = vst.msk [vmem:[#allocation2 + $0xe0] sm:$0xff] %vm350, 0.0
          %380 = vst.msk [vmem:[#allocation2 + $0xe8] sm:$0xff] %vm350, 0.0
          %381 = vst.msk [vmem:[#allocation2 + $0xf0] sm:$0xff] %vm350, 0.0
          %382 = vst.msk [vmem:[#allocation2 + $0xf8] sm:$0xff] %vm350, 0.0
        $region70: #{ngcfmf_concat_mlp_forward.5} parent=61 // pred_fallthru
          _
        %v383 = vld [vmem:[%s337] sm:$0xff]
        %v384 = vld [vmem:[%s337 + $0x8] sm:$0xff]
        %v385 = vld [vmem:[%s337 + $0x10] sm:$0xff]
        %v386 = vld [vmem:[%s337 + $0x18] sm:$0xff]
        %v387 = vld [vmem:[%s337 + $0x20] sm:$0xff]
        %v388 = vld [vmem:[%s337 + $0x28] sm:$0xff]
        %v389 = vld [vmem:[%s337 + $0x30] sm:$0xff]
        %v390 = vld [vmem:[%s337 + $0x38] sm:$0xff]
        %v391 = vld [vmem:[%s337 + $0x40] sm:$0xff]
        %v392 = vld [vmem:[%s337 + $0x48] sm:$0xff]
        %v393 = vld [vmem:[%s337 + $0x50] sm:$0xff]
        %v394 = vld [vmem:[%s337 + $0x58] sm:$0xff]
        %v395 = vld [vmem:[%s337 + $0x60] sm:$0xff]
        %v396 = vld [vmem:[%s337 + $0x68] sm:$0xff]
        %v397 = vld [vmem:[%s337 + $0x70] sm:$0xff]
        %v398 = vld [vmem:[%s337 + $0x78] sm:$0xff]
        %v399 = vld [vmem:[%s337 + $0x80] sm:$0xff]
        %v400 = vld [vmem:[%s337 + $0x88] sm:$0xff]
        %v401 = vld [vmem:[%s337 + $0x90] sm:$0xff]
        %v402 = vld [vmem:[%s337 + $0x98] sm:$0xff]
        %v403 = vld [vmem:[%s337 + $0xa0] sm:$0xff]
        %v404 = vld [vmem:[%s337 + $0xa8] sm:$0xff]
        %v405 = vld [vmem:[%s337 + $0xb0] sm:$0xff]
        %v406 = vld [vmem:[%s337 + $0xb8] sm:$0xff]
        %v407 = vld [vmem:[%s337 + $0xc0] sm:$0xff]
        %v408 = vld [vmem:[%s337 + $0xc8] sm:$0xff]
        %v409 = vld [vmem:[%s337 + $0xd0] sm:$0xff]
        %v410 = vld [vmem:[%s337 + $0xd8] sm:$0xff]
        %v411 = vld [vmem:[%s337 + $0xe0] sm:$0xff]
        %v412 = vld [vmem:[%s337 + $0xe8] sm:$0xff]
        %v413 = vld [vmem:[%s337 + $0xf0] sm:$0xff]
        %v414 = vld [vmem:[%s337 + $0xf8] sm:$0xff]
        %v415 = vmul.f32 %v383, %v383
        %v416 = vmul.f32 %v384, %v384
        %v417 = vmul.f32 %v385, %v385
        %v418 = vmul.f32 %v386, %v386
        %v419 = vmul.f32 %v387, %v387
        %v420 = vmul.f32 %v388, %v388
        %v421 = vmul.f32 %v389, %v389
        %v422 = vmul.f32 %v390, %v390
        %v423 = vmul.f32 %v391, %v391
        %v424 = vmul.f32 %v392, %v392
        %v425 = vmul.f32 %v393, %v393
        %v426 = vmul.f32 %v394, %v394
        %v427 = vmul.f32 %v395, %v395
        %v428 = vmul.f32 %v396, %v396
        %v429 = vmul.f32 %v397, %v397
        %v430 = vmul.f32 %v398, %v398
        %v431 = vmul.f32 %v399, %v399
        %v432 = vmul.f32 %v400, %v400
        %v433 = vmul.f32 %v401, %v401
        %v434 = vmul.f32 %v402, %v402
        %v435 = vmul.f32 %v403, %v403
        %v436 = vmul.f32 %v404, %v404
        %v437 = vmul.f32 %v405, %v405
        %v438 = vmul.f32 %v406, %v406
        %v439 = vmul.f32 %v407, %v407
        %v440 = vmul.f32 %v408, %v408
        %v441 = vmul.f32 %v409, %v409
        %v442 = vmul.f32 %v410, %v410
        %v443 = vmul.f32 %v411, %v411
        %v444 = vmul.f32 %v412, %v412
        %v445 = vmul.f32 %v413, %v413
        %v446 = vmul.f32 %v414, %v414
        %v447 = vpack.c.bf16 %v416, %v415
        %v448 = vpack.c.bf16 %v418, %v417
        %v449 = vpack.c.bf16 %v420, %v419
        %v450 = vpack.c.bf16 %v422, %v421
        %v451 = vpack.c.bf16 %v424, %v423
        %v452 = vpack.c.bf16 %v426, %v425
        %v453 = vpack.c.bf16 %v428, %v427
        %v454 = vpack.c.bf16 %v430, %v429
        %v455 = vpack.c.bf16 %v432, %v431
        %v456 = vpack.c.bf16 %v434, %v433
        %v457 = vpack.c.bf16 %v436, %v435
        %v458 = vpack.c.bf16 %v438, %v437
        %v459 = vpack.c.bf16 %v440, %v439
        %v460 = vpack.c.bf16 %v442, %v441
        %v461 = vpack.c.bf16 %v444, %v443
        %v462 = vpack.c.bf16 %v446, %v445
        %v463 = vld [vmem:[#allocation2] sm:$0xff]
        %v464 = vld [vmem:[#allocation2 + $0x8] sm:$0xff]
        %v465 = vld [vmem:[#allocation2 + $0x10] sm:$0xff]
        %v466 = vld [vmem:[#allocation2 + $0x18] sm:$0xff]
        %v467 = vld [vmem:[#allocation2 + $0x20] sm:$0xff]
        %v468 = vld [vmem:[#allocation2 + $0x28] sm:$0xff]
        %v469 = vld [vmem:[#allocation2 + $0x30] sm:$0xff]
        %v470 = vld [vmem:[#allocation2 + $0x38] sm:$0xff]
        %v471 = vld [vmem:[#allocation2 + $0x40] sm:$0xff]
        %v472 = vld [vmem:[#allocation2 + $0x48] sm:$0xff]
        %v473 = vld [vmem:[#allocation2 + $0x50] sm:$0xff]
        %v474 = vld [vmem:[#allocation2 + $0x58] sm:$0xff]
        %v475 = vld [vmem:[#allocation2 + $0x60] sm:$0xff]
        %v476 = vld [vmem:[#allocation2 + $0x68] sm:$0xff]
        %v477 = vld [vmem:[#allocation2 + $0x70] sm:$0xff]
        %v478 = vld [vmem:[#allocation2 + $0x78] sm:$0xff]
        %v479 = vld [vmem:[#allocation2 + $0x80] sm:$0xff]
        %v480 = vld [vmem:[#allocation2 + $0x88] sm:$0xff]
        %v481 = vld [vmem:[#allocation2 + $0x90] sm:$0xff]
        %v482 = vld [vmem:[#allocation2 + $0x98] sm:$0xff]
        %v483 = vld [vmem:[#allocation2 + $0xa0] sm:$0xff]
        %v484 = vld [vmem:[#allocation2 + $0xa8] sm:$0xff]
        %v485 = vld [vmem:[#allocation2 + $0xb0] sm:$0xff]
        %v486 = vld [vmem:[#allocation2 + $0xb8] sm:$0xff]
        %v487 = vld [vmem:[#allocation2 + $0xc0] sm:$0xff]
        %v488 = vld [vmem:[#allocation2 + $0xc8] sm:$0xff]
        %v489 = vld [vmem:[#allocation2 + $0xd0] sm:$0xff]
        %v490 = vld [vmem:[#allocation2 + $0xd8] sm:$0xff]
        %v491 = vld [vmem:[#allocation2 + $0xe0] sm:$0xff]
        %v492 = vld [vmem:[#allocation2 + $0xe8] sm:$0xff]
        %v493 = vld [vmem:[#allocation2 + $0xf0] sm:$0xff]
        %v494 = vld [vmem:[#allocation2 + $0xf8] sm:$0xff]
        %v495 = vld [vmem:[%s307] sm:$0xff]
        %v496 = vld [vmem:[%s307 + $0x8] sm:$0xff]
        %v497 = vld [vmem:[%s307 + $0x10] sm:$0xff]
        %v498 = vld [vmem:[%s307 + $0x18] sm:$0xff]
        %v499 = vld [vmem:[%s307 + $0x20] sm:$0xff]
        %v500 = vld [vmem:[%s307 + $0x28] sm:$0xff]
        %v501 = vld [vmem:[%s307 + $0x30] sm:$0xff]
        %v502 = vld [vmem:[%s307 + $0x38] sm:$0xff]
        %v503 = vld [vmem:[%s307 + $0x40] sm:$0xff]
        %v504 = vld [vmem:[%s307 + $0x48] sm:$0xff]
        %v505 = vld [vmem:[%s307 + $0x50] sm:$0xff]
        %v506 = vld [vmem:[%s307 + $0x58] sm:$0xff]
        %v507 = vld [vmem:[%s307 + $0x60] sm:$0xff]
        %v508 = vld [vmem:[%s307 + $0x68] sm:$0xff]
        %v509 = vld [vmem:[%s307 + $0x70] sm:$0xff]
        %v510 = vld [vmem:[%s307 + $0x78] sm:$0xff]
        %v511 = vld [vmem:[%s307 + $0x80] sm:$0xff]
        %v512 = vld [vmem:[%s307 + $0x88] sm:$0xff]
        %v513 = vld [vmem:[%s307 + $0x90] sm:$0xff]
        %v514 = vld [vmem:[%s307 + $0x98] sm:$0xff]
        %v515 = vld [vmem:[%s307 + $0xa0] sm:$0xff]
        %v516 = vld [vmem:[%s307 + $0xa8] sm:$0xff]
        %v517 = vld [vmem:[%s307 + $0xb0] sm:$0xff]
        %v518 = vld [vmem:[%s307 + $0xb8] sm:$0xff]
        %v519 = vld [vmem:[%s307 + $0xc0] sm:$0xff]
        %v520 = vld [vmem:[%s307 + $0xc8] sm:$0xff]
        %v521 = vld [vmem:[%s307 + $0xd0] sm:$0xff]
        %v522 = vld [vmem:[%s307 + $0xd8] sm:$0xff]
        %v523 = vld [vmem:[%s307 + $0xe0] sm:$0xff]
        %v524 = vld [vmem:[%s307 + $0xe8] sm:$0xff]
        %v525 = vld [vmem:[%s307 + $0xf0] sm:$0xff]
        %v526 = vld [vmem:[%s307 + $0xf8] sm:$0xff]
        %v559 = vunpack.c.l.b16 %v495
        %v560 = vunpack.c.h.b16 %v495
        %v561 = vunpack.c.l.b16 %v496
        %v562 = vunpack.c.h.b16 %v496
        %v563 = vunpack.c.l.b16 %v497
        %v564 = vunpack.c.h.b16 %v497
        %v565 = vunpack.c.l.b16 %v498
        %v566 = vunpack.c.h.b16 %v498
        %v567 = vunpack.c.l.b16 %v499
        %v568 = vunpack.c.h.b16 %v499
        %v569 = vunpack.c.l.b16 %v500
        %v570 = vunpack.c.h.b16 %v500
        %v571 = vunpack.c.l.b16 %v501
        %v572 = vunpack.c.h.b16 %v501
        %v573 = vunpack.c.l.b16 %v502
        %v574 = vunpack.c.h.b16 %v502
        %v575 = vunpack.c.l.b16 %v503
        %v576 = vunpack.c.h.b16 %v503
        %v577 = vunpack.c.l.b16 %v504
        %v578 = vunpack.c.h.b16 %v504
        %v579 = vunpack.c.l.b16 %v505
        %v580 = vunpack.c.h.b16 %v505
        %v581 = vunpack.c.l.b16 %v506
        %v582 = vunpack.c.h.b16 %v506
        %v583 = vunpack.c.l.b16 %v507
        %v584 = vunpack.c.h.b16 %v507
        %v585 = vunpack.c.l.b16 %v508
        %v586 = vunpack.c.h.b16 %v508
        %v587 = vunpack.c.l.b16 %v509
        %v588 = vunpack.c.h.b16 %v509
        %v589 = vunpack.c.l.b16 %v510
        %v590 = vunpack.c.h.b16 %v510
        %v591 = vunpack.c.l.b16 %v511
        %v592 = vunpack.c.h.b16 %v511
        %v593 = vunpack.c.l.b16 %v512
        %v594 = vunpack.c.h.b16 %v512
        %v595 = vunpack.c.l.b16 %v513
        %v596 = vunpack.c.h.b16 %v513
        %v597 = vunpack.c.l.b16 %v514
        %v598 = vunpack.c.h.b16 %v514
        %v599 = vunpack.c.l.b16 %v515
        %v600 = vunpack.c.h.b16 %v515
        %v601 = vunpack.c.l.b16 %v516
        %v602 = vunpack.c.h.b16 %v516
        %v603 = vunpack.c.l.b16 %v517
        %v604 = vunpack.c.h.b16 %v517
        %v605 = vunpack.c.l.b16 %v518
        %v606 = vunpack.c.h.b16 %v518
        %v607 = vunpack.c.l.b16 %v519
        %v608 = vunpack.c.h.b16 %v519
        %v609 = vunpack.c.l.b16 %v520
        %v610 = vunpack.c.h.b16 %v520
        %v611 = vunpack.c.l.b16 %v521
        %v612 = vunpack.c.h.b16 %v521
        %v613 = vunpack.c.l.b16 %v522
        %v614 = vunpack.c.h.b16 %v522
        %v615 = vunpack.c.l.b16 %v523
        %v616 = vunpack.c.h.b16 %v523
        %v617 = vunpack.c.l.b16 %v524
        %v618 = vunpack.c.h.b16 %v524
        %v619 = vunpack.c.l.b16 %v525
        %v620 = vunpack.c.h.b16 %v525
        %v621 = vunpack.c.l.b16 %v526
        %v622 = vunpack.c.h.b16 %v526
        %v623 = vpack.c.b16 %v561, %v559
        %v624 = vpack.c.b16 %v562, %v560
        %v625 = vpack.c.b16 %v565, %v563
        %v626 = vpack.c.b16 %v566, %v564
        %v627 = vpack.c.b16 %v569, %v567
        %v628 = vpack.c.b16 %v570, %v568
        %v629 = vpack.c.b16 %v573, %v571
        %v630 = vpack.c.b16 %v574, %v572
        %v631 = vpack.c.b16 %v577, %v575
        %v632 = vpack.c.b16 %v578, %v576
        %v633 = vpack.c.b16 %v581, %v579
        %v634 = vpack.c.b16 %v582, %v580
        %v635 = vpack.c.b16 %v585, %v583
        %v636 = vpack.c.b16 %v586, %v584
        %v637 = vpack.c.b16 %v589, %v587
        %v638 = vpack.c.b16 %v590, %v588
        %v639 = vpack.c.b16 %v593, %v591
        %v640 = vpack.c.b16 %v594, %v592
        %v641 = vpack.c.b16 %v597, %v595
        %v642 = vpack.c.b16 %v598, %v596
        %v643 = vpack.c.b16 %v601, %v599
        %v644 = vpack.c.b16 %v602, %v600
        %v645 = vpack.c.b16 %v605, %v603
        %v646 = vpack.c.b16 %v606, %v604
        %v647 = vpack.c.b16 %v609, %v607
        %v648 = vpack.c.b16 %v610, %v608
        %v649 = vpack.c.b16 %v613, %v611
        %v650 = vpack.c.b16 %v614, %v612
        %v651 = vpack.c.b16 %v617, %v615
        %v652 = vpack.c.b16 %v618, %v616
        %v653 = vpack.c.b16 %v621, %v619
        %v654 = vpack.c.b16 %v622, %v620
        %687 = vmatprep.subr.bf16.mxu0 0
        %688 = vmatpush1.bf16.msra.mxu0 %v447
        %689 = vmatprep.subr.bf16.mxu0 0
        %690 = vmatpush1.bf16.msra.mxu0 %v448
        %691 = vmatprep.subr.bf16.mxu0 0
        %692 = vmatpush1.bf16.msra.mxu0 %v449
        %693 = vmatprep.subr.bf16.mxu0 0
        %694 = vmatpush1.bf16.msra.mxu0 %v450
        %695 = vmatprep.subr.bf16.mxu0 0
        %696 = vmatpush1.bf16.msra.mxu0 %v451
        %697 = vmatprep.subr.bf16.mxu0 0
        %698 = vmatpush1.bf16.msra.mxu0 %v452
        %699 = vmatprep.subr.bf16.mxu0 0
        %700 = vmatpush1.bf16.msra.mxu0 %v453
        %701 = vmatprep.subr.bf16.mxu0 0
        %702 = vmatpush1.bf16.msra.mxu0 %v454
        %703 = vmatprep.subr.bf16.mxu0 0
        %704 = vmatpush1.bf16.msra.mxu0 %v455
        %705 = vmatprep.subr.bf16.mxu0 0
        %706 = vmatpush1.bf16.msra.mxu0 %v456
        %707 = vmatprep.subr.bf16.mxu0 0
        %708 = vmatpush1.bf16.msra.mxu0 %v457
        %709 = vmatprep.subr.bf16.mxu0 0
        %710 = vmatpush1.bf16.msra.mxu0 %v458
        %711 = vmatprep.subr.bf16.mxu0 0
        %712 = vmatpush1.bf16.msra.mxu0 %v459
        %713 = vmatprep.subr.bf16.mxu0 0
        %714 = vmatpush1.bf16.msra.mxu0 %v460
        %715 = vmatprep.subr.bf16.mxu0 0
        %716 = vmatpush1.bf16.msra.mxu0 %v461
        %717 = vmatprep.subr.bf16.mxu0 0
        %718 = vmatpush1.bf16.msra.mxu0 %v462
        %719 = vmatprep.mubr.bf16.mxu0 %v624
        %720 = vmatmul.mubr.bf16.gmra.mrb[0].mxu0 %v623
        %v721 = vpop.f32.mrb[0].mxu0
        %v722 = vadd.f32 0.0, %v721
        %v723 = vpop.f32.mrb[0].mxu0
        %v724 = vpop.f32.mrb[0].mxu0
        %v725 = vadd.f32 0.0, %v724
        %v726 = vpop.f32.mrb[0].mxu0
        %727 = vmatprep.mubr.bf16.mxu0 %v626
        %728 = vmatmul.mubr.bf16.gmra.mrb[0].mxu0 %v625
        %v729 = vpop.f32.mrb[0].mxu0
        %v730 = vadd.f32 0.0, %v729
        %v731 = vpop.f32.mrb[0].mxu0
        %v732 = vpop.f32.mrb[0].mxu0
        %v733 = vadd.f32 0.0, %v732
        %v734 = vpop.f32.mrb[0].mxu0
        %735 = vmatprep.mubr.bf16.mxu0 %v628
        %736 = vmatmul.mubr.bf16.gmra.mrb[0].mxu0 %v627
        %v737 = vpop.f32.mrb[0].mxu0
        %v738 = vadd.f32 0.0, %v737
        %v739 = vpop.f32.mrb[0].mxu0
        %v740 = vpop.f32.mrb[0].mxu0
        %v741 = vadd.f32 0.0, %v740
        %v742 = vpop.f32.mrb[0].mxu0
        %743 = vmatprep.mubr.bf16.mxu0 %v630
        %744 = vmatmul.mubr.bf16.gmra.mrb[0].mxu0 %v629
        %v745 = vpop.f32.mrb[0].mxu0
        %v746 = vadd.f32 0.0, %v745
        %v747 = vpop.f32.mrb[0].mxu0
        %v748 = vpop.f32.mrb[0].mxu0
        %v749 = vadd.f32 0.0, %v748
        %v750 = vpop.f32.mrb[0].mxu0
        %751 = vmatprep.mubr.bf16.mxu0 %v632
        %752 = vmatmul.mubr.bf16.gmra.mrb[0].mxu0 %v631
        %v753 = vpop.f32.mrb[0].mxu0
        %v754 = vadd.f32 0.0, %v753
        %v755 = vpop.f32.mrb[0].mxu0
        %v756 = vpop.f32.mrb[0].mxu0
        %v757 = vadd.f32 0.0, %v756
        %v758 = vpop.f32.mrb[0].mxu0
        %759 = vmatprep.mubr.bf16.mxu0 %v634
        %760 = vmatmul.mubr.bf16.gmra.mrb[0].mxu0 %v633
        %v761 = vpop.f32.mrb[0].mxu0
        %v762 = vadd.f32 0.0, %v761
        %v763 = vpop.f32.mrb[0].mxu0
        %v764 = vpop.f32.mrb[0].mxu0
        %v765 = vadd.f32 0.0, %v764
        %v766 = vpop.f32.mrb[0].mxu0
        %767 = vmatprep.mubr.bf16.mxu0 %v636
        %768 = vmatmul.mubr.bf16.gmra.mrb[0].mxu0 %v635
        %v769 = vpop.f32.mrb[0].mxu0
        %v770 = vadd.f32 0.0, %v769
        %v771 = vpop.f32.mrb[0].mxu0
        %v772 = vpop.f32.mrb[0].mxu0
        %v773 = vadd.f32 0.0, %v772
        %v774 = vpop.f32.mrb[0].mxu0
        %775 = vmatprep.mubr.bf16.mxu0 %v638
        %776 = vmatmul.mubr.bf16.gmra.mrb[0].mxu0 %v637
        %v777 = vpop.f32.mrb[0].mxu0
        %v778 = vadd.f32 0.0, %v777
        %v779 = vpop.f32.mrb[0].mxu0
        %v780 = vpop.f32.mrb[0].mxu0
        %v781 = vadd.f32 0.0, %v780
        %v782 = vpop.f32.mrb[0].mxu0
        %783 = vmatprep.mubr.bf16.mxu0 %v640
        %784 = vmatmul.mubr.bf16.gmra.mrb[0].mxu0 %v639
        %v785 = vpop.f32.mrb[0].mxu0
        %v786 = vadd.f32 0.0, %v785
        %v787 = vpop.f32.mrb[0].mxu0
        %v788 = vpop.f32.mrb[0].mxu0
        %v789 = vadd.f32 0.0, %v788
        %v790 = vpop.f32.mrb[0].mxu0
        %791 = vmatprep.mubr.bf16.mxu0 %v642
        %792 = vmatmul.mubr.bf16.gmra.mrb[0].mxu0 %v641
        %v793 = vpop.f32.mrb[0].mxu0
        %v794 = vadd.f32 0.0, %v793
        %v795 = vpop.f32.mrb[0].mxu0
        %v796 = vpop.f32.mrb[0].mxu0
        %v797 = vadd.f32 0.0, %v796
        %v798 = vpop.f32.mrb[0].mxu0
        %799 = vmatprep.mubr.bf16.mxu0 %v644
        %800 = vmatmul.mubr.bf16.gmra.mrb[0].mxu0 %v643
        %v801 = vpop.f32.mrb[0].mxu0
        %v802 = vadd.f32 0.0, %v801
        %v803 = vpop.f32.mrb[0].mxu0
        %v804 = vpop.f32.mrb[0].mxu0
        %v805 = vadd.f32 0.0, %v804
        %v806 = vpop.f32.mrb[0].mxu0
        %807 = vmatprep.mubr.bf16.mxu0 %v646
        %808 = vmatmul.mubr.bf16.gmra.mrb[0].mxu0 %v645
        %v809 = vpop.f32.mrb[0].mxu0
        %v810 = vadd.f32 0.0, %v809
        %v811 = vpop.f32.mrb[0].mxu0
        %v812 = vpop.f32.mrb[0].mxu0
        %v813 = vadd.f32 0.0, %v812
        %v814 = vpop.f32.mrb[0].mxu0
        %815 = vmatprep.mubr.bf16.mxu0 %v648
        %816 = vmatmul.mubr.bf16.gmra.mrb[0].mxu0 %v647
        %v817 = vpop.f32.mrb[0].mxu0
        %v818 = vadd.f32 0.0, %v817
        %v819 = vpop.f32.mrb[0].mxu0
        %v820 = vpop.f32.mrb[0].mxu0
        %v821 = vadd.f32 0.0, %v820
        %v822 = vpop.f32.mrb[0].mxu0
        %823 = vmatprep.mubr.bf16.mxu0 %v650
        %824 = vmatmul.mubr.bf16.gmra.mrb[0].mxu0 %v649
        %v825 = vpop.f32.mrb[0].mxu0
        %v826 = vadd.f32 0.0, %v825
        %v827 = vpop.f32.mrb[0].mxu0
        %v828 = vpop.f32.mrb[0].mxu0
        %v829 = vadd.f32 0.0, %v828
        %v830 = vpop.f32.mrb[0].mxu0
        %831 = vmatprep.mubr.bf16.mxu0 %v652
        %832 = vmatmul.mubr.bf16.gmra.mrb[0].mxu0 %v651
        %v833 = vpop.f32.mrb[0].mxu0
        %v834 = vadd.f32 0.0, %v833
        %v835 = vpop.f32.mrb[0].mxu0
        %v836 = vpop.f32.mrb[0].mxu0
        %v837 = vadd.f32 0.0, %v836
        %v838 = vpop.f32.mrb[0].mxu0
        %839 = vmatprep.mubr.bf16.mxu0 %v654
        %840 = vmatmul.mubr.bf16.gmra.mrb[0].mxu0 %v653
        %v841 = vpop.f32.mrb[0].mxu0
        %v842 = vadd.f32 0.0, %v841
        %v843 = vpop.f32.mrb[0].mxu0
        %v844 = vpop.f32.mrb[0].mxu0
        %v845 = vadd.f32 0.0, %v844
        %v846 = vpop.f32.mrb[0].mxu0
        %847 = vdwg.mxu0
        %v848 = vadd.f32 %v463, %v722
        %v849 = vadd.f32 %v464, %v725
        %v850 = vadd.f32 %v465, %v730
        %v851 = vadd.f32 %v466, %v733
        %v852 = vadd.f32 %v467, %v738
        %v853 = vadd.f32 %v468, %v741
        %v854 = vadd.f32 %v469, %v746
        %v855 = vadd.f32 %v470, %v749
        %v856 = vadd.f32 %v471, %v754
        %v857 = vadd.f32 %v472, %v757
        %v858 = vadd.f32 %v473, %v762
        %v859 = vadd.f32 %v474, %v765
        %v860 = vadd.f32 %v475, %v770
        %v861 = vadd.f32 %v476, %v773
        %v862 = vadd.f32 %v477, %v778
        %v863 = vadd.f32 %v478, %v781
        %v864 = vadd.f32 %v479, %v786
        %v865 = vadd.f32 %v480, %v789
        %v866 = vadd.f32 %v481, %v794
        %v867 = vadd.f32 %v482, %v797
        %v868 = vadd.f32 %v483, %v802
        %v869 = vadd.f32 %v484, %v805
        %v870 = vadd.f32 %v485, %v810
        %v871 = vadd.f32 %v486, %v813
        %v872 = vadd.f32 %v487, %v818
        %v873 = vadd.f32 %v488, %v821
        %v874 = vadd.f32 %v489, %v826
        %v875 = vadd.f32 %v490, %v829
        %v876 = vadd.f32 %v491, %v834
        %v877 = vadd.f32 %v492, %v837
        %v878 = vadd.f32 %v493, %v842
        %v879 = vadd.f32 %v494, %v845
        %vm880 = vcmask 130048
        %881 = vst.msk [vmem:[#allocation2] sm:$0xff] %vm880, %v848
        %882 = vst.msk [vmem:[#allocation2 + $0x8] sm:$0xff] %vm880, %v849
        %883 = vst.msk [vmem:[#allocation2 + $0x10] sm:$0xff] %vm880, %v850
        %884 = vst.msk [vmem:[#allocation2 + $0x18] sm:$0xff] %vm880, %v851
        %885 = vst.msk [vmem:[#allocation2 + $0x20] sm:$0xff] %vm880, %v852
        %886 = vst.msk [vmem:[#allocation2 + $0x28] sm:$0xff] %vm880, %v853
        %887 = vst.msk [vmem:[#allocation2 + $0x30] sm:$0xff] %vm880, %v854
        %888 = vst.msk [vmem:[#allocation2 + $0x38] sm:$0xff] %vm880, %v855
        %889 = vst.msk [vmem:[#allocation2 + $0x40] sm:$0xff] %vm880, %v856
        %890 = vst.msk [vmem:[#allocation2 + $0x48] sm:$0xff] %vm880, %v857
        %891 = vst.msk [vmem:[#allocation2 + $0x50] sm:$0xff] %vm880, %v858
        %892 = vst.msk [vmem:[#allocation2 + $0x58] sm:$0xff] %vm880, %v859
        %893 = vst.msk [vmem:[#allocation2 + $0x60] sm:$0xff] %vm880, %v860
        %894 = vst.msk [vmem:[#allocation2 + $0x68] sm:$0xff] %vm880, %v861
        %895 = vst.msk [vmem:[#allocation2 + $0x70] sm:$0xff] %vm880, %v862
        %896 = vst.msk [vmem:[#allocation2 + $0x78] sm:$0xff] %vm880, %v863
        %897 = vst.msk [vmem:[#allocation2 + $0x80] sm:$0xff] %vm880, %v864
        %898 = vst.msk [vmem:[#allocation2 + $0x88] sm:$0xff] %vm880, %v865
        %899 = vst.msk [vmem:[#allocation2 + $0x90] sm:$0xff] %vm880, %v866
        %900 = vst.msk [vmem:[#allocation2 + $0x98] sm:$0xff] %vm880, %v867
        %901 = vst.msk [vmem:[#allocation2 + $0xa0] sm:$0xff] %vm880, %v868
        %902 = vst.msk [vmem:[#allocation2 + $0xa8] sm:$0xff] %vm880, %v869
        %903 = vst.msk [vmem:[#allocation2 + $0xb0] sm:$0xff] %vm880, %v870
        %904 = vst.msk [vmem:[#allocation2 + $0xb8] sm:$0xff] %vm880, %v871
        %905 = vst.msk [vmem:[#allocation2 + $0xc0] sm:$0xff] %vm880, %v872
        %906 = vst.msk [vmem:[#allocation2 + $0xc8] sm:$0xff] %vm880, %v873
        %907 = vst.msk [vmem:[#allocation2 + $0xd0] sm:$0xff] %vm880, %v874
        %908 = vst.msk [vmem:[#allocation2 + $0xd8] sm:$0xff] %vm880, %v875
        %909 = vst.msk [vmem:[#allocation2 + $0xe0] sm:$0xff] %vm880, %v876
        %910 = vst.msk [vmem:[#allocation2 + $0xe8] sm:$0xff] %vm880, %v877
        %911 = vst.msk [vmem:[#allocation2 + $0xf0] sm:$0xff] %vm880, %v878
        %912 = vst.msk [vmem:[#allocation2 + $0xf8] sm:$0xff] %vm880, %v879
        %p913 = scmp.eq.s32.totalorder %s18, 1
        // Predicated region
        $region71: #{ngcfmf_concat_mlp_forward.5} parent=61 // pred_check
          %p914 = pneg %p913
        $region72: #{ngcfmf_concat_mlp_forward.5} parent=61 // pred_check_branch
          %916 = sbr.rel (%p914) target = $region74
        $region73: #{ngcfmf_concat_mlp_forward.5} parent=61 // pred_region
          %v917 = vld [vmem:[#allocation2] sm:$0xff]
          %v918 = vld [vmem:[#allocation2 + $0x8] sm:$0xff]
          %v919 = vld [vmem:[#allocation2 + $0x10] sm:$0xff]
          %v920 = vld [vmem:[#allocation2 + $0x18] sm:$0xff]
          %v921 = vld [vmem:[#allocation2 + $0x20] sm:$0xff]
          %v922 = vld [vmem:[#allocation2 + $0x28] sm:$0xff]
          %v923 = vld [vmem:[#allocation2 + $0x30] sm:$0xff]
          %v924 = vld [vmem:[#allocation2 + $0x38] sm:$0xff]
          %v925 = vld [vmem:[#allocation2 + $0x40] sm:$0xff]
          %v926 = vld [vmem:[#allocation2 + $0x48] sm:$0xff]
          %v927 = vld [vmem:[#allocation2 + $0x50] sm:$0xff]
          %v928 = vld [vmem:[#allocation2 + $0x58] sm:$0xff]
          %v929 = vld [vmem:[#allocation2 + $0x60] sm:$0xff]
          %v930 = vld [vmem:[#allocation2 + $0x68] sm:$0xff]
          %v931 = vld [vmem:[#allocation2 + $0x70] sm:$0xff]
          %v932 = vld [vmem:[#allocation2 + $0x78] sm:$0xff]
          %v933 = vld [vmem:[#allocation2 + $0x80] sm:$0xff]
          %v934 = vld [vmem:[#allocation2 + $0x88] sm:$0xff]
          %v935 = vld [vmem:[#allocation2 + $0x90] sm:$0xff]
          %v936 = vld [vmem:[#allocation2 + $0x98] sm:$0xff]
          %v937 = vld [vmem:[#allocation2 + $0xa0] sm:$0xff]
          %v938 = vld [vmem:[#allocation2 + $0xa8] sm:$0xff]
          %v939 = vld [vmem:[#allocation2 + $0xb0] sm:$0xff]
          %v940 = vld [vmem:[#allocation2 + $0xb8] sm:$0xff]
          %v941 = vld [vmem:[#allocation2 + $0xc0] sm:$0xff]
          %v942 = vld [vmem:[#allocation2 + $0xc8] sm:$0xff]
          %v943 = vld [vmem:[#allocation2 + $0xd0] sm:$0xff]
          %v944 = vld [vmem:[#allocation2 + $0xd8] sm:$0xff]
          %v945 = vld [vmem:[#allocation2 + $0xe0] sm:$0xff]
          %v946 = vld [vmem:[#allocation2 + $0xe8] sm:$0xff]
          %v947 = vld [vmem:[#allocation2 + $0xf0] sm:$0xff]
          %v948 = vld [vmem:[#allocation2 + $0xf8] sm:$0xff]
          %949 = vst.msk [vmem:[%s343] sm:$0xff] %vm880, %v917
          %950 = vst.msk [vmem:[%s343 + $0x8] sm:$0xff] %vm880, %v918
          %951 = vst.msk [vmem:[%s343 + $0x10] sm:$0xff] %vm880, %v919
          %952 = vst.msk [vmem:[%s343 + $0x18] sm:$0xff] %vm880, %v920
          %953 = vst.msk [vmem:[%s343 + $0x20] sm:$0xff] %vm880, %v921
          %954 = vst.msk [vmem:[%s343 + $0x28] sm:$0xff] %vm880, %v922
          %955 = vst.msk [vmem:[%s343 + $0x30] sm:$0xff] %vm880, %v923
          %956 = vst.msk [vmem:[%s343 + $0x38] sm:$0xff] %vm880, %v924
          %957 = vst.msk [vmem:[%s343 + $0x40] sm:$0xff] %vm880, %v925
          %958 = vst.msk [vmem:[%s343 + $0x48] sm:$0xff] %vm880, %v926
          %959 = vst.msk [vmem:[%s343 + $0x50] sm:$0xff] %vm880, %v927
          %960 = vst.msk [vmem:[%s343 + $0x58] sm:$0xff] %vm880, %v928
          %961 = vst.msk [vmem:[%s343 + $0x60] sm:$0xff] %vm880, %v929
          %962 = vst.msk [vmem:[%s343 + $0x68] sm:$0xff] %vm880, %v930
          %963 = vst.msk [vmem:[%s343 + $0x70] sm:$0xff] %vm880, %v931
          %964 = vst.msk [vmem:[%s343 + $0x78] sm:$0xff] %vm880, %v932
          %965 = vst.msk [vmem:[%s343 + $0x80] sm:$0xff] %vm880, %v933
          %966 = vst.msk [vmem:[%s343 + $0x88] sm:$0xff] %vm880, %v934
          %967 = vst.msk [vmem:[%s343 + $0x90] sm:$0xff] %vm880, %v935
          %968 = vst.msk [vmem:[%s343 + $0x98] sm:$0xff] %vm880, %v936
          %969 = vst.msk [vmem:[%s343 + $0xa0] sm:$0xff] %vm880, %v937
          %970 = vst.msk [vmem:[%s343 + $0xa8] sm:$0xff] %vm880, %v938
          %971 = vst.msk [vmem:[%s343 + $0xb0] sm:$0xff] %vm880, %v939
          %972 = vst.msk [vmem:[%s343 + $0xb8] sm:$0xff] %vm880, %v940
          %973 = vst.msk [vmem:[%s343 + $0xc0] sm:$0xff] %vm880, %v941
          %974 = vst.msk [vmem:[%s343 + $0xc8] sm:$0xff] %vm880, %v942
          %975 = vst.msk [vmem:[%s343 + $0xd0] sm:$0xff] %vm880, %v943
          %976 = vst.msk [vmem:[%s343 + $0xd8] sm:$0xff] %vm880, %v944
          %977 = vst.msk [vmem:[%s343 + $0xe0] sm:$0xff] %vm880, %v945
          %978 = vst.msk [vmem:[%s343 + $0xe8] sm:$0xff] %vm880, %v946
          %979 = vst.msk [vmem:[%s343 + $0xf0] sm:$0xff] %vm880, %v947
          %980 = vst.msk [vmem:[%s343 + $0xf8] sm:$0xff] %vm880, %v948
        $region74: #{ngcfmf_concat_mlp_forward.5} parent=61 // pred_fallthru
          _
        %s981 = smul.u32 32, %s17
        %p982 = scmp.lt.s32.totalorder %s981, 63
        %s983 = scalar_select %p982, %s981, 63
        %s984 = smul.addr %s983, 8
        %s985 = scalar_lea.vmem %s2, %s984
        // Predicated region
        $region75: #{ngcfmf_concat_mlp_forward.5} parent=61 // pred_check
          %p986 = pneg %p97
        $region76: #{ngcfmf_concat_mlp_forward.5} parent=61 // pred_check_branch
          %988 = sbr.rel (%p986) target = $region78
        $region77: #{ngcfmf_concat_mlp_forward.5} parent=61 // pred_region
          %s989 = smul.u32 32, %s17
        $region78: #{ngcfmf_concat_mlp_forward.5} parent=61 // pred_fallthru
          _
      $region62: #{ngcfmf_concat_mlp_forward.5} parent=5 // pred_fallthru
        _
      %p990 = scmp.le.s32.totalorder 2, %s8
      // Predicated region
      $region79: #{ngcfmf_concat_mlp_forward.5} parent=5 // pred_check
        %p991 = pneg %p990
      $region80: #{ngcfmf_concat_mlp_forward.5} parent=5 // pred_check_branch
        %993 = sbr.rel (%p991) target = $region82
      $region81: #{ngcfmf_concat_mlp_forward.5} parent=5 // pred_region
        %s994 = ssub.s32 %s8, 2
        // Predicated region
        $region83: #{ngcfmf_concat_mlp_forward.5} parent=81 // pred_check
          %p995 = pneg %p103
        $region84: #{ngcfmf_concat_mlp_forward.5} parent=81 // pred_check_branch
          %997 = sbr.rel (%p995) target = $region86
        $region85: #{ngcfmf_concat_mlp_forward.5} parent=81 // pred_region
          %s998 = smul.u32 32, %s19
          %p999 = scmp.lt.s32.totalorder %s998, 63
          %s1000 = scalar_select %p999, %s998, 63
          %s1001 = smul.addr %s1000, 8
          %s1002 = scalar_lea.vmem %s2, %s1001
        $region86: #{ngcfmf_concat_mlp_forward.5} parent=81 // pred_fallthru
          _
      $region82: #{ngcfmf_concat_mlp_forward.5} parent=5 // pred_fallthru
        _
    $region6: #{ngcfmf_concat_mlp_forward.5} parent=1 // loop_footer
      %s12 = sadd.s32 1, %s8
    $region7: #{ngcfmf_concat_mlp_forward.5} parent=1 // loop_footer_branch
      %7 = sbr.rel target = $region3
    $region8: #{ngcfmf_concat_mlp_forward.5} parent=1 // loop_exit
      _

// kernel: ngcfmf_concat_mlp_forward.6
$region0: #{ngcfmf_concat_mlp_forward.6}
  #allocation0 [shape = 'u32[]', space=smem, size = 0x4, offset = 0x4, fixed_abs, tag = 'smem constant byte address 0x4 - core index']
  #allocation1 [shape = 'u32[144,128]{1,0:T(1,128)}', space=vmem, size = 0x12000, scoped, tag = 'internal scratch']
  #allocation2 [shape = 'f32[256,16]{1,0:T(8,128)}', space=vmem, size = 0x20000, scoped, tag = 'scratch operand']
  %s0 = inlined_call_operand.vmem [shape: bf16[512,512], index: 0, kind: input, shape index: {}]
  %s1 = inlined_call_operand.vmem [shape: f32[512,16], index: 1, kind: input, shape index: {}]
  %s2 = inlined_call_operand.vmem [shape: f32[16,16], index: 2, kind: input, shape index: {}]
  %s3 = inlined_call_operand.vmem [shape: f32[1,16], index: 3, kind: input, shape index: {}]
  %s4 = inlined_call_operand.vmem [shape: f32[512,16], index: 4, kind: output, shape index: {}]
  %s5 = sld [smem:[#allocation0]]
  $region95: #{ngcfmf_concat_mlp_forward.6} parent=0
    _
  %s7 = ssub.s32 1, %s5
  %s8 = scalar_select 0, %s7, %s5
  $region1: #{ngcfmf_concat_mlp_forward.6} parent=0
    #allocation3 [shape = 'u8[262144]{0}', space=vmem, size = 0x40000, scoped, tag = 'input window, operand 0']
    loop: start=0, step=1, limit=6
    $region2: #{ngcfmf_concat_mlp_forward.6} parent=1 // loop_pre_header
      _
    $region3: #{ngcfmf_concat_mlp_forward.6} parent=1 // loop_header
      %s10 = sphi 0, %s14
      %p11 = scmp.ge.s32.totalorder %s10, 6
      %s17 = sphi 0, %s29
      %s18 = sphi 0, %s25
      %s19 = sphi 0, %s17
      %s20 = sphi 0, %s18
      %s21 = sphi 0, %s19
      %s22 = sphi 0, %s20
      %s34 = sphi 0, %s36
      %s37 = sphi 0, %s34
      %s38 = sphi 0, %s37
      %s54 = sphi 0, %s38
      %s60 = sphi 0, %s62
      %s63 = sphi 0, %s60
      %s64 = sphi 0, %s63
      %s80 = sphi 0, %s64
      %s84 = sphi 0, %s84
      %s86 = sphi 0, %s84
      %s87 = sphi 0, %s86
      %s101 = sphi 0, %s87
      %s105 = sphi 0, %s105
      %s107 = sphi 0, %s105
      %s108 = sphi 0, %s107
      %s122 = sphi 0, %s108
      %s128 = sphi 0, %s130
      %s131 = sphi 0, %s128
      %s132 = sphi 0, %s131
      %s148 = sphi 0, %s132
    $region4: #{ngcfmf_concat_mlp_forward.6} parent=1 // loop_header_branch
      %13 = sbr.rel (%p11) target = $region8
    $region5: #{ngcfmf_concat_mlp_forward.6} parent=1 // loop_body
      %s15 = ssub.s32 %s10, 1
      %s16 = ssub.s32 %s10, 2
      %s23 = sadd.s32 1, %s18
      %p24 = scmp.ge.s32.totalorder %s23, 2
      %s25 = scalar_select %p24, 0, %s23
      %s26 = sadd.s32 1, %s17
      %s27 = scalar_select %p24, %s26, %s17
      %p28 = scmp.ge.s32.totalorder %s27, 2
      %s29 = scalar_select %p28, 0, %s27
      %s30 = ssub.s32 %s17, %s29
      %s31 = ssub.s32 %s18, %s25
      %s32 = sor.u32 %s30, %s31
      %p33 = scmp.eq.s32.totalorder %s32, 0
      %s35 = sadd.s32 %s34, 1
      %s36 = scalar_select %p33, %s34, %s35
      %p39 = pneg %p33
      %p40 = scmp.eq.s32.totalorder %s10, 3
      %p41 = por %p39, %p40
      %p42 = scmp.ne.s32.totalorder %s34, %s37
      %p43 = scmp.eq.s32.totalorder %s10, 0
      %p44 = por %p42, %p43
      %p45 = scmp.ne.s32.totalorder %s34, %s37
      %p46 = scmp.eq.s32.totalorder %s15, 3
      %p47 = por %p45, %p46
      %p48 = scmp.ne.s32.totalorder %s37, %s38
      %p49 = scmp.eq.s32.totalorder %s15, 0
      %p50 = por %p48, %p49
      %p51 = scmp.ne.s32.totalorder %s37, %s38
      %p52 = scmp.eq.s32.totalorder %s16, 3
      %p53 = por %p51, %p52
      %p55 = scmp.ne.s32.totalorder %s38, %s54
      %p56 = scmp.eq.s32.totalorder %s16, 0
      %p57 = por %p55, %p56
      %s58 = ssub.s32 %s18, %s25
      %p59 = scmp.eq.s32.totalorder %s58, 0
      %s61 = sadd.s32 %s60, 1
      %s62 = scalar_select %p59, %s60, %s61
      %p65 = pneg %p59
      %p66 = scmp.eq.s32.totalorder %s10, 3
      %p67 = por %p65, %p66
      %p68 = scmp.ne.s32.totalorder %s60, %s63
      %p69 = scmp.eq.s32.totalorder %s10, 0
      %p70 = por %p68, %p69
      %p71 = scmp.ne.s32.totalorder %s60, %s63
      %p72 = scmp.eq.s32.totalorder %s15, 3
      %p73 = por %p71, %p72
      %p74 = scmp.ne.s32.totalorder %s63, %s64
      %p75 = scmp.eq.s32.totalorder %s15, 0
      %p76 = por %p74, %p75
      %p77 = scmp.ne.s32.totalorder %s63, %s64
      %p78 = scmp.eq.s32.totalorder %s16, 3
      %p79 = por %p77, %p78
      %p81 = scmp.ne.s32.totalorder %s64, %s80
      %p82 = scmp.eq.s32.totalorder %s16, 0
      %p83 = por %p81, %p82
      %s85 = sadd.s32 %s84, 1
      %p88 = scmp.eq.s32.totalorder %s10, 3
      %p89 = scmp.ne.s32.totalorder %s84, %s86
      %p90 = scmp.eq.s32.totalorder %s10, 0
      %p91 = por %p89, %p90
      %p92 = scmp.ne.s32.totalorder %s84, %s86
      %p93 = scmp.eq.s32.totalorder %s15, 3
      %p94 = por %p92, %p93
      %p95 = scmp.ne.s32.totalorder %s86, %s87
      %p96 = scmp.eq.s32.totalorder %s15, 0
      %p97 = por %p95, %p96
      %p98 = scmp.ne.s32.totalorder %s86, %s87
      %p99 = scmp.eq.s32.totalorder %s16, 3
      %p100 = por %p98, %p99
      %p102 = scmp.ne.s32.totalorder %s87, %s101
      %p103 = scmp.eq.s32.totalorder %s16, 0
      %p104 = por %p102, %p103
      %s106 = sadd.s32 %s105, 1
      %p109 = scmp.eq.s32.totalorder %s10, 3
      %p110 = scmp.ne.s32.totalorder %s105, %s107
      %p111 = scmp.eq.s32.totalorder %s10, 0
      %p112 = por %p110, %p111
      %p113 = scmp.ne.s32.totalorder %s105, %s107
      %p114 = scmp.eq.s32.totalorder %s15, 3
      %p115 = por %p113, %p114
      %p116 = scmp.ne.s32.totalorder %s107, %s108
      %p117 = scmp.eq.s32.totalorder %s15, 0
      %p118 = por %p116, %p117
      %p119 = scmp.ne.s32.totalorder %s107, %s108
      %p120 = scmp.eq.s32.totalorder %s16, 3
      %p121 = por %p119, %p120
      %p123 = scmp.ne.s32.totalorder %s108, %s122
      %p124 = scmp.eq.s32.totalorder %s16, 0
      %p125 = por %p123, %p124
      %s126 = ssub.s32 %s17, %s29
      %p127 = scmp.eq.s32.totalorder %s126, 0
      %s129 = sadd.s32 %s128, 1
      %s130 = scalar_select %p127, %s128, %s129
      %p133 = pneg %p127
      %p134 = scmp.eq.s32.totalorder %s10, 3
      %p135 = por %p133, %p134
      %p136 = scmp.ne.s32.totalorder %s128, %s131
      %p137 = scmp.eq.s32.totalorder %s10, 0
      %p138 = por %p136, %p137
      %p139 = scmp.ne.s32.totalorder %s128, %s131
      %p140 = scmp.eq.s32.totalorder %s15, 3
      %p141 = por %p139, %p140
      %p142 = scmp.ne.s32.totalorder %s131, %s132
      %p143 = scmp.eq.s32.totalorder %s15, 0
      %p144 = por %p142, %p143
      %p145 = scmp.ne.s32.totalorder %s131, %s132
      %p146 = scmp.eq.s32.totalorder %s16, 3
      %p147 = por %p145, %p146
      %p149 = scmp.ne.s32.totalorder %s132, %s148
      %p150 = scmp.eq.s32.totalorder %s16, 0
      %p151 = por %p149, %p150
      %p152 = scmp.le.s32.totalorder 1, %s10
      %p153 = scmp.lt.s32.totalorder %s10, 5
      %p154 = pnand %p152, %p153
      %p155 = pneg %p154
      // Predicated region
      $region9: #{ngcfmf_concat_mlp_forward.6} parent=5 // pred_check
        _
      $region10: #{ngcfmf_concat_mlp_forward.6} parent=5 // pred_check_branch
        %157 = sbr.rel (%p154) target = $region12
      $region11: #{ngcfmf_concat_mlp_forward.6} parent=5 // pred_region
        %s158 = ssub.s32 %s10, 1
        // Predicated region
        $region13: #{ngcfmf_concat_mlp_forward.6} parent=11 // pred_check
          %p159 = pneg %p97
        $region14: #{ngcfmf_concat_mlp_forward.6} parent=11 // pred_check_branch
          %161 = sbr.rel (%p159) target = $region16
        $region15: #{ngcfmf_concat_mlp_forward.6} parent=11 // pred_region
          _
        $region16: #{ngcfmf_concat_mlp_forward.6} parent=11 // pred_fallthru
          _
        // Predicated region
        $region17: #{ngcfmf_concat_mlp_forward.6} parent=11 // pred_check
          %p162 = pneg %p118
        $region18: #{ngcfmf_concat_mlp_forward.6} parent=11 // pred_check_branch
          %164 = sbr.rel (%p162) target = $region20
        $region19: #{ngcfmf_concat_mlp_forward.6} parent=11 // pred_region
          _
        $region20: #{ngcfmf_concat_mlp_forward.6} parent=11 // pred_fallthru
          _
      $region12: #{ngcfmf_concat_mlp_forward.6} parent=5 // pred_fallthru
        _
      %p165 = scmp.lt.s32.totalorder %s10, 4
      // Predicated region
      $region21: #{ngcfmf_concat_mlp_forward.6} parent=5 // pred_check
        %p166 = pneg %p165
      $region22: #{ngcfmf_concat_mlp_forward.6} parent=5 // pred_check_branch
        %168 = sbr.rel (%p166) target = $region24
      $region23: #{ngcfmf_concat_mlp_forward.6} parent=5 // pred_region
        // Predicated region
        $region25: #{ngcfmf_concat_mlp_forward.6} parent=23 // pred_check
          %p169 = pneg %p44
        $region26: #{ngcfmf_concat_mlp_forward.6} parent=23 // pred_check_branch
          %171 = sbr.rel (%p169) target = $region28
        $region27: #{ngcfmf_concat_mlp_forward.6} parent=23 // pred_region
          %s172 = sand.u32 %s34, 1
          %s173 = sand.u32 %s34, 1
          %s174 = smul.addr %s173, 256
          %s175 = scalar_lea.vmem [#allocation3], %s174
          %s176 = smul.u32 32, %s17
          %s177 = smul.u32 2, %s18
          %s178 = smul.addr %s176, 4
          %s179 = sadd.s32 %s177, %s178
          %s180 = smul.addr %s179, 4
          %s181 = scalar_lea.vmem %s0, %s180
          // Predicated region
          $region29: #{ngcfmf_concat_mlp_forward.6} parent=27 // pred_check
            _
          $region30: #{ngcfmf_concat_mlp_forward.6} parent=27 // pred_check_branch
            %183 = sbr.rel (0) target = $region32
          $region31: #{ngcfmf_concat_mlp_forward.6} parent=27 // pred_region
            // Predicated region
            $region33: #{ngcfmf_concat_mlp_forward.6} parent=31 // pred_check
              _
            $region34: #{ngcfmf_concat_mlp_forward.6} parent=31 // pred_check_branch
              %185 = sbr.rel (0) target = $region36
            $region35: #{ngcfmf_concat_mlp_forward.6} parent=31 // pred_region
              // Predicated region
              $region48: #{ngcfmf_concat_mlp_forward.6} parent=35 // pred_check
                _
              $region49: #{ngcfmf_concat_mlp_forward.6} parent=35 // pred_check_branch
                %262 = sbr.rel (0) target = $region51
              $region50: #{ngcfmf_concat_mlp_forward.6} parent=35 // pred_region
                loop: start=0, step=1, limit=1
                $region52: #{ngcfmf_concat_mlp_forward.6} parent=50 // loop_pre_header
                  _
                $region53: #{ngcfmf_concat_mlp_forward.6} parent=50 // loop_header
                  %s264 = sphi 0, %s268
                  %p265 = scmp.ge.s32.totalorder %s264, 1
                  %s269 = sphi %s181, %s181
                  %s270 = sphi %s175, %s175
                $region54: #{ngcfmf_concat_mlp_forward.6} parent=50 // loop_header_branch
                  %267 = sbr.rel (%p265) target = $region58
                $region55: #{ngcfmf_concat_mlp_forward.6} parent=50 // loop_body
                  %v271 = vld [vmem:[%s269] sm:$0xff]
                  %272 = vst [vmem:[%s270] sm:$0xff] %v271
                  %v273 = vld [vmem:[%s269 + $0x10] sm:$0xff]
                  %274 = vst [vmem:[%s270 + $0x8] sm:$0xff] %v273
                  %v275 = vld [vmem:[%s269 + $0x20] sm:$0xff]
                  %276 = vst [vmem:[%s270 + $0x10] sm:$0xff] %v275
                  %v277 = vld [vmem:[%s269 + $0x30] sm:$0xff]
                  %278 = vst [vmem:[%s270 + $0x18] sm:$0xff] %v277
                  %v279 = vld [vmem:[%s269 + $0x40] sm:$0xff]
                  %280 = vst [vmem:[%s270 + $0x20] sm:$0xff] %v279
                  %v281 = vld [vmem:[%s269 + $0x50] sm:$0xff]
                  %282 = vst [vmem:[%s270 + $0x28] sm:$0xff] %v281
                  %v283 = vld [vmem:[%s269 + $0x60] sm:$0xff]
                  %284 = vst [vmem:[%s270 + $0x30] sm:$0xff] %v283
                  %v285 = vld [vmem:[%s269 + $0x70] sm:$0xff]
                  %286 = vst [vmem:[%s270 + $0x38] sm:$0xff] %v285
                  %v287 = vld [vmem:[%s269 + $0x80] sm:$0xff]
                  %288 = vst [vmem:[%s270 + $0x40] sm:$0xff] %v287
                  %v289 = vld [vmem:[%s269 + $0x90] sm:$0xff]
                  %290 = vst [vmem:[%s270 + $0x48] sm:$0xff] %v289
                  %v291 = vld [vmem:[%s269 + $0xa0] sm:$0xff]
                  %292 = vst [vmem:[%s270 + $0x50] sm:$0xff] %v291
                  %v293 = vld [vmem:[%s269 + $0xb0] sm:$0xff]
                  %294 = vst [vmem:[%s270 + $0x58] sm:$0xff] %v293
                  %v295 = vld [vmem:[%s269 + $0xc0] sm:$0xff]
                  %296 = vst [vmem:[%s270 + $0x60] sm:$0xff] %v295
                  %v297 = vld [vmem:[%s269 + $0xd0] sm:$0xff]
                  %298 = vst [vmem:[%s270 + $0x68] sm:$0xff] %v297
                  %v299 = vld [vmem:[%s269 + $0xe0] sm:$0xff]
                  %300 = vst [vmem:[%s270 + $0x70] sm:$0xff] %v299
                  %v301 = vld [vmem:[%s269 + $0xf0] sm:$0xff]
                  %302 = vst [vmem:[%s270 + $0x78] sm:$0xff] %v301
                  %v303 = vld [vmem:[%s269 + $0x100] sm:$0xff]
                  %304 = vst [vmem:[%s270 + $0x80] sm:$0xff] %v303
                  %v305 = vld [vmem:[%s269 + $0x110] sm:$0xff]
                  %306 = vst [vmem:[%s270 + $0x88] sm:$0xff] %v305
                  %v307 = vld [vmem:[%s269 + $0x120] sm:$0xff]
                  %308 = vst [vmem:[%s270 + $0x90] sm:$0xff] %v307
                  %v309 = vld [vmem:[%s269 + $0x130] sm:$0xff]
                  %310 = vst [vmem:[%s270 + $0x98] sm:$0xff] %v309
                  %v311 = vld [vmem:[%s269 + $0x140] sm:$0xff]
                  %312 = vst [vmem:[%s270 + $0xa0] sm:$0xff] %v311
                  %v313 = vld [vmem:[%s269 + $0x150] sm:$0xff]
                  %314 = vst [vmem:[%s270 + $0xa8] sm:$0xff] %v313
                  %v315 = vld [vmem:[%s269 + $0x160] sm:$0xff]
                  %316 = vst [vmem:[%s270 + $0xb0] sm:$0xff] %v315
                  %v317 = vld [vmem:[%s269 + $0x170] sm:$0xff]
                  %318 = vst [vmem:[%s270 + $0xb8] sm:$0xff] %v317
                  %v319 = vld [vmem:[%s269 + $0x180] sm:$0xff]
                  %320 = vst [vmem:[%s270 + $0xc0] sm:$0xff] %v319
                  %v321 = vld [vmem:[%s269 + $0x190] sm:$0xff]
                  %322 = vst [vmem:[%s270 + $0xc8] sm:$0xff] %v321
                  %v323 = vld [vmem:[%s269 + $0x1a0] sm:$0xff]
                  %324 = vst [vmem:[%s270 + $0xd0] sm:$0xff] %v323
                  %v325 = vld [vmem:[%s269 + $0x1b0] sm:$0xff]
                  %326 = vst [vmem:[%s270 + $0xd8] sm:$0xff] %v325
                  %v327 = vld [vmem:[%s269 + $0x1c0] sm:$0xff]
                  %328 = vst [vmem:[%s270 + $0xe0] sm:$0xff] %v327
                  %v329 = vld [vmem:[%s269 + $0x1d0] sm:$0xff]
                  %330 = vst [vmem:[%s270 + $0xe8] sm:$0xff] %v329
                  %v331 = vld [vmem:[%s269 + $0x1e0] sm:$0xff]
                  %332 = vst [vmem:[%s270 + $0xf0] sm:$0xff] %v331
                  %v333 = vld [vmem:[%s269 + $0x1f0] sm:$0xff]
                  %334 = vst [vmem:[%s270 + $0xf8] sm:$0xff] %v333
                $region56: #{ngcfmf_concat_mlp_forward.6} parent=50 // loop_footer
                  %s268 = sadd.s32 1, %s264
                $region57: #{ngcfmf_concat_mlp_forward.6} parent=50 // loop_footer_branch
                  %263 = sbr.rel target = $region53
                $region58: #{ngcfmf_concat_mlp_forward.6} parent=50 // loop_exit
                  _
              $region51: #{ngcfmf_concat_mlp_forward.6} parent=35 // pred_fallthru
                _
              // Predicated region
              $region59: #{ngcfmf_concat_mlp_forward.6} parent=35 // pred_check
                _
              $region60: #{ngcfmf_concat_mlp_forward.6} parent=35 // pred_check_branch
                %336 = sbr.rel target = $region62
              $region61: #{ngcfmf_concat_mlp_forward.6} parent=35 // pred_region
                _
              $region62: #{ngcfmf_concat_mlp_forward.6} parent=35 // pred_fallthru
                _
            $region36: #{ngcfmf_concat_mlp_forward.6} parent=31 // pred_fallthru
              _
            // Predicated region
            $region37: #{ngcfmf_concat_mlp_forward.6} parent=31 // pred_check
              _
            $region38: #{ngcfmf_concat_mlp_forward.6} parent=31 // pred_check_branch
              %187 = sbr.rel target = $region40
            $region39: #{ngcfmf_concat_mlp_forward.6} parent=31 // pred_region
              loop: start=0, step=1, limit=1
              $region41: #{ngcfmf_concat_mlp_forward.6} parent=39 // loop_pre_header
                _
              $region42: #{ngcfmf_concat_mlp_forward.6} parent=39 // loop_header
                %s190 = sphi 0, %s194
                %p191 = scmp.ge.s32.totalorder %s190, 1
                %s195 = sphi %s181, %s181
                %s196 = sphi %s175, %s175
              $region43: #{ngcfmf_concat_mlp_forward.6} parent=39 // loop_header_branch
                %193 = sbr.rel (%p191) target = $region47
              $region44: #{ngcfmf_concat_mlp_forward.6} parent=39 // loop_body
                %v197 = vld [vmem:[%s195] sm:$0xff]
                %198 = vst [vmem:[%s196] sm:$0xff] %v197
                %v199 = vld [vmem:[%s195 + $0x10] sm:$0xff]
                %200 = vst [vmem:[%s196 + $0x8] sm:$0xff] %v199
                %v201 = vld [vmem:[%s195 + $0x20] sm:$0xff]
                %202 = vst [vmem:[%s196 + $0x10] sm:$0xff] %v201
                %v203 = vld [vmem:[%s195 + $0x30] sm:$0xff]
                %204 = vst [vmem:[%s196 + $0x18] sm:$0xff] %v203
                %v205 = vld [vmem:[%s195 + $0x40] sm:$0xff]
                %206 = vst [vmem:[%s196 + $0x20] sm:$0xff] %v205
                %v207 = vld [vmem:[%s195 + $0x50] sm:$0xff]
                %208 = vst [vmem:[%s196 + $0x28] sm:$0xff] %v207
                %v209 = vld [vmem:[%s195 + $0x60] sm:$0xff]
                %210 = vst [vmem:[%s196 + $0x30] sm:$0xff] %v209
                %v211 = vld [vmem:[%s195 + $0x70] sm:$0xff]
                %212 = vst [vmem:[%s196 + $0x38] sm:$0xff] %v211
                %v213 = vld [vmem:[%s195 + $0x80] sm:$0xff]
                %214 = vst [vmem:[%s196 + $0x40] sm:$0xff] %v213
                %v215 = vld [vmem:[%s195 + $0x90] sm:$0xff]
                %216 = vst [vmem:[%s196 + $0x48] sm:$0xff] %v215
                %v217 = vld [vmem:[%s195 + $0xa0] sm:$0xff]
                %218 = vst [vmem:[%s196 + $0x50] sm:$0xff] %v217
                %v219 = vld [vmem:[%s195 + $0xb0] sm:$0xff]
                %220 = vst [vmem:[%s196 + $0x58] sm:$0xff] %v219
                %v221 = vld [vmem:[%s195 + $0xc0] sm:$0xff]
                %222 = vst [vmem:[%s196 + $0x60] sm:$0xff] %v221
                %v223 = vld [vmem:[%s195 + $0xd0] sm:$0xff]
                %224 = vst [vmem:[%s196 + $0x68] sm:$0xff] %v223
                %v225 = vld [vmem:[%s195 + $0xe0] sm:$0xff]
                %226 = vst [vmem:[%s196 + $0x70] sm:$0xff] %v225
                %v227 = vld [vmem:[%s195 + $0xf0] sm:$0xff]
                %228 = vst [vmem:[%s196 + $0x78] sm:$0xff] %v227
                %v229 = vld [vmem:[%s195 + $0x100] sm:$0xff]
                %230 = vst [vmem:[%s196 + $0x80] sm:$0xff] %v229
                %v231 = vld [vmem:[%s195 + $0x110] sm:$0xff]
                %232 = vst [vmem:[%s196 + $0x88] sm:$0xff] %v231
                %v233 = vld [vmem:[%s195 + $0x120] sm:$0xff]
                %234 = vst [vmem:[%s196 + $0x90] sm:$0xff] %v233
                %v235 = vld [vmem:[%s195 + $0x130] sm:$0xff]
                %236 = vst [vmem:[%s196 + $0x98] sm:$0xff] %v235
                %v237 = vld [vmem:[%s195 + $0x140] sm:$0xff]
                %238 = vst [vmem:[%s196 + $0xa0] sm:$0xff] %v237
                %v239 = vld [vmem:[%s195 + $0x150] sm:$0xff]
                %240 = vst [vmem:[%s196 + $0xa8] sm:$0xff] %v239
                %v241 = vld [vmem:[%s195 + $0x160] sm:$0xff]
                %242 = vst [vmem:[%s196 + $0xb0] sm:$0xff] %v241
                %v243 = vld [vmem:[%s195 + $0x170] sm:$0xff]
                %244 = vst [vmem:[%s196 + $0xb8] sm:$0xff] %v243
                %v245 = vld [vmem:[%s195 + $0x180] sm:$0xff]
                %246 = vst [vmem:[%s196 + $0xc0] sm:$0xff] %v245
                %v247 = vld [vmem:[%s195 + $0x190] sm:$0xff]
                %248 = vst [vmem:[%s196 + $0xc8] sm:$0xff] %v247
                %v249 = vld [vmem:[%s195 + $0x1a0] sm:$0xff]
                %250 = vst [vmem:[%s196 + $0xd0] sm:$0xff] %v249
                %v251 = vld [vmem:[%s195 + $0x1b0] sm:$0xff]
                %252 = vst [vmem:[%s196 + $0xd8] sm:$0xff] %v251
                %v253 = vld [vmem:[%s195 + $0x1c0] sm:$0xff]
                %254 = vst [vmem:[%s196 + $0xe0] sm:$0xff] %v253
                %v255 = vld [vmem:[%s195 + $0x1d0] sm:$0xff]
                %256 = vst [vmem:[%s196 + $0xe8] sm:$0xff] %v255
                %v257 = vld [vmem:[%s195 + $0x1e0] sm:$0xff]
                %258 = vst [vmem:[%s196 + $0xf0] sm:$0xff] %v257
                %v259 = vld [vmem:[%s195 + $0x1f0] sm:$0xff]
                %260 = vst [vmem:[%s196 + $0xf8] sm:$0xff] %v259
              $region45: #{ngcfmf_concat_mlp_forward.6} parent=39 // loop_footer
                %s194 = sadd.s32 1, %s190
              $region46: #{ngcfmf_concat_mlp_forward.6} parent=39 // loop_footer_branch
                %189 = sbr.rel target = $region42
              $region47: #{ngcfmf_concat_mlp_forward.6} parent=39 // loop_exit
                _
            $region40: #{ngcfmf_concat_mlp_forward.6} parent=31 // pred_fallthru
              _
          $region32: #{ngcfmf_concat_mlp_forward.6} parent=27 // pred_fallthru
            _
          %337 = vnop
        $region28: #{ngcfmf_concat_mlp_forward.6} parent=23 // pred_fallthru
          _
        // Predicated region
        $region63: #{ngcfmf_concat_mlp_forward.6} parent=23 // pred_check
          %p338 = pneg %p70
        $region64: #{ngcfmf_concat_mlp_forward.6} parent=23 // pred_check_branch
          %340 = sbr.rel (%p338) target = $region66
        $region65: #{ngcfmf_concat_mlp_forward.6} parent=23 // pred_region
          %s341 = smul.u32 32, %s18
          %p342 = scmp.lt.s32.totalorder %s341, 63
          %s343 = scalar_select %p342, %s341, 63
          %s344 = smul.addr %s343, 8
          %s345 = scalar_lea.vmem %s1, %s344
          %s346 = smul.u32 32, %s18
        $region66: #{ngcfmf_concat_mlp_forward.6} parent=23 // pred_fallthru
          _
      $region24: #{ngcfmf_concat_mlp_forward.6} parent=5 // pred_fallthru
        _
      %p347 = scmp.le.s32.totalorder 1, %s10
      %p348 = scmp.lt.s32.totalorder %s10, 5
      %p349 = pnand %p347, %p348
      %p350 = pneg %p349
      // Predicated region
      $region67: #{ngcfmf_concat_mlp_forward.6} parent=5 // pred_check
        _
      $region68: #{ngcfmf_concat_mlp_forward.6} parent=5 // pred_check_branch
        %352 = sbr.rel (%p349) target = $region70
      $region69: #{ngcfmf_concat_mlp_forward.6} parent=5 // pred_region
        %s353 = ssub.s32 %s10, 1
        %s354 = sand.u32 %s37, 1
        %s355 = sand.u32 %s37, 1
        %s356 = smul.addr %s355, 256
        %s357 = scalar_lea.vmem [#allocation3], %s356
        // Predicated region
        $region71: #{ngcfmf_concat_mlp_forward.6} parent=69 // pred_check
          %p358 = pneg %p50
        $region72: #{ngcfmf_concat_mlp_forward.6} parent=69 // pred_check_branch
          %360 = sbr.rel (%p358) target = $region74
        $region73: #{ngcfmf_concat_mlp_forward.6} parent=69 // pred_region
          _
        $region74: #{ngcfmf_concat_mlp_forward.6} parent=69 // pred_fallthru
          _
        %s361 = sand.u32 %s37, 1
        %s362 = sand.u32 %s37, 1
        %s363 = smul.addr %s362, 256
        %s364 = scalar_lea.vmem [#allocation3], %s363
        %p365 = pneg %p50
        %p366 = pneg %p47
        %s367 = smul.u32 32, %s20
        %p368 = scmp.lt.s32.totalorder %s367, 63
        %s369 = scalar_select %p368, %s367, 63
        %s370 = smul.addr %s369, 8
        %s371 = scalar_lea.vmem %s1, %s370
        %p372 = pneg %p76
        %p373 = pneg %p73
        %p374 = pneg %p97
        %p375 = pneg %p94
        %p376 = pneg %p118
        %p377 = pneg %p115
        %p378 = pneg %p144
        %p379 = pneg %p141
        %s380 = smul.u32 32, %s19
        %p381 = scmp.lt.s32.totalorder %s380, 63
        %s382 = scalar_select %p381, %s380, 63
        %s383 = smul.addr %s382, 8
        %s384 = scalar_lea.vmem %s4, %s383
        %s385 = smul.u32 32, %s19
        %s386 = smul.u32 2, %s20
        %s387 = smul.u32 32, %s20
        %p388 = scmp.lt.s32.totalorder %s387, 63
        %s389 = scalar_select %p388, %s387, 63
        %s390 = smul.addr %s389, 8
        %s391 = scalar_lea.vmem %s1, %s390
        %s392 = smul.u32 32, %s20
        %s393 = smul.u32 32, %s19
        %p394 = scmp.lt.s32.totalorder %s393, 63
        %s395 = scalar_select %p394, %s393, 63
        %s396 = smul.addr %s395, 8
        %s397 = scalar_lea.vmem %s4, %s396
        %s398 = smul.u32 32, %s19
        %p400 = scmp.eq.s32.totalorder %s20, 0
        // Predicated region
        $region75: #{ngcfmf_concat_mlp_forward.6} parent=69 // pred_check
          %p401 = pneg %p400
        $region76: #{ngcfmf_concat_mlp_forward.6} parent=69 // pred_check_branch
          %403 = sbr.rel (%p401) target = $region78
        $region77: #{ngcfmf_concat_mlp_forward.6} parent=69 // pred_region
          %vm404 = vcmask 130048
          %405 = vst.msk [vmem:[#allocation2] sm:$0xff] %vm404, 0.0
          %406 = vst.msk [vmem:[#allocation2 + $0x8] sm:$0xff] %vm404, 0.0
          %407 = vst.msk [vmem:[#allocation2 + $0x10] sm:$0xff] %vm404, 0.0
          %408 = vst.msk [vmem:[#allocation2 + $0x18] sm:$0xff] %vm404, 0.0
          %409 = vst.msk [vmem:[#allocation2 + $0x20] sm:$0xff] %vm404, 0.0
          %410 = vst.msk [vmem:[#allocation2 + $0x28] sm:$0xff] %vm404, 0.0
          %411 = vst.msk [vmem:[#allocation2 + $0x30] sm:$0xff] %vm404, 0.0
          %412 = vst.msk [vmem:[#allocation2 + $0x38] sm:$0xff] %vm404, 0.0
          %413 = vst.msk [vmem:[#allocation2 + $0x40] sm:$0xff] %vm404, 0.0
          %414 = vst.msk [vmem:[#allocation2 + $0x48] sm:$0xff] %vm404, 0.0
          %415 = vst.msk [vmem:[#allocation2 + $0x50] sm:$0xff] %vm404, 0.0
          %416 = vst.msk [vmem:[#allocation2 + $0x58] sm:$0xff] %vm404, 0.0
          %417 = vst.msk [vmem:[#allocation2 + $0x60] sm:$0xff] %vm404, 0.0
          %418 = vst.msk [vmem:[#allocation2 + $0x68] sm:$0xff] %vm404, 0.0
          %419 = vst.msk [vmem:[#allocation2 + $0x70] sm:$0xff] %vm404, 0.0
          %420 = vst.msk [vmem:[#allocation2 + $0x78] sm:$0xff] %vm404, 0.0
          %421 = vst.msk [vmem:[#allocation2 + $0x80] sm:$0xff] %vm404, 0.0
          %422 = vst.msk [vmem:[#allocation2 + $0x88] sm:$0xff] %vm404, 0.0
          %423 = vst.msk [vmem:[#allocation2 + $0x90] sm:$0xff] %vm404, 0.0
          %424 = vst.msk [vmem:[#allocation2 + $0x98] sm:$0xff] %vm404, 0.0
          %425 = vst.msk [vmem:[#allocation2 + $0xa0] sm:$0xff] %vm404, 0.0
          %426 = vst.msk [vmem:[#allocation2 + $0xa8] sm:$0xff] %vm404, 0.0
          %427 = vst.msk [vmem:[#allocation2 + $0xb0] sm:$0xff] %vm404, 0.0
          %428 = vst.msk [vmem:[#allocation2 + $0xb8] sm:$0xff] %vm404, 0.0
          %429 = vst.msk [vmem:[#allocation2 + $0xc0] sm:$0xff] %vm404, 0.0
          %430 = vst.msk [vmem:[#allocation2 + $0xc8] sm:$0xff] %vm404, 0.0
          %431 = vst.msk [vmem:[#allocation2 + $0xd0] sm:$0xff] %vm404, 0.0
          %432 = vst.msk [vmem:[#allocation2 + $0xd8] sm:$0xff] %vm404, 0.0
          %433 = vst.msk [vmem:[#allocation2 + $0xe0] sm:$0xff] %vm404, 0.0
          %434 = vst.msk [vmem:[#allocation2 + $0xe8] sm:$0xff] %vm404, 0.0
          %435 = vst.msk [vmem:[#allocation2 + $0xf0] sm:$0xff] %vm404, 0.0
          %436 = vst.msk [vmem:[#allocation2 + $0xf8] sm:$0xff] %vm404, 0.0
        $region78: #{ngcfmf_concat_mlp_forward.6} parent=69 // pred_fallthru
          _
        %v437 = vld [vmem:[#allocation2] sm:$0xff]
        %v438 = vld [vmem:[#allocation2 + $0x8] sm:$0xff]
        %v439 = vld [vmem:[#allocation2 + $0x10] sm:$0xff]
        %v440 = vld [vmem:[#allocation2 + $0x18] sm:$0xff]
        %v441 = vld [vmem:[#allocation2 + $0x20] sm:$0xff]
        %v442 = vld [vmem:[#allocation2 + $0x28] sm:$0xff]
        %v443 = vld [vmem:[#allocation2 + $0x30] sm:$0xff]
        %v444 = vld [vmem:[#allocation2 + $0x38] sm:$0xff]
        %v445 = vld [vmem:[#allocation2 + $0x40] sm:$0xff]
        %v446 = vld [vmem:[#allocation2 + $0x48] sm:$0xff]
        %v447 = vld [vmem:[#allocation2 + $0x50] sm:$0xff]
        %v448 = vld [vmem:[#allocation2 + $0x58] sm:$0xff]
        %v449 = vld [vmem:[#allocation2 + $0x60] sm:$0xff]
        %v450 = vld [vmem:[#allocation2 + $0x68] sm:$0xff]
        %v451 = vld [vmem:[#allocation2 + $0x70] sm:$0xff]
        %v452 = vld [vmem:[#allocation2 + $0x78] sm:$0xff]
        %v453 = vld [vmem:[#allocation2 + $0x80] sm:$0xff]
        %v454 = vld [vmem:[#allocation2 + $0x88] sm:$0xff]
        %v455 = vld [vmem:[#allocation2 + $0x90] sm:$0xff]
        %v456 = vld [vmem:[#allocation2 + $0x98] sm:$0xff]
        %v457 = vld [vmem:[#allocation2 + $0xa0] sm:$0xff]
        %v458 = vld [vmem:[#allocation2 + $0xa8] sm:$0xff]
        %v459 = vld [vmem:[#allocation2 + $0xb0] sm:$0xff]
        %v460 = vld [vmem:[#allocation2 + $0xb8] sm:$0xff]
        %v461 = vld [vmem:[#allocation2 + $0xc0] sm:$0xff]
        %v462 = vld [vmem:[#allocation2 + $0xc8] sm:$0xff]
        %v463 = vld [vmem:[#allocation2 + $0xd0] sm:$0xff]
        %v464 = vld [vmem:[#allocation2 + $0xd8] sm:$0xff]
        %v465 = vld [vmem:[#allocation2 + $0xe0] sm:$0xff]
        %v466 = vld [vmem:[#allocation2 + $0xe8] sm:$0xff]
        %v467 = vld [vmem:[#allocation2 + $0xf0] sm:$0xff]
        %v468 = vld [vmem:[#allocation2 + $0xf8] sm:$0xff]
        %v469 = vld [vmem:[%s357] sm:$0xff]
        %v470 = vld [vmem:[%s357 + $0x8] sm:$0xff]
        %v471 = vld [vmem:[%s357 + $0x10] sm:$0xff]
        %v472 = vld [vmem:[%s357 + $0x18] sm:$0xff]
        %v473 = vld [vmem:[%s357 + $0x20] sm:$0xff]
        %v474 = vld [vmem:[%s357 + $0x28] sm:$0xff]
        %v475 = vld [vmem:[%s357 + $0x30] sm:$0xff]
        %v476 = vld [vmem:[%s357 + $0x38] sm:$0xff]
        %v477 = vld [vmem:[%s357 + $0x40] sm:$0xff]
        %v478 = vld [vmem:[%s357 + $0x48] sm:$0xff]
        %v479 = vld [vmem:[%s357 + $0x50] sm:$0xff]
        %v480 = vld [vmem:[%s357 + $0x58] sm:$0xff]
        %v481 = vld [vmem:[%s357 + $0x60] sm:$0xff]
        %v482 = vld [vmem:[%s357 + $0x68] sm:$0xff]
        %v483 = vld [vmem:[%s357 + $0x70] sm:$0xff]
        %v484 = vld [vmem:[%s357 + $0x78] sm:$0xff]
        %v485 = vld [vmem:[%s357 + $0x80] sm:$0xff]
        %v486 = vld [vmem:[%s357 + $0x88] sm:$0xff]
        %v487 = vld [vmem:[%s357 + $0x90] sm:$0xff]
        %v488 = vld [vmem:[%s357 + $0x98] sm:$0xff]
        %v489 = vld [vmem:[%s357 + $0xa0] sm:$0xff]
        %v490 = vld [vmem:[%s357 + $0xa8] sm:$0xff]
        %v491 = vld [vmem:[%s357 + $0xb0] sm:$0xff]
        %v492 = vld [vmem:[%s357 + $0xb8] sm:$0xff]
        %v493 = vld [vmem:[%s357 + $0xc0] sm:$0xff]
        %v494 = vld [vmem:[%s357 + $0xc8] sm:$0xff]
        %v495 = vld [vmem:[%s357 + $0xd0] sm:$0xff]
        %v496 = vld [vmem:[%s357 + $0xd8] sm:$0xff]
        %v497 = vld [vmem:[%s357 + $0xe0] sm:$0xff]
        %v498 = vld [vmem:[%s357 + $0xe8] sm:$0xff]
        %v499 = vld [vmem:[%s357 + $0xf0] sm:$0xff]
        %v500 = vld [vmem:[%s357 + $0xf8] sm:$0xff]
        %v501 = vld [vmem:[%s391] sm:$0xff]
        %v502 = vld [vmem:[%s391 + $0x8] sm:$0xff]
        %v503 = vld [vmem:[%s391 + $0x10] sm:$0xff]
        %v504 = vld [vmem:[%s391 + $0x18] sm:$0xff]
        %v505 = vld [vmem:[%s391 + $0x20] sm:$0xff]
        %v506 = vld [vmem:[%s391 + $0x28] sm:$0xff]
        %v507 = vld [vmem:[%s391 + $0x30] sm:$0xff]
        %v508 = vld [vmem:[%s391 + $0x38] sm:$0xff]
        %v509 = vld [vmem:[%s391 + $0x40] sm:$0xff]
        %v510 = vld [vmem:[%s391 + $0x48] sm:$0xff]
        %v511 = vld [vmem:[%s391 + $0x50] sm:$0xff]
        %v512 = vld [vmem:[%s391 + $0x58] sm:$0xff]
        %v513 = vld [vmem:[%s391 + $0x60] sm:$0xff]
        %v514 = vld [vmem:[%s391 + $0x68] sm:$0xff]
        %v515 = vld [vmem:[%s391 + $0x70] sm:$0xff]
        %v516 = vld [vmem:[%s391 + $0x78] sm:$0xff]
        %v517 = vld [vmem:[%s391 + $0x80] sm:$0xff]
        %v518 = vld [vmem:[%s391 + $0x88] sm:$0xff]
        %v519 = vld [vmem:[%s391 + $0x90] sm:$0xff]
        %v520 = vld [vmem:[%s391 + $0x98] sm:$0xff]
        %v521 = vld [vmem:[%s391 + $0xa0] sm:$0xff]
        %v522 = vld [vmem:[%s391 + $0xa8] sm:$0xff]
        %v523 = vld [vmem:[%s391 + $0xb0] sm:$0xff]
        %v524 = vld [vmem:[%s391 + $0xb8] sm:$0xff]
        %v525 = vld [vmem:[%s391 + $0xc0] sm:$0xff]
        %v526 = vld [vmem:[%s391 + $0xc8] sm:$0xff]
        %v527 = vld [vmem:[%s391 + $0xd0] sm:$0xff]
        %v528 = vld [vmem:[%s391 + $0xd8] sm:$0xff]
        %v529 = vld [vmem:[%s391 + $0xe0] sm:$0xff]
        %v530 = vld [vmem:[%s391 + $0xe8] sm:$0xff]
        %v531 = vld [vmem:[%s391 + $0xf0] sm:$0xff]
        %v532 = vld [vmem:[%s391 + $0xf8] sm:$0xff]
        %v533 = vpack.c.bf16 %v502, %v501
        %v534 = vpack.c.bf16 %v504, %v503
        %v535 = vpack.c.bf16 %v506, %v505
        %v536 = vpack.c.bf16 %v508, %v507
        %v537 = vpack.c.bf16 %v510, %v509
        %v538 = vpack.c.bf16 %v512, %v511
        %v539 = vpack.c.bf16 %v514, %v513
        %v540 = vpack.c.bf16 %v516, %v515
        %v541 = vpack.c.bf16 %v518, %v517
        %v542 = vpack.c.bf16 %v520, %v519
        %v543 = vpack.c.bf16 %v522, %v521
        %v544 = vpack.c.bf16 %v524, %v523
        %v545 = vpack.c.bf16 %v526, %v525
        %v546 = vpack.c.bf16 %v528, %v527
        %v547 = vpack.c.bf16 %v530, %v529
        %v548 = vpack.c.bf16 %v532, %v531
        %v581 = vunpack.c.l.b16 %v469
        %v582 = vunpack.c.h.b16 %v469
        %v583 = vunpack.c.l.b16 %v470
        %v584 = vunpack.c.h.b16 %v470
        %v585 = vunpack.c.l.b16 %v471
        %v586 = vunpack.c.h.b16 %v471
        %v587 = vunpack.c.l.b16 %v472
        %v588 = vunpack.c.h.b16 %v472
        %v589 = vunpack.c.l.b16 %v473
        %v590 = vunpack.c.h.b16 %v473
        %v591 = vunpack.c.l.b16 %v474
        %v592 = vunpack.c.h.b16 %v474
        %v593 = vunpack.c.l.b16 %v475
        %v594 = vunpack.c.h.b16 %v475
        %v595 = vunpack.c.l.b16 %v476
        %v596 = vunpack.c.h.b16 %v476
        %v597 = vunpack.c.l.b16 %v477
        %v598 = vunpack.c.h.b16 %v477
        %v599 = vunpack.c.l.b16 %v478
        %v600 = vunpack.c.h.b16 %v478
        %v601 = vunpack.c.l.b16 %v479
        %v602 = vunpack.c.h.b16 %v479
        %v603 = vunpack.c.l.b16 %v480
        %v604 = vunpack.c.h.b16 %v480
        %v605 = vunpack.c.l.b16 %v481
        %v606 = vunpack.c.h.b16 %v481
        %v607 = vunpack.c.l.b16 %v482
        %v608 = vunpack.c.h.b16 %v482
        %v609 = vunpack.c.l.b16 %v483
        %v610 = vunpack.c.h.b16 %v483
        %v611 = vunpack.c.l.b16 %v484
        %v612 = vunpack.c.h.b16 %v484
        %v613 = vunpack.c.l.b16 %v485
        %v614 = vunpack.c.h.b16 %v485
        %v615 = vunpack.c.l.b16 %v486
        %v616 = vunpack.c.h.b16 %v486
        %v617 = vunpack.c.l.b16 %v487
        %v618 = vunpack.c.h.b16 %v487
        %v619 = vunpack.c.l.b16 %v488
        %v620 = vunpack.c.h.b16 %v488
        %v621 = vunpack.c.l.b16 %v489
        %v622 = vunpack.c.h.b16 %v489
        %v623 = vunpack.c.l.b16 %v490
        %v624 = vunpack.c.h.b16 %v490
        %v625 = vunpack.c.l.b16 %v491
        %v626 = vunpack.c.h.b16 %v491
        %v627 = vunpack.c.l.b16 %v492
        %v628 = vunpack.c.h.b16 %v492
        %v629 = vunpack.c.l.b16 %v493
        %v630 = vunpack.c.h.b16 %v493
        %v631 = vunpack.c.l.b16 %v494
        %v632 = vunpack.c.h.b16 %v494
        %v633 = vunpack.c.l.b16 %v495
        %v634 = vunpack.c.h.b16 %v495
        %v635 = vunpack.c.l.b16 %v496
        %v636 = vunpack.c.h.b16 %v496
        %v637 = vunpack.c.l.b16 %v497
        %v638 = vunpack.c.h.b16 %v497
        %v639 = vunpack.c.l.b16 %v498
        %v640 = vunpack.c.h.b16 %v498
        %v641 = vunpack.c.l.b16 %v499
        %v642 = vunpack.c.h.b16 %v499
        %v643 = vunpack.c.l.b16 %v500
        %v644 = vunpack.c.h.b16 %v500
        %v645 = vpack.c.b16 %v583, %v581
        %v646 = vpack.c.b16 %v584, %v582
        %v647 = vpack.c.b16 %v587, %v585
        %v648 = vpack.c.b16 %v588, %v586
        %v649 = vpack.c.b16 %v591, %v589
        %v650 = vpack.c.b16 %v592, %v590
        %v651 = vpack.c.b16 %v595, %v593
        %v652 = vpack.c.b16 %v596, %v594
        %v653 = vpack.c.b16 %v599, %v597
        %v654 = vpack.c.b16 %v600, %v598
        %v655 = vpack.c.b16 %v603, %v601
        %v656 = vpack.c.b16 %v604, %v602
        %v657 = vpack.c.b16 %v607, %v605
        %v658 = vpack.c.b16 %v608, %v606
        %v659 = vpack.c.b16 %v611, %v609
        %v660 = vpack.c.b16 %v612, %v610
        %v661 = vpack.c.b16 %v615, %v613
        %v662 = vpack.c.b16 %v616, %v614
        %v663 = vpack.c.b16 %v619, %v617
        %v664 = vpack.c.b16 %v620, %v618
        %v665 = vpack.c.b16 %v623, %v621
        %v666 = vpack.c.b16 %v624, %v622
        %v667 = vpack.c.b16 %v627, %v625
        %v668 = vpack.c.b16 %v628, %v626
        %v669 = vpack.c.b16 %v631, %v629
        %v670 = vpack.c.b16 %v632, %v630
        %v671 = vpack.c.b16 %v635, %v633
        %v672 = vpack.c.b16 %v636, %v634
        %v673 = vpack.c.b16 %v639, %v637
        %v674 = vpack.c.b16 %v640, %v638
        %v675 = vpack.c.b16 %v643, %v641
        %v676 = vpack.c.b16 %v644, %v642
        %709 = vmatprep.subr.bf16.mxu0 0
        %710 = vmatpush1.bf16.msra.mxu0 %v533
        %711 = vmatprep.subr.bf16.mxu0 0
        %712 = vmatpush1.bf16.msra.mxu0 %v534
        %713 = vmatprep.subr.bf16.mxu0 0
        %714 = vmatpush1.bf16.msra.mxu0 %v535
        %715 = vmatprep.subr.bf16.mxu0 0
        %716 = vmatpush1.bf16.msra.mxu0 %v536
        %717 = vmatprep.subr.bf16.mxu0 0
        %718 = vmatpush1.bf16.msra.mxu0 %v537
        %719 = vmatprep.subr.bf16.mxu0 0
        %720 = vmatpush1.bf16.msra.mxu0 %v538
        %721 = vmatprep.subr.bf16.mxu0 0
        %722 = vmatpush1.bf16.msra.mxu0 %v539
        %723 = vmatprep.subr.bf16.mxu0 0
        %724 = vmatpush1.bf16.msra.mxu0 %v540
        %725 = vmatprep.subr.bf16.mxu0 0
        %726 = vmatpush1.bf16.msra.mxu0 %v541
        %727 = vmatprep.subr.bf16.mxu0 0
        %728 = vmatpush1.bf16.msra.mxu0 %v542
        %729 = vmatprep.subr.bf16.mxu0 0
        %730 = vmatpush1.bf16.msra.mxu0 %v543
        %731 = vmatprep.subr.bf16.mxu0 0
        %732 = vmatpush1.bf16.msra.mxu0 %v544
        %733 = vmatprep.subr.bf16.mxu0 0
        %734 = vmatpush1.bf16.msra.mxu0 %v545
        %735 = vmatprep.subr.bf16.mxu0 0
        %736 = vmatpush1.bf16.msra.mxu0 %v546
        %737 = vmatprep.subr.bf16.mxu0 0
        %738 = vmatpush1.bf16.msra.mxu0 %v547
        %739 = vmatprep.subr.bf16.mxu0 0
        %740 = vmatpush1.bf16.msra.mxu0 %v548
        %741 = vmatprep.mubr.bf16.mxu0 %v646
        %742 = vmatmul.mubr.bf16.gmra.mrb[0].mxu0 %v645
        %v743 = vpop.f32.mrb[0].mxu0
        %v744 = vadd.f32 0.0, %v743
        %v745 = vpop.f32.mrb[0].mxu0
        %v746 = vpop.f32.mrb[0].mxu0
        %v747 = vadd.f32 0.0, %v746
        %v748 = vpop.f32.mrb[0].mxu0
        %749 = vmatprep.mubr.bf16.mxu0 %v648
        %750 = vmatmul.mubr.bf16.gmra.mrb[0].mxu0 %v647
        %v751 = vpop.f32.mrb[0].mxu0
        %v752 = vadd.f32 0.0, %v751
        %v753 = vpop.f32.mrb[0].mxu0
        %v754 = vpop.f32.mrb[0].mxu0
        %v755 = vadd.f32 0.0, %v754
        %v756 = vpop.f32.mrb[0].mxu0
        %757 = vmatprep.mubr.bf16.mxu0 %v650
        %758 = vmatmul.mubr.bf16.gmra.mrb[0].mxu0 %v649
        %v759 = vpop.f32.mrb[0].mxu0
        %v760 = vadd.f32 0.0, %v759
        %v761 = vpop.f32.mrb[0].mxu0
        %v762 = vpop.f32.mrb[0].mxu0
        %v763 = vadd.f32 0.0, %v762
        %v764 = vpop.f32.mrb[0].mxu0
        %765 = vmatprep.mubr.bf16.mxu0 %v652
        %766 = vmatmul.mubr.bf16.gmra.mrb[0].mxu0 %v651
        %v767 = vpop.f32.mrb[0].mxu0
        %v768 = vadd.f32 0.0, %v767
        %v769 = vpop.f32.mrb[0].mxu0
        %v770 = vpop.f32.mrb[0].mxu0
        %v771 = vadd.f32 0.0, %v770
        %v772 = vpop.f32.mrb[0].mxu0
        %773 = vmatprep.mubr.bf16.mxu0 %v654
        %774 = vmatmul.mubr.bf16.gmra.mrb[0].mxu0 %v653
        %v775 = vpop.f32.mrb[0].mxu0
        %v776 = vadd.f32 0.0, %v775
        %v777 = vpop.f32.mrb[0].mxu0
        %v778 = vpop.f32.mrb[0].mxu0
        %v779 = vadd.f32 0.0, %v778
        %v780 = vpop.f32.mrb[0].mxu0
        %781 = vmatprep.mubr.bf16.mxu0 %v656
        %782 = vmatmul.mubr.bf16.gmra.mrb[0].mxu0 %v655
        %v783 = vpop.f32.mrb[0].mxu0
        %v784 = vadd.f32 0.0, %v783
        %v785 = vpop.f32.mrb[0].mxu0
        %v786 = vpop.f32.mrb[0].mxu0
        %v787 = vadd.f32 0.0, %v786
        %v788 = vpop.f32.mrb[0].mxu0
        %789 = vmatprep.mubr.bf16.mxu0 %v658
        %790 = vmatmul.mubr.bf16.gmra.mrb[0].mxu0 %v657
        %v791 = vpop.f32.mrb[0].mxu0
        %v792 = vadd.f32 0.0, %v791
        %v793 = vpop.f32.mrb[0].mxu0
        %v794 = vpop.f32.mrb[0].mxu0
        %v795 = vadd.f32 0.0, %v794
        %v796 = vpop.f32.mrb[0].mxu0
        %797 = vmatprep.mubr.bf16.mxu0 %v660
        %798 = vmatmul.mubr.bf16.gmra.mrb[0].mxu0 %v659
        %v799 = vpop.f32.mrb[0].mxu0
        %v800 = vadd.f32 0.0, %v799
        %v801 = vpop.f32.mrb[0].mxu0
        %v802 = vpop.f32.mrb[0].mxu0
        %v803 = vadd.f32 0.0, %v802
        %v804 = vpop.f32.mrb[0].mxu0
        %805 = vmatprep.mubr.bf16.mxu0 %v662
        %806 = vmatmul.mubr.bf16.gmra.mrb[0].mxu0 %v661
        %v807 = vpop.f32.mrb[0].mxu0
        %v808 = vadd.f32 0.0, %v807
        %v809 = vpop.f32.mrb[0].mxu0
        %v810 = vpop.f32.mrb[0].mxu0
        %v811 = vadd.f32 0.0, %v810
        %v812 = vpop.f32.mrb[0].mxu0
        %813 = vmatprep.mubr.bf16.mxu0 %v664
        %814 = vmatmul.mubr.bf16.gmra.mrb[0].mxu0 %v663
        %v815 = vpop.f32.mrb[0].mxu0
        %v816 = vadd.f32 0.0, %v815
        %v817 = vpop.f32.mrb[0].mxu0
        %v818 = vpop.f32.mrb[0].mxu0
        %v819 = vadd.f32 0.0, %v818
        %v820 = vpop.f32.mrb[0].mxu0
        %821 = vmatprep.mubr.bf16.mxu0 %v666
        %822 = vmatmul.mubr.bf16.gmra.mrb[0].mxu0 %v665
        %v823 = vpop.f32.mrb[0].mxu0
        %v824 = vadd.f32 0.0, %v823
        %v825 = vpop.f32.mrb[0].mxu0
        %v826 = vpop.f32.mrb[0].mxu0
        %v827 = vadd.f32 0.0, %v826
        %v828 = vpop.f32.mrb[0].mxu0
        %829 = vmatprep.mubr.bf16.mxu0 %v668
        %830 = vmatmul.mubr.bf16.gmra.mrb[0].mxu0 %v667
        %v831 = vpop.f32.mrb[0].mxu0
        %v832 = vadd.f32 0.0, %v831
        %v833 = vpop.f32.mrb[0].mxu0
        %v834 = vpop.f32.mrb[0].mxu0
        %v835 = vadd.f32 0.0, %v834
        %v836 = vpop.f32.mrb[0].mxu0
        %837 = vmatprep.mubr.bf16.mxu0 %v670
        %838 = vmatmul.mubr.bf16.gmra.mrb[0].mxu0 %v669
        %v839 = vpop.f32.mrb[0].mxu0
        %v840 = vadd.f32 0.0, %v839
        %v841 = vpop.f32.mrb[0].mxu0
        %v842 = vpop.f32.mrb[0].mxu0
        %v843 = vadd.f32 0.0, %v842
        %v844 = vpop.f32.mrb[0].mxu0
        %845 = vmatprep.mubr.bf16.mxu0 %v672
        %846 = vmatmul.mubr.bf16.gmra.mrb[0].mxu0 %v671
        %v847 = vpop.f32.mrb[0].mxu0
        %v848 = vadd.f32 0.0, %v847
        %v849 = vpop.f32.mrb[0].mxu0
        %v850 = vpop.f32.mrb[0].mxu0
        %v851 = vadd.f32 0.0, %v850
        %v852 = vpop.f32.mrb[0].mxu0
        %853 = vmatprep.mubr.bf16.mxu0 %v674
        %854 = vmatmul.mubr.bf16.gmra.mrb[0].mxu0 %v673
        %v855 = vpop.f32.mrb[0].mxu0
        %v856 = vadd.f32 0.0, %v855
        %v857 = vpop.f32.mrb[0].mxu0
        %v858 = vpop.f32.mrb[0].mxu0
        %v859 = vadd.f32 0.0, %v858
        %v860 = vpop.f32.mrb[0].mxu0
        %861 = vmatprep.mubr.bf16.mxu0 %v676
        %862 = vmatmul.mubr.bf16.gmra.mrb[0].mxu0 %v675
        %v863 = vpop.f32.mrb[0].mxu0
        %v864 = vadd.f32 0.0, %v863
        %v865 = vpop.f32.mrb[0].mxu0
        %v866 = vpop.f32.mrb[0].mxu0
        %v867 = vadd.f32 0.0, %v866
        %v868 = vpop.f32.mrb[0].mxu0
        %869 = vdwg.mxu0
        %v870 = vadd.f32 %v437, %v744
        %v871 = vadd.f32 %v438, %v747
        %v872 = vadd.f32 %v439, %v752
        %v873 = vadd.f32 %v440, %v755
        %v874 = vadd.f32 %v441, %v760
        %v875 = vadd.f32 %v442, %v763
        %v876 = vadd.f32 %v443, %v768
        %v877 = vadd.f32 %v444, %v771
        %v878 = vadd.f32 %v445, %v776
        %v879 = vadd.f32 %v446, %v779
        %v880 = vadd.f32 %v447, %v784
        %v881 = vadd.f32 %v448, %v787
        %v882 = vadd.f32 %v449, %v792
        %v883 = vadd.f32 %v450, %v795
        %v884 = vadd.f32 %v451, %v800
        %v885 = vadd.f32 %v452, %v803
        %v886 = vadd.f32 %v453, %v808
        %v887 = vadd.f32 %v454, %v811
        %v888 = vadd.f32 %v455, %v816
        %v889 = vadd.f32 %v456, %v819
        %v890 = vadd.f32 %v457, %v824
        %v891 = vadd.f32 %v458, %v827
        %v892 = vadd.f32 %v459, %v832
        %v893 = vadd.f32 %v460, %v835
        %v894 = vadd.f32 %v461, %v840
        %v895 = vadd.f32 %v462, %v843
        %v896 = vadd.f32 %v463, %v848
        %v897 = vadd.f32 %v464, %v851
        %v898 = vadd.f32 %v465, %v856
        %v899 = vadd.f32 %v466, %v859
        %v900 = vadd.f32 %v467, %v864
        %v901 = vadd.f32 %v468, %v867
        %vm902 = vcmask 130048
        %903 = vst.msk [vmem:[#allocation2] sm:$0xff] %vm902, %v870
        %904 = vst.msk [vmem:[#allocation2 + $0x8] sm:$0xff] %vm902, %v871
        %905 = vst.msk [vmem:[#allocation2 + $0x10] sm:$0xff] %vm902, %v872
        %906 = vst.msk [vmem:[#allocation2 + $0x18] sm:$0xff] %vm902, %v873
        %907 = vst.msk [vmem:[#allocation2 + $0x20] sm:$0xff] %vm902, %v874
        %908 = vst.msk [vmem:[#allocation2 + $0x28] sm:$0xff] %vm902, %v875
        %909 = vst.msk [vmem:[#allocation2 + $0x30] sm:$0xff] %vm902, %v876
        %910 = vst.msk [vmem:[#allocation2 + $0x38] sm:$0xff] %vm902, %v877
        %911 = vst.msk [vmem:[#allocation2 + $0x40] sm:$0xff] %vm902, %v878
        %912 = vst.msk [vmem:[#allocation2 + $0x48] sm:$0xff] %vm902, %v879
        %913 = vst.msk [vmem:[#allocation2 + $0x50] sm:$0xff] %vm902, %v880
        %914 = vst.msk [vmem:[#allocation2 + $0x58] sm:$0xff] %vm902, %v881
        %915 = vst.msk [vmem:[#allocation2 + $0x60] sm:$0xff] %vm902, %v882
        %916 = vst.msk [vmem:[#allocation2 + $0x68] sm:$0xff] %vm902, %v883
        %917 = vst.msk [vmem:[#allocation2 + $0x70] sm:$0xff] %vm902, %v884
        %918 = vst.msk [vmem:[#allocation2 + $0x78] sm:$0xff] %vm902, %v885
        %919 = vst.msk [vmem:[#allocation2 + $0x80] sm:$0xff] %vm902, %v886
        %920 = vst.msk [vmem:[#allocation2 + $0x88] sm:$0xff] %vm902, %v887
        %921 = vst.msk [vmem:[#allocation2 + $0x90] sm:$0xff] %vm902, %v888
        %922 = vst.msk [vmem:[#allocation2 + $0x98] sm:$0xff] %vm902, %v889
        %923 = vst.msk [vmem:[#allocation2 + $0xa0] sm:$0xff] %vm902, %v890
        %924 = vst.msk [vmem:[#allocation2 + $0xa8] sm:$0xff] %vm902, %v891
        %925 = vst.msk [vmem:[#allocation2 + $0xb0] sm:$0xff] %vm902, %v892
        %926 = vst.msk [vmem:[#allocation2 + $0xb8] sm:$0xff] %vm902, %v893
        %927 = vst.msk [vmem:[#allocation2 + $0xc0] sm:$0xff] %vm902, %v894
        %928 = vst.msk [vmem:[#allocation2 + $0xc8] sm:$0xff] %vm902, %v895
        %929 = vst.msk [vmem:[#allocation2 + $0xd0] sm:$0xff] %vm902, %v896
        %930 = vst.msk [vmem:[#allocation2 + $0xd8] sm:$0xff] %vm902, %v897
        %931 = vst.msk [vmem:[#allocation2 + $0xe0] sm:$0xff] %vm902, %v898
        %932 = vst.msk [vmem:[#allocation2 + $0xe8] sm:$0xff] %vm902, %v899
        %933 = vst.msk [vmem:[#allocation2 + $0xf0] sm:$0xff] %vm902, %v900
        %934 = vst.msk [vmem:[#allocation2 + $0xf8] sm:$0xff] %vm902, %v901
        %p935 = scmp.eq.s32.totalorder %s20, 1
        // Predicated region
        $region79: #{ngcfmf_concat_mlp_forward.6} parent=69 // pred_check
          %p936 = pneg %p935
        $region80: #{ngcfmf_concat_mlp_forward.6} parent=69 // pred_check_branch
          %938 = sbr.rel (%p936) target = $region82
        $region81: #{ngcfmf_concat_mlp_forward.6} parent=69 // pred_region
          %v939 = vld [vmem:[#allocation2] sm:$0xff]
          %v940 = vld [vmem:[#allocation2 + $0x8] sm:$0xff]
          %v941 = vld [vmem:[#allocation2 + $0x10] sm:$0xff]
          %v942 = vld [vmem:[#allocation2 + $0x18] sm:$0xff]
          %v943 = vld [vmem:[#allocation2 + $0x20] sm:$0xff]
          %v944 = vld [vmem:[#allocation2 + $0x28] sm:$0xff]
          %v945 = vld [vmem:[#allocation2 + $0x30] sm:$0xff]
          %v946 = vld [vmem:[#allocation2 + $0x38] sm:$0xff]
          %v947 = vld [vmem:[#allocation2 + $0x40] sm:$0xff]
          %v948 = vld [vmem:[#allocation2 + $0x48] sm:$0xff]
          %v949 = vld [vmem:[#allocation2 + $0x50] sm:$0xff]
          %v950 = vld [vmem:[#allocation2 + $0x58] sm:$0xff]
          %v951 = vld [vmem:[#allocation2 + $0x60] sm:$0xff]
          %v952 = vld [vmem:[#allocation2 + $0x68] sm:$0xff]
          %v953 = vld [vmem:[#allocation2 + $0x70] sm:$0xff]
          %v954 = vld [vmem:[#allocation2 + $0x78] sm:$0xff]
          %v955 = vld [vmem:[#allocation2 + $0x80] sm:$0xff]
          %v956 = vld [vmem:[#allocation2 + $0x88] sm:$0xff]
          %v957 = vld [vmem:[#allocation2 + $0x90] sm:$0xff]
          %v958 = vld [vmem:[#allocation2 + $0x98] sm:$0xff]
          %v959 = vld [vmem:[#allocation2 + $0xa0] sm:$0xff]
          %v960 = vld [vmem:[#allocation2 + $0xa8] sm:$0xff]
          %v961 = vld [vmem:[#allocation2 + $0xb0] sm:$0xff]
          %v962 = vld [vmem:[#allocation2 + $0xb8] sm:$0xff]
          %v963 = vld [vmem:[#allocation2 + $0xc0] sm:$0xff]
          %v964 = vld [vmem:[#allocation2 + $0xc8] sm:$0xff]
          %v965 = vld [vmem:[#allocation2 + $0xd0] sm:$0xff]
          %v966 = vld [vmem:[#allocation2 + $0xd8] sm:$0xff]
          %v967 = vld [vmem:[#allocation2 + $0xe0] sm:$0xff]
          %v968 = vld [vmem:[#allocation2 + $0xe8] sm:$0xff]
          %v969 = vld [vmem:[#allocation2 + $0xf0] sm:$0xff]
          %v970 = vld [vmem:[#allocation2 + $0xf8] sm:$0xff]
          %v971 = vld [vmem:[%s2] sm:$0xff]
          %v972 = vld [vmem:[%s2 + $0x8] sm:$0xff]
          %v973 = vld [vmem:[%s3] sm:$0x1]
          %v975 = vlaneseq
          %v976 = vshrl.u32 %v975, 7
          %v977 = vsub.s32 0, %v976
          %v978 = vrot.slane %v973, %v977
          %v981 = vsel %vm902, %v939, 0
          %v984 = vsel %vm902, %v940, 0
          %v987 = vsel %vm902, %v941, 0
          %v990 = vsel %vm902, %v942, 0
          %v993 = vsel %vm902, %v943, 0
          %v996 = vsel %vm902, %v944, 0
          %v999 = vsel %vm902, %v945, 0
          %v1002 = vsel %vm902, %v946, 0
          %v1005 = vsel %vm902, %v947, 0
          %v1008 = vsel %vm902, %v948, 0
          %v1011 = vsel %vm902, %v949, 0
          %v1014 = vsel %vm902, %v950, 0
          %v1017 = vsel %vm902, %v951, 0
          %v1020 = vsel %vm902, %v952, 0
          %v1023 = vsel %vm902, %v953, 0
          %v1026 = vsel %vm902, %v954, 0
          %v1029 = vsel %vm902, %v955, 0
          %v1032 = vsel %vm902, %v956, 0
          %v1035 = vsel %vm902, %v957, 0
          %v1038 = vsel %vm902, %v958, 0
          %v1041 = vsel %vm902, %v959, 0
          %v1044 = vsel %vm902, %v960, 0
          %v1047 = vsel %vm902, %v961, 0
          %v1050 = vsel %vm902, %v962, 0
          %v1053 = vsel %vm902, %v963, 0
          %v1056 = vsel %vm902, %v964, 0
          %v1059 = vsel %vm902, %v965, 0
          %v1062 = vsel %vm902, %v966, 0
          %v1065 = vsel %vm902, %v967, 0
          %v1068 = vsel %vm902, %v968, 0
          %v1071 = vsel %vm902, %v969, 0
          %v1074 = vsel %vm902, %v970, 0
          %1076 = vmatprep.subr.mxu0 0.0
          %1077 = vmatpush1.msra.mxu0 %v971
          %1078 = vmatprep.subr.mxu0 0.0
          %1079 = vmatpush1.msra.mxu0 %v972
          %1080 = vmatprep.subr.mxu0 0.0
          %1081 = vmatpush1.msra.mxu0 0.0
          %1082 = vmatprep.subr.mxu0 0.0
          %1083 = vmatpush1.msra.mxu0 0.0
          %1084 = vmatprep.subr.mxu0 0.0
          %1085 = vmatpush1.msra.mxu0 0.0
          %1086 = vmatprep.subr.mxu0 0.0
          %1087 = vmatpush1.msra.mxu0 0.0
          %1088 = vmatprep.subr.mxu0 0.0
          %1089 = vmatpush1.msra.mxu0 0.0
          %1090 = vmatprep.subr.mxu0 0.0
          %1091 = vmatpush1.msra.mxu0 0.0
          %1092 = vmatprep.subr.mxu0 0.0
          %1093 = vmatpush1.msra.mxu0 0.0
          %1094 = vmatprep.subr.mxu0 0.0
          %1095 = vmatpush1.msra.mxu0 0.0
          %1096 = vmatprep.subr.mxu0 0.0
          %1097 = vmatpush1.msra.mxu0 0.0
          %1098 = vmatprep.subr.mxu0 0.0
          %1099 = vmatpush1.msra.mxu0 0.0
          %1100 = vmatprep.subr.mxu0 0.0
          %1101 = vmatpush1.msra.mxu0 0.0
          %1102 = vmatprep.subr.mxu0 0.0
          %1103 = vmatpush1.msra.mxu0 0.0
          %1104 = vmatprep.subr.mxu0 0.0
          %1105 = vmatpush1.msra.mxu0 0.0
          %1106 = vmatprep.subr.mxu0 0.0
          %1107 = vmatpush1.msra.mxu0 0.0
          %1108 = vmatprep.subr.mxu0 0.0
          %1109 = vmatpush1.msra.mxu0 0.0
          %1110 = vmatprep.subr.mxu0 0.0
          %1111 = vmatpush1.msra.mxu0 0.0
          %1112 = vmatprep.subr.mxu0 0.0
          %1113 = vmatpush1.msra.mxu0 0.0
          %1114 = vmatprep.subr.mxu0 0.0
          %1115 = vmatpush1.msra.mxu0 0.0
          %1116 = vmatprep.subr.mxu0 0.0
          %1117 = vmatpush1.msra.mxu0 0.0
          %1118 = vmatprep.subr.mxu0 0.0
          %1119 = vmatpush1.msra.mxu0 0.0
          %1120 = vmatprep.subr.mxu0 0.0
          %1121 = vmatpush1.msra.mxu0 0.0
          %1122 = vmatprep.subr.mxu0 0.0
          %1123 = vmatpush1.msra.mxu0 0.0
          %1124 = vmatprep.subr.mxu0 0.0
          %1125 = vmatpush1.msra.mxu0 0.0
          %1126 = vmatprep.subr.mxu0 0.0
          %1127 = vmatpush1.msra.mxu0 0.0
          %1128 = vmatprep.subr.mxu0 0.0
          %1129 = vmatpush1.msra.mxu0 0.0
          %1130 = vmatprep.subr.mxu0 0.0
          %1131 = vmatpush1.msra.mxu0 0.0
          %1132 = vmatprep.subr.mxu0 0.0
          %1133 = vmatpush1.msra.mxu0 0.0
          %1134 = vmatprep.subr.mxu0 0.0
          %1135 = vmatpush1.msra.mxu0 0.0
          %1136 = vmatprep.subr.mxu0 0.0
          %1137 = vmatpush1.msra.mxu0 0.0
          %1138 = vmatprep.subr.mxu0 0.0
          %1139 = vmatpush1.msra.mxu0 0.0
          %1140 = vmatprep.mubr.f32.mxu0 0.0
          %1141 = vmatmul.mubr.f32.gmra.mrb[0].mxu0 %v981
          %v1142 = vpop.f32.mrb[0].mxu0
          %v1143 = vadd.f32 %v978, %v1142
          %v1144 = vpop.f32.mrb[0].mxu0
          %1145 = vmatprep.mubr.f32.mxu0 0.0
          %1146 = vmatmul.mubr.f32.gmra.mrb[0].mxu0 %v984
          %v1147 = vpop.f32.mrb[0].mxu0
          %v1148 = vadd.f32 %v978, %v1147
          %v1149 = vpop.f32.mrb[0].mxu0
          %1150 = vmatprep.mubr.f32.mxu0 0.0
          %1151 = vmatmul.mubr.f32.gmra.mrb[0].mxu0 %v987
          %v1152 = vpop.f32.mrb[0].mxu0
          %v1153 = vadd.f32 %v978, %v1152
          %v1154 = vpop.f32.mrb[0].mxu0
          %1155 = vmatprep.mubr.f32.mxu0 0.0
          %1156 = vmatmul.mubr.f32.gmra.mrb[0].mxu0 %v990
          %v1157 = vpop.f32.mrb[0].mxu0
          %v1158 = vadd.f32 %v978, %v1157
          %v1159 = vpop.f32.mrb[0].mxu0
          %1160 = vmatprep.mubr.f32.mxu0 0.0
          %1161 = vmatmul.mubr.f32.gmra.mrb[0].mxu0 %v993
          %v1162 = vpop.f32.mrb[0].mxu0
          %v1163 = vadd.f32 %v978, %v1162
          %v1164 = vpop.f32.mrb[0].mxu0
          %1165 = vmatprep.mubr.f32.mxu0 0.0
          %1166 = vmatmul.mubr.f32.gmra.mrb[0].mxu0 %v996
          %v1167 = vpop.f32.mrb[0].mxu0
          %v1168 = vadd.f32 %v978, %v1167
          %v1169 = vpop.f32.mrb[0].mxu0
          %1170 = vmatprep.mubr.f32.mxu0 0.0
          %1171 = vmatmul.mubr.f32.gmra.mrb[0].mxu0 %v999
          %v1172 = vpop.f32.mrb[0].mxu0
          %v1173 = vadd.f32 %v978, %v1172
          %v1174 = vpop.f32.mrb[0].mxu0
          %1175 = vmatprep.mubr.f32.mxu0 0.0
          %1176 = vmatmul.mubr.f32.gmra.mrb[0].mxu0 %v1002
          %v1177 = vpop.f32.mrb[0].mxu0
          %v1178 = vadd.f32 %v978, %v1177
          %v1179 = vpop.f32.mrb[0].mxu0
          %1180 = vmatprep.mubr.f32.mxu0 0.0
          %1181 = vmatmul.mubr.f32.gmra.mrb[0].mxu0 %v1005
          %v1182 = vpop.f32.mrb[0].mxu0
          %v1183 = vadd.f32 %v978, %v1182
          %v1184 = vpop.f32.mrb[0].mxu0
          %1185 = vmatprep.mubr.f32.mxu0 0.0
          %1186 = vmatmul.mubr.f32.gmra.mrb[0].mxu0 %v1008
          %v1187 = vpop.f32.mrb[0].mxu0
          %v1188 = vadd.f32 %v978, %v1187
          %v1189 = vpop.f32.mrb[0].mxu0
          %1190 = vmatprep.mubr.f32.mxu0 0.0
          %1191 = vmatmul.mubr.f32.gmra.mrb[0].mxu0 %v1011
          %v1192 = vpop.f32.mrb[0].mxu0
          %v1193 = vadd.f32 %v978, %v1192
          %v1194 = vpop.f32.mrb[0].mxu0
          %1195 = vmatprep.mubr.f32.mxu0 0.0
          %1196 = vmatmul.mubr.f32.gmra.mrb[0].mxu0 %v1014
          %v1197 = vpop.f32.mrb[0].mxu0
          %v1198 = vadd.f32 %v978, %v1197
          %v1199 = vpop.f32.mrb[0].mxu0
          %1200 = vmatprep.mubr.f32.mxu0 0.0
          %1201 = vmatmul.mubr.f32.gmra.mrb[0].mxu0 %v1017
          %v1202 = vpop.f32.mrb[0].mxu0
          %v1203 = vadd.f32 %v978, %v1202
          %v1204 = vpop.f32.mrb[0].mxu0
          %1205 = vmatprep.mubr.f32.mxu0 0.0
          %1206 = vmatmul.mubr.f32.gmra.mrb[0].mxu0 %v1020
          %v1207 = vpop.f32.mrb[0].mxu0
          %v1208 = vadd.f32 %v978, %v1207
          %v1209 = vpop.f32.mrb[0].mxu0
          %1210 = vmatprep.mubr.f32.mxu0 0.0
          %1211 = vmatmul.mubr.f32.gmra.mrb[0].mxu0 %v1023
          %v1212 = vpop.f32.mrb[0].mxu0
          %v1213 = vadd.f32 %v978, %v1212
          %v1214 = vpop.f32.mrb[0].mxu0
          %1215 = vmatprep.mubr.f32.mxu0 0.0
          %1216 = vmatmul.mubr.f32.gmra.mrb[0].mxu0 %v1026
          %v1217 = vpop.f32.mrb[0].mxu0
          %v1218 = vadd.f32 %v978, %v1217
          %v1219 = vpop.f32.mrb[0].mxu0
          %1220 = vmatprep.mubr.f32.mxu0 0.0
          %1221 = vmatmul.mubr.f32.gmra.mrb[0].mxu0 %v1029
          %v1222 = vpop.f32.mrb[0].mxu0
          %v1223 = vadd.f32 %v978, %v1222
          %v1224 = vpop.f32.mrb[0].mxu0
          %1225 = vmatprep.mubr.f32.mxu0 0.0
          %1226 = vmatmul.mubr.f32.gmra.mrb[0].mxu0 %v1032
          %v1227 = vpop.f32.mrb[0].mxu0
          %v1228 = vadd.f32 %v978, %v1227
          %v1229 = vpop.f32.mrb[0].mxu0
          %1230 = vmatprep.mubr.f32.mxu0 0.0
          %1231 = vmatmul.mubr.f32.gmra.mrb[0].mxu0 %v1035
          %v1232 = vpop.f32.mrb[0].mxu0
          %v1233 = vadd.f32 %v978, %v1232
          %v1234 = vpop.f32.mrb[0].mxu0
          %1235 = vmatprep.mubr.f32.mxu0 0.0
          %1236 = vmatmul.mubr.f32.gmra.mrb[0].mxu0 %v1038
          %v1237 = vpop.f32.mrb[0].mxu0
          %v1238 = vadd.f32 %v978, %v1237
          %v1239 = vpop.f32.mrb[0].mxu0
          %1240 = vmatprep.mubr.f32.mxu0 0.0
          %1241 = vmatmul.mubr.f32.gmra.mrb[0].mxu0 %v1041
          %v1242 = vpop.f32.mrb[0].mxu0
          %v1243 = vadd.f32 %v978, %v1242
          %v1244 = vpop.f32.mrb[0].mxu0
          %1245 = vmatprep.mubr.f32.mxu0 0.0
          %1246 = vmatmul.mubr.f32.gmra.mrb[0].mxu0 %v1044
          %v1247 = vpop.f32.mrb[0].mxu0
          %v1248 = vadd.f32 %v978, %v1247
          %v1249 = vpop.f32.mrb[0].mxu0
          %1250 = vmatprep.mubr.f32.mxu0 0.0
          %1251 = vmatmul.mubr.f32.gmra.mrb[0].mxu0 %v1047
          %v1252 = vpop.f32.mrb[0].mxu0
          %v1253 = vadd.f32 %v978, %v1252
          %v1254 = vpop.f32.mrb[0].mxu0
          %1255 = vmatprep.mubr.f32.mxu0 0.0
          %1256 = vmatmul.mubr.f32.gmra.mrb[0].mxu0 %v1050
          %v1257 = vpop.f32.mrb[0].mxu0
          %v1258 = vadd.f32 %v978, %v1257
          %v1259 = vpop.f32.mrb[0].mxu0
          %1260 = vmatprep.mubr.f32.mxu0 0.0
          %1261 = vmatmul.mubr.f32.gmra.mrb[0].mxu0 %v1053
          %v1262 = vpop.f32.mrb[0].mxu0
          %v1263 = vadd.f32 %v978, %v1262
          %v1264 = vpop.f32.mrb[0].mxu0
          %1265 = vmatprep.mubr.f32.mxu0 0.0
          %1266 = vmatmul.mubr.f32.gmra.mrb[0].mxu0 %v1056
          %v1267 = vpop.f32.mrb[0].mxu0
          %v1268 = vadd.f32 %v978, %v1267
          %v1269 = vpop.f32.mrb[0].mxu0
          %1270 = vmatprep.mubr.f32.mxu0 0.0
          %1271 = vmatmul.mubr.f32.gmra.mrb[0].mxu0 %v1059
          %v1272 = vpop.f32.mrb[0].mxu0
          %v1273 = vadd.f32 %v978, %v1272
          %v1274 = vpop.f32.mrb[0].mxu0
          %1275 = vmatprep.mubr.f32.mxu0 0.0
          %1276 = vmatmul.mubr.f32.gmra.mrb[0].mxu0 %v1062
          %v1277 = vpop.f32.mrb[0].mxu0
          %v1278 = vadd.f32 %v978, %v1277
          %v1279 = vpop.f32.mrb[0].mxu0
          %1280 = vmatprep.mubr.f32.mxu0 0.0
          %1281 = vmatmul.mubr.f32.gmra.mrb[0].mxu0 %v1065
          %v1282 = vpop.f32.mrb[0].mxu0
          %v1283 = vadd.f32 %v978, %v1282
          %v1284 = vpop.f32.mrb[0].mxu0
          %1285 = vmatprep.mubr.f32.mxu0 0.0
          %1286 = vmatmul.mubr.f32.gmra.mrb[0].mxu0 %v1068
          %v1287 = vpop.f32.mrb[0].mxu0
          %v1288 = vadd.f32 %v978, %v1287
          %v1289 = vpop.f32.mrb[0].mxu0
          %1290 = vmatprep.mubr.f32.mxu0 0.0
          %1291 = vmatmul.mubr.f32.gmra.mrb[0].mxu0 %v1071
          %v1292 = vpop.f32.mrb[0].mxu0
          %v1293 = vadd.f32 %v978, %v1292
          %v1294 = vpop.f32.mrb[0].mxu0
          %1295 = vmatprep.mubr.f32.mxu0 0.0
          %1296 = vmatmul.mubr.f32.gmra.mrb[0].mxu0 %v1074
          %v1297 = vpop.f32.mrb[0].mxu0
          %v1298 = vadd.f32 %v978, %v1297
          %v1299 = vpop.f32.mrb[0].mxu0
          %1300 = vdwg.mxu0
          %v1301 = vmax.f32 %v1143, 0.0
          %v1302 = vmax.f32 %v1148, 0.0
          %v1303 = vmax.f32 %v1153, 0.0
          %v1304 = vmax.f32 %v1158, 0.0
          %v1305 = vmax.f32 %v1163, 0.0
          %v1306 = vmax.f32 %v1168, 0.0
          %v1307 = vmax.f32 %v1173, 0.0
          %v1308 = vmax.f32 %v1178, 0.0
          %v1309 = vmax.f32 %v1183, 0.0
          %v1310 = vmax.f32 %v1188, 0.0
          %v1311 = vmax.f32 %v1193, 0.0
          %v1312 = vmax.f32 %v1198, 0.0
          %v1313 = vmax.f32 %v1203, 0.0
          %v1314 = vmax.f32 %v1208, 0.0
          %v1315 = vmax.f32 %v1213, 0.0
          %v1316 = vmax.f32 %v1218, 0.0
          %v1317 = vmax.f32 %v1223, 0.0
          %v1318 = vmax.f32 %v1228, 0.0
          %v1319 = vmax.f32 %v1233, 0.0
          %v1320 = vmax.f32 %v1238, 0.0
          %v1321 = vmax.f32 %v1243, 0.0
          %v1322 = vmax.f32 %v1248, 0.0
          %v1323 = vmax.f32 %v1253, 0.0
          %v1324 = vmax.f32 %v1258, 0.0
          %v1325 = vmax.f32 %v1263, 0.0
          %v1326 = vmax.f32 %v1268, 0.0
          %v1327 = vmax.f32 %v1273, 0.0
          %v1328 = vmax.f32 %v1278, 0.0
          %v1329 = vmax.f32 %v1283, 0.0
          %v1330 = vmax.f32 %v1288, 0.0
          %v1331 = vmax.f32 %v1293, 0.0
          %v1332 = vmax.f32 %v1298, 0.0
          %1333 = vst.msk [vmem:[%s397] sm:$0xff] %vm902, %v1301
          %1334 = vst.msk [vmem:[%s397 + $0x8] sm:$0xff] %vm902, %v1302
          %1335 = vst.msk [vmem:[%s397 + $0x10] sm:$0xff] %vm902, %v1303
          %1336 = vst.msk [vmem:[%s397 + $0x18] sm:$0xff] %vm902, %v1304
          %1337 = vst.msk [vmem:[%s397 + $0x20] sm:$0xff] %vm902, %v1305
          %1338 = vst.msk [vmem:[%s397 + $0x28] sm:$0xff] %vm902, %v1306
          %1339 = vst.msk [vmem:[%s397 + $0x30] sm:$0xff] %vm902, %v1307
          %1340 = vst.msk [vmem:[%s397 + $0x38] sm:$0xff] %vm902, %v1308
          %1341 = vst.msk [vmem:[%s397 + $0x40] sm:$0xff] %vm902, %v1309
          %1342 = vst.msk [vmem:[%s397 + $0x48] sm:$0xff] %vm902, %v1310
          %1343 = vst.msk [vmem:[%s397 + $0x50] sm:$0xff] %vm902, %v1311
          %1344 = vst.msk [vmem:[%s397 + $0x58] sm:$0xff] %vm902, %v1312
          %1345 = vst.msk [vmem:[%s397 + $0x60] sm:$0xff] %vm902, %v1313
          %1346 = vst.msk [vmem:[%s397 + $0x68] sm:$0xff] %vm902, %v1314
          %1347 = vst.msk [vmem:[%s397 + $0x70] sm:$0xff] %vm902, %v1315
          %1348 = vst.msk [vmem:[%s397 + $0x78] sm:$0xff] %vm902, %v1316
          %1349 = vst.msk [vmem:[%s397 + $0x80] sm:$0xff] %vm902, %v1317
          %1350 = vst.msk [vmem:[%s397 + $0x88] sm:$0xff] %vm902, %v1318
          %1351 = vst.msk [vmem:[%s397 + $0x90] sm:$0xff] %vm902, %v1319
          %1352 = vst.msk [vmem:[%s397 + $0x98] sm:$0xff] %vm902, %v1320
          %1353 = vst.msk [vmem:[%s397 + $0xa0] sm:$0xff] %vm902, %v1321
          %1354 = vst.msk [vmem:[%s397 + $0xa8] sm:$0xff] %vm902, %v1322
          %1355 = vst.msk [vmem:[%s397 + $0xb0] sm:$0xff] %vm902, %v1323
          %1356 = vst.msk [vmem:[%s397 + $0xb8] sm:$0xff] %vm902, %v1324
          %1357 = vst.msk [vmem:[%s397 + $0xc0] sm:$0xff] %vm902, %v1325
          %1358 = vst.msk [vmem:[%s397 + $0xc8] sm:$0xff] %vm902, %v1326
          %1359 = vst.msk [vmem:[%s397 + $0xd0] sm:$0xff] %vm902, %v1327
          %1360 = vst.msk [vmem:[%s397 + $0xd8] sm:$0xff] %vm902, %v1328
          %1361 = vst.msk [vmem:[%s397 + $0xe0] sm:$0xff] %vm902, %v1329
          %1362 = vst.msk [vmem:[%s397 + $0xe8] sm:$0xff] %vm902, %v1330
          %1363 = vst.msk [vmem:[%s397 + $0xf0] sm:$0xff] %vm902, %v1331
          %1364 = vst.msk [vmem:[%s397 + $0xf8] sm:$0xff] %vm902, %v1332
        $region82: #{ngcfmf_concat_mlp_forward.6} parent=69 // pred_fallthru
          _
        %s1365 = smul.u32 32, %s19
        %p1366 = scmp.lt.s32.totalorder %s1365, 63
        %s1367 = scalar_select %p1366, %s1365, 63
        %s1368 = smul.addr %s1367, 8
        %s1369 = scalar_lea.vmem %s4, %s1368
        // Predicated region
        $region83: #{ngcfmf_concat_mlp_forward.6} parent=69 // pred_check
          %p1370 = pneg %p141
        $region84: #{ngcfmf_concat_mlp_forward.6} parent=69 // pred_check_branch
          %1372 = sbr.rel (%p1370) target = $region86
        $region85: #{ngcfmf_concat_mlp_forward.6} parent=69 // pred_region
          %s1373 = smul.u32 32, %s19
        $region86: #{ngcfmf_concat_mlp_forward.6} parent=69 // pred_fallthru
          _
      $region70: #{ngcfmf_concat_mlp_forward.6} parent=5 // pred_fallthru
        _
      %p1374 = scmp.le.s32.totalorder 2, %s10
      // Predicated region
      $region87: #{ngcfmf_concat_mlp_forward.6} parent=5 // pred_check
        %p1375 = pneg %p1374
      $region88: #{ngcfmf_concat_mlp_forward.6} parent=5 // pred_check_branch
        %1377 = sbr.rel (%p1375) target = $region90
      $region89: #{ngcfmf_concat_mlp_forward.6} parent=5 // pred_region
        %s1378 = ssub.s32 %s10, 2
        // Predicated region
        $region91: #{ngcfmf_concat_mlp_forward.6} parent=89 // pred_check
          %p1379 = pneg %p147
        $region92: #{ngcfmf_concat_mlp_forward.6} parent=89 // pred_check_branch
          %1381 = sbr.rel (%p1379) target = $region94
        $region93: #{ngcfmf_concat_mlp_forward.6} parent=89 // pred_region
          %s1382 = smul.u32 32, %s21
          %p1383 = scmp.lt.s32.totalorder %s1382, 63
          %s1384 = scalar_select %p1383, %s1382, 63
          %s1385 = smul.addr %s1384, 8
          %s1386 = scalar_lea.vmem %s4, %s1385
        $region94: #{ngcfmf_concat_mlp_forward.6} parent=89 // pred_fallthru
          _
      $region90: #{ngcfmf_concat_mlp_forward.6} parent=5 // pred_fallthru
        _
    $region6: #{ngcfmf_concat_mlp_forward.6} parent=1 // loop_footer
      %s14 = sadd.s32 1, %s10
    $region7: #{ngcfmf_concat_mlp_forward.6} parent=1 // loop_footer_branch
      %9 = sbr.rel target = $region3
    $region8: #{ngcfmf_concat_mlp_forward.6} parent=1 // loop_exit
      _

</llo_original>
